<compile_context>
chip_gen: v7x
topology: tpu7x:2x2x1
jax: 0.10.0
libtpu: 0.0.40
codegen_flags: <defaults>
</compile_context>

<pallas_src>
import functools

import jax
import jax.numpy as jnp
from jax.experimental import pallas as pl
from jax.experimental.pallas import tpu as pltpu


def _round_up(x, m):
    return (x + m - 1) // m * m


def _multi_gcn_time_kernel(x_ref, a_ref, w_ref, b_ref, o_ref, acc_ref, *,
                           order, Kt, compute_dtype):
    """One grid step = `block_n` batch elements.

    x_ref  : (bn, L, Cp, V)          input block, node dim V in lanes
    a_ref  : (S, V, V)               pre-transposed supports (a_t[v,w] = a[w,v])
    w_ref  : (B, Kt*c_out_p, Cp)     per-hop-block conv weights, rows = (kt, o)
    b_ref  : (c_out_p, 1)            conv bias
    o_ref  : (bn, L_out, c_out_p, V) output block
    acc_ref: (bn*L, Kt*c_out_p, V)   f32 VMEM accumulator
    """
    bn, L, Cp, V = x_ref.shape
    S = a_ref.shape[0]
    B, KtCo, _ = w_ref.shape
    c_out_p = KtCo // Kt
    G = bn * L
    L_out = L - Kt + 1

    # f32 VMEM accumulator, zeroed every (batch-parallel) grid step.
    acc_ref[...] = jnp.zeros_like(acc_ref)

    def conv_accumulate(blk, hop3):
        # One batched matmul per hop block: contract over channels for the
        # whole (batch, time) slab at once; the Kt taps are folded into the
        # output-row dim so each block is a single MXU pass.
        w_blk = w_ref[blk].astype(compute_dtype)             # (Kt*c_out_p, Cp)
        w_b = jnp.broadcast_to(w_blk[None], (G, KtCo, Cp))   # tiny broadcast
        acc_ref[...] += jnp.einsum('gmc,gcv->gmv', w_b, hop3,
                                   preferred_element_type=jnp.float32)

    # ---- hop block 0: the input itself -------------------------------------
    hop3 = x_ref[...].reshape(G, Cp, V).astype(compute_dtype)   # (G, Cp, V)
    conv_accumulate(0, hop3)

    hop2 = hop3.reshape(G * Cp, V)          # tile-exact: Cp % sublane == 0
    blk = 1
    for s in range(S):
        a_t = a_ref[s].astype(compute_dtype)                 # (V, V)
        h2 = hop2
        for _ in range(order):
            # ONE lane-dense 2-D MXU matmul per graph-diffusion hop.
            h_f32 = jnp.dot(h2, a_t, preferred_element_type=jnp.float32)
            h2 = h_f32.astype(compute_dtype)
            conv_accumulate(blk, h2.reshape(G, Cp, V))       # free reshape
            blk += 1

    # ---- finalize: kt-shifted sum over the full-L accumulators + bias, then
    # a single lane-dense store of the whole output block ---------------------
    acc = acc_ref[...].reshape(bn, L, Kt, c_out_p, V)
    y = acc[:, 0:L_out, 0]
    for kt in range(1, Kt):
        y = y + acc[:, kt:kt + L_out, kt]
    y = y + b_ref[...]                       # (c_out_p, 1) broadcast, hoisted
    o_ref[...] = y.astype(o_ref.dtype)


def multi_gcn_time_forward(x, supports, weight, bias, *, order=2,
                           block_n=None, compute_dtype=jnp.bfloat16,
                           vmem_limit_bytes=None):
    """x: [N, C, V, L], supports: [S, V, V], weight: [c_out, C_total, Kt],
    bias: [c_out].  Returns [N, c_out, V, L - Kt + 1] (eval-mode forward)."""
    N, C, V, L = x.shape
    S = supports.shape[0]
    c_out, C_total, Kt = weight.shape
    B = order * S + 1
    assert C_total == B * C, "weight must have (order*support_len+1)*c_in input channels"
    L_out = L - Kt + 1
    assert L_out >= 1

    # Channel / output-channel padding makes every in-kernel reshape between
    # the 2-D diffusion view and the 3-D conv view tile-exact (sublane mults).
    Cp = _round_up(C, 16)
    c_out_p = _round_up(c_out, 8)

    if block_n is None:
        if N == 1:
            block_n = 1
        else:
            # keep n_steps >= 2: both v7x TensorCores busy + pipelined x DMA
            block_n = max(d for d in range(1, N) if N % d == 0)
    assert N % block_n == 0
    n_steps = N // block_n
    G = block_n * L

    # ---- wrapper-side relayouts (cheap XLA plumbing, outside the kernel) ----
    # x: (N, C, V, L) -> (N, L, Cp, V): node dim V becomes the lane dim.
    x_r = jnp.transpose(x, (0, 3, 1, 2))
    x_r = jnp.pad(x_r, ((0, 0), (0, 0), (0, Cp - C), (0, 0)))
    # supports pre-transposed: a_t[v, w] = a[w, v]   (matches nconv semantics)
    a_t = jnp.transpose(supports, (0, 2, 1))
    # weight -> one (Kt*c_out_p, Cp) block per diffusion hop (block 0 = x).
    w4 = jnp.transpose(weight.reshape(c_out, B, C, Kt), (1, 3, 0, 2))
    w4 = jnp.pad(w4, ((0, 0), (0, 0), (0, c_out_p - c_out), (0, Cp - C)))
    w_r = w4.reshape(B, Kt * c_out_p, Cp)
    b_r = jnp.pad(bias, (0, c_out_p - c_out)).reshape(c_out_p, 1)

    kernel = functools.partial(_multi_gcn_time_kernel, order=order, Kt=Kt,
                               compute_dtype=compute_dtype)

    flops = 2 * N * L * Cp * (S * order * V * V + B * Kt * c_out_p * V)
    bytes_accessed = (x_r.size * x_r.dtype.itemsize
                      + a_t.size * a_t.dtype.itemsize
                      + w_r.size * w_r.dtype.itemsize
                      + b_r.size * b_r.dtype.itemsize
                      + N * L_out * c_out_p * V * x.dtype.itemsize)

    if vmem_limit_bytes is None:
        # Re-derive the VMEM budget from the padded footprint (64 MiB cap for
        # v7x): 2x double-buffered x/out blocks + resident supports/weights
        # + f32 accumulator, with headroom for in-flight hop slabs.
        lane = 128
        v_pad = _round_up(V, lane)
        item = jnp.dtype(x.dtype).itemsize
        x_blk = block_n * L * Cp * v_pad * item
        o_blk = block_n * L_out * c_out_p * v_pad * item
        resident = (S * _round_up(V, 8) * v_pad
                    + B * Kt * c_out_p * _round_up(Cp, lane)
                    + c_out_p * lane) * jnp.dtype(supports.dtype).itemsize
        acc_b = G * Kt * c_out_p * v_pad * 4
        est = 2 * (x_blk + o_blk) + resident + acc_b
        vmem_limit_bytes = int(min(64 << 20, max(32 << 20, 3 * est + (4 << 20))))

    out = pl.pallas_call(
        kernel,
        out_shape=jax.ShapeDtypeStruct((N, L_out, c_out_p, V), x.dtype),
        grid=(n_steps,),
        in_specs=[
            pl.BlockSpec((block_n, L, Cp, V), lambda i: (i, 0, 0, 0)),
            # constant index maps -> resident in VMEM across grid steps
            pl.BlockSpec((S, V, V), lambda i: (0, 0, 0)),
            pl.BlockSpec((B, Kt * c_out_p, Cp), lambda i: (0, 0, 0)),
            pl.BlockSpec((c_out_p, 1), lambda i: (0, 0)),
        ],
        out_specs=pl.BlockSpec((block_n, L_out, c_out_p, V),
                               lambda i: (i, 0, 0, 0)),
        scratch_shapes=[pltpu.VMEM((G, Kt * c_out_p, V), jnp.float32)],
        compiler_params=pltpu.CompilerParams(
            dimension_semantics=("parallel",),
            vmem_limit_bytes=vmem_limit_bytes),
        cost_estimate=pl.CostEstimate(flops=flops, transcendentals=0,
                                      bytes_accessed=bytes_accessed),
    )(x_r, a_t, w_r, b_r)

    # (N, L_out, c_out_p, V) -> NCHW (N, c_out, V, L_out), strip padding.
    return jnp.transpose(out, (0, 2, 3, 1))[:, :c_out]


def reference_forward(x, supports, weight, bias, order):
    """Pure-JAX reference mirroring the PyTorch module (eval mode)."""
    out = [x]
    for s in range(supports.shape[0]):
        a_t = supports[s].T                      # nconv transposes A first ...
        x1 = x
        for _ in range(order):
            x1 = jnp.einsum('ncvl,vw->ncwl', x1, a_t)   # ... then contracts 'vw'
            out.append(x1)
    h = jnp.concatenate(out, axis=1)
    y = jax.lax.conv_general_dilated(
        h, weight[:, :, None, :],                # OIHW with H = 1
        window_strides=(1, 1), padding='VALID',
        dimension_numbers=('NCHW', 'OIHW', 'NCHW'))
    return y + bias[None, :, None, None]


if __name__ == "__main__":
    key = jax.random.PRNGKey(0)
    N, c_in, V, L = 2, 4, 16, 8
    support_len, order, Kt, c_out = 3, 2, 2, 8
    C_total = (order * support_len + 1) * c_in   # 28

    k1, k2, k3, k4 = jax.random.split(key, 4)
    x = jax.random.normal(k1, (N, c_in, V, L), jnp.float32)
    supports = jax.random.normal(k2, (support_len, V, V), jnp.float32) * 0.1
    weight = jax.random.normal(k3, (c_out, C_total, Kt), jnp.float32) * 0.05
    bias = jax.random.normal(k4, (c_out,), jnp.float32) * 0.1

    ref = reference_forward(x, supports, weight, bias, order)

    # float32 matmuls: tight check against the reference.
    out_f32 = multi_gcn_time_forward(x, supports, weight, bias, order=order,
                                     compute_dtype=jnp.float32)
    out_f32 = jax.block_until_ready(out_f32)
    assert out_f32.shape == (N, c_out, V, L - Kt + 1)
    assert jnp.allclose(out_f32, ref, rtol=1e-4, atol=1e-4), "f32 kernel mismatch"

    # bfloat16 MXU inputs with f32 accumulation: fast path on v6e/v7x.
    out_bf16 = multi_gcn_time_forward(x, supports, weight, bias, order=order,
                                      compute_dtype=jnp.bfloat16)
    out_bf16 = jax.block_until_ready(out_bf16)
    assert out_bf16.shape == (N, c_out, V, L - Kt + 1)
    assert jnp.allclose(out_bf16, ref, rtol=3e-2, atol=3e-2), "bf16 kernel mismatch"

    print("KERNEL_OK")
</pallas_src>

<mosaic_0001>
module attributes {stable_mosaic.version = 11 : i64} {
  func.func @_multi_gcn_time_kernel(%arg0: i32, %arg1: memref<1x8x16x16xf32, #tpu.memory_space<vmem>>, %arg2: memref<3x16x16xf32, #tpu.memory_space<vmem>>, %arg3: memref<7x16x16xf32, #tpu.memory_space<vmem>>, %arg4: memref<8x1xf32, #tpu.memory_space<vmem>>, %arg5: memref<1x7x8x16xf32, #tpu.memory_space<vmem>>, %arg6: memref<8x16x16xf32, #tpu.memory_space<vmem>>) attributes {dimension_semantics = [#tpu.dimension_semantics<parallel>], iteration_bounds = array<i64: 2>, scalar_prefetch = 0 : i64, scratch_operands = 1 : i64, tpu.core_type = #tpu.core_type<tc>, window_params = [{transform_indices = @transform_0, window_bounds = array<i64: 1, 8, 16, 16>}, {pipeline_mode = #tpu.pipeline_mode<synchronous>, transform_indices = @transform_1, window_bounds = array<i64: 3, 16, 16>}, {pipeline_mode = #tpu.pipeline_mode<synchronous>, transform_indices = @transform_2, window_bounds = array<i64: 7, 16, 16>}, {pipeline_mode = #tpu.pipeline_mode<synchronous>, transform_indices = @transform_3, window_bounds = array<i64: 8, 1>}, {transform_indices = @transform_4, window_bounds = array<i64: 1, 7, 8, 16>}]} {
    %cst = arith.constant 0.000000e+00 : f32
    %0 = vector.broadcast %cst : f32 to vector<8x16x16xf32>
    %c0 = arith.constant 0 : index
    %c0_0 = arith.constant 0 : index
    %c0_1 = arith.constant 0 : index
    %1 = vector.load %arg6[%c0, %c0_0, %c0_1] : memref<8x16x16xf32, #tpu.memory_space<vmem>>, vector<8x16x16xf32>
    tpu.vector_store %arg6[%c0, %c0_0, %c0_1], %0 {strides = array<i32>} : memref<8x16x16xf32, #tpu.memory_space<vmem>>, vector<8x16x16xf32>,
    %c0_2 = arith.constant 0 : index
    %c0_3 = arith.constant 0 : index
    %c0_4 = arith.constant 0 : index
    %c0_5 = arith.constant 0 : index
    %2 = vector.load %arg1[%c0_2, %c0_3, %c0_4, %c0_5] : memref<1x8x16x16xf32, #tpu.memory_space<vmem>>, vector<1x8x16x16xf32>
    %3 = vector.shape_cast %2 : vector<1x8x16x16xf32> to vector<8x16x16xf32>
    %c0_6 = arith.constant 0 : index
    %c0_7 = arith.constant 0 : index
    %c0_8 = arith.constant 0 : index
    %4 = vector.load %arg3[%c0_6, %c0_7, %c0_8] : memref<7x16x16xf32, #tpu.memory_space<vmem>>, vector<1x16x16xf32>
    %5 = vector.shape_cast %4 : vector<1x16x16xf32> to vector<16x16xf32>
    %6 = vector.shape_cast %5 : vector<16x16xf32> to vector<1x16x16xf32>
    %7 = vector.shape_cast %6 : vector<1x16x16xf32> to vector<1x16x16xf32>
    %8 = vector.broadcast %7 : vector<1x16x16xf32> to vector<8x16x16xf32>
    %c0_9 = arith.constant 0 : index
    %c0_10 = arith.constant 0 : index
    %c0_11 = arith.constant 0 : index
    %9 = vector.load %arg6[%c0_9, %c0_10, %c0_11] : memref<8x16x16xf32, #tpu.memory_space<vmem>>, vector<8x16x16xf32>
    "tpu.trace_start"() <{level = 10 : i32, message = "gmc,gcv->gmv"}> : () -> ()
    %cst_12 = arith.constant dense<0.000000e+00> : vector<8x16x16xf32>
    %10 = tpu.matmul %8, %3, %cst_12 {dimension_numbers = #tpu.dot_dimension_numbers<[2], [1], [1], [2], [0, 0, 0, 1, 1, 2], [0], [0]>} : vector<8x16x16xf32>, vector<8x16x16xf32>, vector<8x16x16xf32> -> vector<8x16x16xf32>
    "tpu.trace_stop"() : () -> ()
    %11 = arith.addf %9, %10 : vector<8x16x16xf32>
    %c0_13 = arith.constant 0 : index
    %c0_14 = arith.constant 0 : index
    %c0_15 = arith.constant 0 : index
    %12 = vector.load %arg6[%c0_13, %c0_14, %c0_15] : memref<8x16x16xf32, #tpu.memory_space<vmem>>, vector<8x16x16xf32>
    tpu.vector_store %arg6[%c0_13, %c0_14, %c0_15], %11 {strides = array<i32>} : memref<8x16x16xf32, #tpu.memory_space<vmem>>, vector<8x16x16xf32>,
    %13 = vector.shape_cast %3 : vector<8x16x16xf32> to vector<128x16xf32>
    %c0_16 = arith.constant 0 : index
    %c0_17 = arith.constant 0 : index
    %c0_18 = arith.constant 0 : index
    %14 = vector.load %arg2[%c0_16, %c0_17, %c0_18] : memref<3x16x16xf32, #tpu.memory_space<vmem>>, vector<1x16x16xf32>
    %15 = vector.shape_cast %14 : vector<1x16x16xf32> to vector<16x16xf32>
    %cst_19 = arith.constant dense<0.000000e+00> : vector<128x16xf32>
    %16 = tpu.matmul %13, %15, %cst_19 {dimension_numbers = #tpu.dot_dimension_numbers<[1], [0], [0], [1], [0, 0, 1, 1], [], []>} : vector<128x16xf32>, vector<16x16xf32>, vector<128x16xf32> -> vector<128x16xf32>
    %17 = vector.shape_cast %16 : vector<128x16xf32> to vector<8x16x16xf32>
    %c1 = arith.constant 1 : index
    %c0_20 = arith.constant 0 : index
    %c0_21 = arith.constant 0 : index
    %18 = vector.load %arg3[%c1, %c0_20, %c0_21] : memref<7x16x16xf32, #tpu.memory_space<vmem>>, vector<1x16x16xf32>
    %19 = vector.shape_cast %18 : vector<1x16x16xf32> to vector<16x16xf32>
    %20 = vector.shape_cast %19 : vector<16x16xf32> to vector<1x16x16xf32>
    %21 = vector.shape_cast %20 : vector<1x16x16xf32> to vector<1x16x16xf32>
    %22 = vector.broadcast %21 : vector<1x16x16xf32> to vector<8x16x16xf32>
    %c0_22 = arith.constant 0 : index
    %c0_23 = arith.constant 0 : index
    %c0_24 = arith.constant 0 : index
    %23 = vector.load %arg6[%c0_22, %c0_23, %c0_24] : memref<8x16x16xf32, #tpu.memory_space<vmem>>, vector<8x16x16xf32>
    "tpu.trace_start"() <{level = 10 : i32, message = "gmc,gcv->gmv"}> : () -> ()
    %cst_25 = arith.constant dense<0.000000e+00> : vector<8x16x16xf32>
    %24 = tpu.matmul %22, %17, %cst_25 {dimension_numbers = #tpu.dot_dimension_numbers<[2], [1], [1], [2], [0, 0, 0, 1, 1, 2], [0], [0]>} : vector<8x16x16xf32>, vector<8x16x16xf32>, vector<8x16x16xf32> -> vector<8x16x16xf32>
    "tpu.trace_stop"() : () -> ()
    %25 = arith.addf %23, %24 : vector<8x16x16xf32>
    %c0_26 = arith.constant 0 : index
    %c0_27 = arith.constant 0 : index
    %c0_28 = arith.constant 0 : index
    %26 = vector.load %arg6[%c0_26, %c0_27, %c0_28] : memref<8x16x16xf32, #tpu.memory_space<vmem>>, vector<8x16x16xf32>
    tpu.vector_store %arg6[%c0_26, %c0_27, %c0_28], %25 {strides = array<i32>} : memref<8x16x16xf32, #tpu.memory_space<vmem>>, vector<8x16x16xf32>,
    %cst_29 = arith.constant dense<0.000000e+00> : vector<128x16xf32>
    %27 = tpu.matmul %16, %15, %cst_29 {dimension_numbers = #tpu.dot_dimension_numbers<[1], [0], [0], [1], [0, 0, 1, 1], [], []>} : vector<128x16xf32>, vector<16x16xf32>, vector<128x16xf32> -> vector<128x16xf32>
    %28 = vector.shape_cast %27 : vector<128x16xf32> to vector<8x16x16xf32>
    %c2 = arith.constant 2 : index
    %c0_30 = arith.constant 0 : index
    %c0_31 = arith.constant 0 : index
    %29 = vector.load %arg3[%c2, %c0_30, %c0_31] : memref<7x16x16xf32, #tpu.memory_space<vmem>>, vector<1x16x16xf32>
    %30 = vector.shape_cast %29 : vector<1x16x16xf32> to vector<16x16xf32>
    %31 = vector.shape_cast %30 : vector<16x16xf32> to vector<1x16x16xf32>
    %32 = vector.shape_cast %31 : vector<1x16x16xf32> to vector<1x16x16xf32>
    %33 = vector.broadcast %32 : vector<1x16x16xf32> to vector<8x16x16xf32>
    %c0_32 = arith.constant 0 : index
    %c0_33 = arith.constant 0 : index
    %c0_34 = arith.constant 0 : index
    %34 = vector.load %arg6[%c0_32, %c0_33, %c0_34] : memref<8x16x16xf32, #tpu.memory_space<vmem>>, vector<8x16x16xf32>
    "tpu.trace_start"() <{level = 10 : i32, message = "gmc,gcv->gmv"}> : () -> ()
    %cst_35 = arith.constant dense<0.000000e+00> : vector<8x16x16xf32>
    %35 = tpu.matmul %33, %28, %cst_35 {dimension_numbers = #tpu.dot_dimension_numbers<[2], [1], [1], [2], [0, 0, 0, 1, 1, 2], [0], [0]>} : vector<8x16x16xf32>, vector<8x16x16xf32>, vector<8x16x16xf32> -> vector<8x16x16xf32>
    "tpu.trace_stop"() : () -> ()
    %36 = arith.addf %34, %35 : vector<8x16x16xf32>
    %c0_36 = arith.constant 0 : index
    %c0_37 = arith.constant 0 : index
    %c0_38 = arith.constant 0 : index
    %37 = vector.load %arg6[%c0_36, %c0_37, %c0_38] : memref<8x16x16xf32, #tpu.memory_space<vmem>>, vector<8x16x16xf32>
    tpu.vector_store %arg6[%c0_36, %c0_37, %c0_38], %36 {strides = array<i32>} : memref<8x16x16xf32, #tpu.memory_space<vmem>>, vector<8x16x16xf32>,
    %c1_39 = arith.constant 1 : index
    %c0_40 = arith.constant 0 : index
    %c0_41 = arith.constant 0 : index
    %38 = vector.load %arg2[%c1_39, %c0_40, %c0_41] : memref<3x16x16xf32, #tpu.memory_space<vmem>>, vector<1x16x16xf32>
    %39 = vector.shape_cast %38 : vector<1x16x16xf32> to vector<16x16xf32>
    %cst_42 = arith.constant dense<0.000000e+00> : vector<128x16xf32>
    %40 = tpu.matmul %13, %39, %cst_42 {dimension_numbers = #tpu.dot_dimension_numbers<[1], [0], [0], [1], [0, 0, 1, 1], [], []>} : vector<128x16xf32>, vector<16x16xf32>, vector<128x16xf32> -> vector<128x16xf32>
    %41 = vector.shape_cast %40 : vector<128x16xf32> to vector<8x16x16xf32>
    %c3 = arith.constant 3 : index
    %c0_43 = arith.constant 0 : index
    %c0_44 = arith.constant 0 : index
    %42 = vector.load %arg3[%c3, %c0_43, %c0_44] : memref<7x16x16xf32, #tpu.memory_space<vmem>>, vector<1x16x16xf32>
    %43 = vector.shape_cast %42 : vector<1x16x16xf32> to vector<16x16xf32>
    %44 = vector.shape_cast %43 : vector<16x16xf32> to vector<1x16x16xf32>
    %45 = vector.shape_cast %44 : vector<1x16x16xf32> to vector<1x16x16xf32>
    %46 = vector.broadcast %45 : vector<1x16x16xf32> to vector<8x16x16xf32>
    %c0_45 = arith.constant 0 : index
    %c0_46 = arith.constant 0 : index
    %c0_47 = arith.constant 0 : index
    %47 = vector.load %arg6[%c0_45, %c0_46, %c0_47] : memref<8x16x16xf32, #tpu.memory_space<vmem>>, vector<8x16x16xf32>
    "tpu.trace_start"() <{level = 10 : i32, message = "gmc,gcv->gmv"}> : () -> ()
    %cst_48 = arith.constant dense<0.000000e+00> : vector<8x16x16xf32>
    %48 = tpu.matmul %46, %41, %cst_48 {dimension_numbers = #tpu.dot_dimension_numbers<[2], [1], [1], [2], [0, 0, 0, 1, 1, 2], [0], [0]>} : vector<8x16x16xf32>, vector<8x16x16xf32>, vector<8x16x16xf32> -> vector<8x16x16xf32>
    "tpu.trace_stop"() : () -> ()
    %49 = arith.addf %47, %48 : vector<8x16x16xf32>
    %c0_49 = arith.constant 0 : index
    %c0_50 = arith.constant 0 : index
    %c0_51 = arith.constant 0 : index
    %50 = vector.load %arg6[%c0_49, %c0_50, %c0_51] : memref<8x16x16xf32, #tpu.memory_space<vmem>>, vector<8x16x16xf32>
    tpu.vector_store %arg6[%c0_49, %c0_50, %c0_51], %49 {strides = array<i32>} : memref<8x16x16xf32, #tpu.memory_space<vmem>>, vector<8x16x16xf32>,
    %cst_52 = arith.constant dense<0.000000e+00> : vector<128x16xf32>
    %51 = tpu.matmul %40, %39, %cst_52 {dimension_numbers = #tpu.dot_dimension_numbers<[1], [0], [0], [1], [0, 0, 1, 1], [], []>} : vector<128x16xf32>, vector<16x16xf32>, vector<128x16xf32> -> vector<128x16xf32>
    %52 = vector.shape_cast %51 : vector<128x16xf32> to vector<8x16x16xf32>
    %c4 = arith.constant 4 : index
    %c0_53 = arith.constant 0 : index
    %c0_54 = arith.constant 0 : index
    %53 = vector.load %arg3[%c4, %c0_53, %c0_54] : memref<7x16x16xf32, #tpu.memory_space<vmem>>, vector<1x16x16xf32>
    %54 = vector.shape_cast %53 : vector<1x16x16xf32> to vector<16x16xf32>
    %55 = vector.shape_cast %54 : vector<16x16xf32> to vector<1x16x16xf32>
    %56 = vector.shape_cast %55 : vector<1x16x16xf32> to vector<1x16x16xf32>
    %57 = vector.broadcast %56 : vector<1x16x16xf32> to vector<8x16x16xf32>
    %c0_55 = arith.constant 0 : index
    %c0_56 = arith.constant 0 : index
    %c0_57 = arith.constant 0 : index
    %58 = vector.load %arg6[%c0_55, %c0_56, %c0_57] : memref<8x16x16xf32, #tpu.memory_space<vmem>>, vector<8x16x16xf32>
    "tpu.trace_start"() <{level = 10 : i32, message = "gmc,gcv->gmv"}> : () -> ()
    %cst_58 = arith.constant dense<0.000000e+00> : vector<8x16x16xf32>
    %59 = tpu.matmul %57, %52, %cst_58 {dimension_numbers = #tpu.dot_dimension_numbers<[2], [1], [1], [2], [0, 0, 0, 1, 1, 2], [0], [0]>} : vector<8x16x16xf32>, vector<8x16x16xf32>, vector<8x16x16xf32> -> vector<8x16x16xf32>
    "tpu.trace_stop"() : () -> ()
    %60 = arith.addf %58, %59 : vector<8x16x16xf32>
    %c0_59 = arith.constant 0 : index
    %c0_60 = arith.constant 0 : index
    %c0_61 = arith.constant 0 : index
    %61 = vector.load %arg6[%c0_59, %c0_60, %c0_61] : memref<8x16x16xf32, #tpu.memory_space<vmem>>, vector<8x16x16xf32>
    tpu.vector_store %arg6[%c0_59, %c0_60, %c0_61], %60 {strides = array<i32>} : memref<8x16x16xf32, #tpu.memory_space<vmem>>, vector<8x16x16xf32>,
    %c2_62 = arith.constant 2 : index
    %c0_63 = arith.constant 0 : index
    %c0_64 = arith.constant 0 : index
    %62 = vector.load %arg2[%c2_62, %c0_63, %c0_64] : memref<3x16x16xf32, #tpu.memory_space<vmem>>, vector<1x16x16xf32>
    %63 = vector.shape_cast %62 : vector<1x16x16xf32> to vector<16x16xf32>
    %cst_65 = arith.constant dense<0.000000e+00> : vector<128x16xf32>
    %64 = tpu.matmul %13, %63, %cst_65 {dimension_numbers = #tpu.dot_dimension_numbers<[1], [0], [0], [1], [0, 0, 1, 1], [], []>} : vector<128x16xf32>, vector<16x16xf32>, vector<128x16xf32> -> vector<128x16xf32>
    %65 = vector.shape_cast %64 : vector<128x16xf32> to vector<8x16x16xf32>
    %c5 = arith.constant 5 : index
    %c0_66 = arith.constant 0 : index
    %c0_67 = arith.constant 0 : index
    %66 = vector.load %arg3[%c5, %c0_66, %c0_67] : memref<7x16x16xf32, #tpu.memory_space<vmem>>, vector<1x16x16xf32>
    %67 = vector.shape_cast %66 : vector<1x16x16xf32> to vector<16x16xf32>
    %68 = vector.shape_cast %67 : vector<16x16xf32> to vector<1x16x16xf32>
    %69 = vector.shape_cast %68 : vector<1x16x16xf32> to vector<1x16x16xf32>
    %70 = vector.broadcast %69 : vector<1x16x16xf32> to vector<8x16x16xf32>
    %c0_68 = arith.constant 0 : index
    %c0_69 = arith.constant 0 : index
    %c0_70 = arith.constant 0 : index
    %71 = vector.load %arg6[%c0_68, %c0_69, %c0_70] : memref<8x16x16xf32, #tpu.memory_space<vmem>>, vector<8x16x16xf32>
    "tpu.trace_start"() <{level = 10 : i32, message = "gmc,gcv->gmv"}> : () -> ()
    %cst_71 = arith.constant dense<0.000000e+00> : vector<8x16x16xf32>
    %72 = tpu.matmul %70, %65, %cst_71 {dimension_numbers = #tpu.dot_dimension_numbers<[2], [1], [1], [2], [0, 0, 0, 1, 1, 2], [0], [0]>} : vector<8x16x16xf32>, vector<8x16x16xf32>, vector<8x16x16xf32> -> vector<8x16x16xf32>
    "tpu.trace_stop"() : () -> ()
    %73 = arith.addf %71, %72 : vector<8x16x16xf32>
    %c0_72 = arith.constant 0 : index
    %c0_73 = arith.constant 0 : index
    %c0_74 = arith.constant 0 : index
    %74 = vector.load %arg6[%c0_72, %c0_73, %c0_74] : memref<8x16x16xf32, #tpu.memory_space<vmem>>, vector<8x16x16xf32>
    tpu.vector_store %arg6[%c0_72, %c0_73, %c0_74], %73 {strides = array<i32>} : memref<8x16x16xf32, #tpu.memory_space<vmem>>, vector<8x16x16xf32>,
    %cst_75 = arith.constant dense<0.000000e+00> : vector<128x16xf32>
    %75 = tpu.matmul %64, %63, %cst_75 {dimension_numbers = #tpu.dot_dimension_numbers<[1], [0], [0], [1], [0, 0, 1, 1], [], []>} : vector<128x16xf32>, vector<16x16xf32>, vector<128x16xf32> -> vector<128x16xf32>
    %76 = vector.shape_cast %75 : vector<128x16xf32> to vector<8x16x16xf32>
    %c6 = arith.constant 6 : index
    %c0_76 = arith.constant 0 : index
    %c0_77 = arith.constant 0 : index
    %77 = vector.load %arg3[%c6, %c0_76, %c0_77] : memref<7x16x16xf32, #tpu.memory_space<vmem>>, vector<1x16x16xf32>
    %78 = vector.shape_cast %77 : vector<1x16x16xf32> to vector<16x16xf32>
    %79 = vector.shape_cast %78 : vector<16x16xf32> to vector<1x16x16xf32>
    %80 = vector.shape_cast %79 : vector<1x16x16xf32> to vector<1x16x16xf32>
    %81 = vector.broadcast %80 : vector<1x16x16xf32> to vector<8x16x16xf32>
    %c0_78 = arith.constant 0 : index
    %c0_79 = arith.constant 0 : index
    %c0_80 = arith.constant 0 : index
    %82 = vector.load %arg6[%c0_78, %c0_79, %c0_80] : memref<8x16x16xf32, #tpu.memory_space<vmem>>, vector<8x16x16xf32>
    "tpu.trace_start"() <{level = 10 : i32, message = "gmc,gcv->gmv"}> : () -> ()
    %cst_81 = arith.constant dense<0.000000e+00> : vector<8x16x16xf32>
    %83 = tpu.matmul %81, %76, %cst_81 {dimension_numbers = #tpu.dot_dimension_numbers<[2], [1], [1], [2], [0, 0, 0, 1, 1, 2], [0], [0]>} : vector<8x16x16xf32>, vector<8x16x16xf32>, vector<8x16x16xf32> -> vector<8x16x16xf32>
    "tpu.trace_stop"() : () -> ()
    %84 = arith.addf %82, %83 : vector<8x16x16xf32>
    %c0_82 = arith.constant 0 : index
    %c0_83 = arith.constant 0 : index
    %c0_84 = arith.constant 0 : index
    %85 = vector.load %arg6[%c0_82, %c0_83, %c0_84] : memref<8x16x16xf32, #tpu.memory_space<vmem>>, vector<8x16x16xf32>
    tpu.vector_store %arg6[%c0_82, %c0_83, %c0_84], %84 {strides = array<i32>} : memref<8x16x16xf32, #tpu.memory_space<vmem>>, vector<8x16x16xf32>,
    %c0_85 = arith.constant 0 : index
    %c0_86 = arith.constant 0 : index
    %c0_87 = arith.constant 0 : index
    %86 = vector.load %arg6[%c0_85, %c0_86, %c0_87] : memref<8x16x16xf32, #tpu.memory_space<vmem>>, vector<8x16x16xf32>
    %87 = vector.shape_cast %86 : vector<8x16x16xf32> to vector<1x8x2x8x16xf32>
    %88 = vector.extract_strided_slice %87 {offsets = [0, 0, 0, 0, 0], sizes = [1, 7, 1, 8, 16], strides = [1, 1, 1, 1, 1]} : vector<1x8x2x8x16xf32> to vector<1x7x1x8x16xf32>
    %89 = vector.shape_cast %88 : vector<1x7x1x8x16xf32> to vector<1x7x8x16xf32>
    %90 = vector.extract_strided_slice %87 {offsets = [0, 1, 1, 0, 0], sizes = [1, 7, 1, 8, 16], strides = [1, 1, 1, 1, 1]} : vector<1x8x2x8x16xf32> to vector<1x7x1x8x16xf32>
    %91 = vector.shape_cast %90 : vector<1x7x1x8x16xf32> to vector<1x7x8x16xf32>
    %92 = arith.addf %89, %91 : vector<1x7x8x16xf32>
    %c0_88 = arith.constant 0 : index
    %c0_89 = arith.constant 0 : index
    %93 = vector.load %arg4[%c0_88, %c0_89] : memref<8x1xf32, #tpu.memory_space<vmem>>, vector<8x1xf32>
    %94 = vector.shape_cast %93 : vector<8x1xf32> to vector<1x1x8x1xf32>
    %95 = vector.broadcast %94 : vector<1x1x8x1xf32> to vector<1x7x8x16xf32>
    %96 = arith.addf %92, %95 : vector<1x7x8x16xf32>
    %c0_90 = arith.constant 0 : index
    %c0_91 = arith.constant 0 : index
    %c0_92 = arith.constant 0 : index
    %c0_93 = arith.constant 0 : index
    %97 = vector.load %arg5[%c0_90, %c0_91, %c0_92, %c0_93] : memref<1x7x8x16xf32, #tpu.memory_space<vmem>>, vector<1x7x8x16xf32>
    tpu.vector_store %arg5[%c0_90, %c0_91, %c0_92, %c0_93], %96 {strides = array<i32>} : memref<1x7x8x16xf32, #tpu.memory_space<vmem>>, vector<1x7x8x16xf32>,
    return
  }
  func.func @transform_0(%arg0: i32) -> (i32, i32, i32, i32) {
    %c0_i32 = arith.constant 0 : i32
    %c0_i32_0 = arith.constant 0 : i32
    %c0_i32_1 = arith.constant 0 : i32
    %c0_i32_2 = arith.constant 0 : i32
    return %arg0, %c0_i32, %c0_i32_0, %c0_i32_1 : i32, i32, i32, i32
  }
  func.func @transform_1(%arg0: i32) -> (i32, i32, i32) {
    %c0_i32 = arith.constant 0 : i32
    %c0_i32_0 = arith.constant 0 : i32
    %c0_i32_1 = arith.constant 0 : i32
    %c0_i32_2 = arith.constant 0 : i32
    return %c0_i32, %c0_i32_0, %c0_i32_1 : i32, i32, i32
  }
  func.func @transform_2(%arg0: i32) -> (i32, i32, i32) {
    %c0_i32 = arith.constant 0 : i32
    %c0_i32_0 = arith.constant 0 : i32
    %c0_i32_1 = arith.constant 0 : i32
    %c0_i32_2 = arith.constant 0 : i32
    return %c0_i32, %c0_i32_0, %c0_i32_1 : i32, i32, i32
  }
  func.func @transform_3(%arg0: i32) -> (i32, i32) {
    %c0_i32 = arith.constant 0 : i32
    %c0_i32_0 = arith.constant 0 : i32
    %c0_i32_1 = arith.constant 0 : i32
    return %c0_i32, %c0_i32_0 : i32, i32
  }
  func.func @transform_4(%arg0: i32) -> (i32, i32, i32, i32) {
    %c0_i32 = arith.constant 0 : i32
    %c0_i32_0 = arith.constant 0 : i32
    %c0_i32_1 = arith.constant 0 : i32
    %c0_i32_2 = arith.constant 0 : i32
    return %arg0, %c0_i32, %c0_i32_0, %c0_i32_1 : i32, i32, i32, i32
  }
}

</mosaic_0001>

<llo_original>
// kernel: tpu_custom_call.1
$region0: #{tpu_custom_call.1}
  #allocation0 [shape = 'u32[]', space=smem, size = 0x4, offset = 0x4, fixed_abs, tag = 'smem constant byte address 0x4 - core index']
  #allocation1 [shape = 'u32[144,128]{1,0:T(1,128)}', space=vmem, size = 0x12000, scoped, tag = 'internal scratch']
  #allocation2 [shape = 'f32[8,16,16]{2,1,0:T(8,128)}', space=vmem, size = 0x10000, scoped, tag = 'scratch operand']
  %s0 = inlined_call_operand.hbm [shape: f32[2,8,16,16], index: 0, kind: input, shape index: {}]
  %s1 = inlined_call_operand.hbm [shape: f32[3,16,16], index: 1, kind: input, shape index: {}]
  %s2 = inlined_call_operand.hbm [shape: f32[7,16,16], index: 2, kind: input, shape index: {}]
  %s3 = inlined_call_operand.vmem [shape: f32[8,1], index: 3, kind: input, shape index: {}]
  %s4 = inlined_call_operand.hbm [shape: f32[2,7,8,16], index: 4, kind: output, shape index: {}]
  %s5 = sld [smem:[#allocation0]]
  $region61: #{tpu_custom_call.1} parent=0
    _
  %s7 = ssub.s32 1, %s5
  %s8 = scalar_select 0, %s7, %s5
  $region1: #{tpu_custom_call.1} parent=0
    #allocation3 [shape = 'u8[131072]{0}', space=vmem, size = 0x20000, scoped, tag = 'input window, operand 0']
    #allocation4 [shape = 's32[2]{0}', space=sflag, size = 0x8, scoped, tag = 'scoped memory for tpu_custom_call.1']
    #allocation5 [shape = 's32[2]{0}', space=sflag, size = 0x8, scoped, tag = 'scoped memory for tpu_custom_call.1']
    #allocation6 [shape = 'u8[24576]{0}', space=vmem, size = 0x6000, scoped, tag = 'input window, operand 1, single buffered']
    #allocation7 [shape = 's32[1]{0}', space=sflag, size = 0x4, scoped, tag = 'scoped memory for tpu_custom_call.1']
    #allocation8 [shape = 'u8[57344]{0}', space=vmem, size = 0xe000, scoped, tag = 'input window, operand 2, single buffered']
    #allocation9 [shape = 'u8[57344]{0}', space=vmem, size = 0xe000, scoped, tag = 'output window, operand 0']
    %9 = vsyncpa [#allocation4], 0
    %s10 = scalar_lea.sflag [#allocation4], 1
    %11 = vsyncpa %s10, 0
    %12 = vsyncpa [#allocation7], 0
    %13 = vsyncpa [#allocation5], 0
    %s14 = scalar_lea.sflag [#allocation5], 1
    %15 = vsyncpa %s14, 0
    loop: start=0, step=1, limit=4
    $region2: #{tpu_custom_call.1} parent=1 // loop_pre_header
      _
    $region3: #{tpu_custom_call.1} parent=1 // loop_header
      %s17 = sphi 0, %s21
      %p18 = scmp.ge.s32.totalorder %s17, 4
      %s27 = sphi 0, %s29
      %s30 = sphi 0, %s27
      %s31 = sphi 0, %s30
      %s47 = sphi 0, %s31
      %s51 = sphi 0, %s51
      %s53 = sphi 0, %s51
      %s54 = sphi 0, %s53
      %s68 = sphi 0, %s54
      %s72 = sphi 0, %s72
      %s74 = sphi 0, %s72
      %s75 = sphi 0, %s74
      %s89 = sphi 0, %s75
      %s93 = sphi 0, %s93
      %s95 = sphi 0, %s93
      %s96 = sphi 0, %s95
      %s110 = sphi 0, %s96
      %s116 = sphi 0, %s118
      %s119 = sphi 0, %s116
      %s120 = sphi 0, %s119
      %s136 = sphi 0, %s120
    $region4: #{tpu_custom_call.1} parent=1 // loop_header_branch
      %20 = sbr.rel (%p18) target = $region8
    $region5: #{tpu_custom_call.1} parent=1 // loop_body
      %s22 = ssub.s32 %s17, 1
      %s23 = ssub.s32 %s17, 2
      %s24 = sadd.s32 %s17, 1
      %s25 = ssub.s32 %s17, %s24
      %p26 = scmp.eq.s32.totalorder %s25, 0
      %s28 = sadd.s32 %s27, 1
      %s29 = scalar_select %p26, %s27, %s28
      %p32 = pneg %p26
      %p33 = scmp.eq.s32.totalorder %s17, 1
      %p34 = por %p32, %p33
      %p35 = scmp.ne.s32.totalorder %s27, %s30
      %p36 = scmp.eq.s32.totalorder %s17, 0
      %p37 = por %p35, %p36
      %p38 = scmp.ne.s32.totalorder %s27, %s30
      %p39 = scmp.eq.s32.totalorder %s22, 1
      %p40 = por %p38, %p39
      %p41 = scmp.ne.s32.totalorder %s30, %s31
      %p42 = scmp.eq.s32.totalorder %s22, 0
      %p43 = por %p41, %p42
      %p44 = scmp.ne.s32.totalorder %s30, %s31
      %p45 = scmp.eq.s32.totalorder %s23, 1
      %p46 = por %p44, %p45
      %p48 = scmp.ne.s32.totalorder %s31, %s47
      %p49 = scmp.eq.s32.totalorder %s23, 0
      %p50 = por %p48, %p49
      %s52 = sadd.s32 %s51, 1
      %p55 = scmp.eq.s32.totalorder %s17, 1
      %p56 = scmp.ne.s32.totalorder %s51, %s53
      %p57 = scmp.eq.s32.totalorder %s17, 0
      %p58 = por %p56, %p57
      %p59 = scmp.ne.s32.totalorder %s51, %s53
      %p60 = scmp.eq.s32.totalorder %s22, 1
      %p61 = por %p59, %p60
      %p62 = scmp.ne.s32.totalorder %s53, %s54
      %p63 = scmp.eq.s32.totalorder %s22, 0
      %p64 = por %p62, %p63
      %p65 = scmp.ne.s32.totalorder %s53, %s54
      %p66 = scmp.eq.s32.totalorder %s23, 1
      %p67 = por %p65, %p66
      %p69 = scmp.ne.s32.totalorder %s54, %s68
      %p70 = scmp.eq.s32.totalorder %s23, 0
      %p71 = por %p69, %p70
      %s73 = sadd.s32 %s72, 1
      %p76 = scmp.eq.s32.totalorder %s17, 1
      %p77 = scmp.ne.s32.totalorder %s72, %s74
      %p78 = scmp.eq.s32.totalorder %s17, 0
      %p79 = por %p77, %p78
      %p80 = scmp.ne.s32.totalorder %s72, %s74
      %p81 = scmp.eq.s32.totalorder %s22, 1
      %p82 = por %p80, %p81
      %p83 = scmp.ne.s32.totalorder %s74, %s75
      %p84 = scmp.eq.s32.totalorder %s22, 0
      %p85 = por %p83, %p84
      %p86 = scmp.ne.s32.totalorder %s74, %s75
      %p87 = scmp.eq.s32.totalorder %s23, 1
      %p88 = por %p86, %p87
      %p90 = scmp.ne.s32.totalorder %s75, %s89
      %p91 = scmp.eq.s32.totalorder %s23, 0
      %p92 = por %p90, %p91
      %s94 = sadd.s32 %s93, 1
      %p97 = scmp.eq.s32.totalorder %s17, 1
      %p98 = scmp.ne.s32.totalorder %s93, %s95
      %p99 = scmp.eq.s32.totalorder %s17, 0
      %p100 = por %p98, %p99
      %p101 = scmp.ne.s32.totalorder %s93, %s95
      %p102 = scmp.eq.s32.totalorder %s22, 1
      %p103 = por %p101, %p102
      %p104 = scmp.ne.s32.totalorder %s95, %s96
      %p105 = scmp.eq.s32.totalorder %s22, 0
      %p106 = por %p104, %p105
      %p107 = scmp.ne.s32.totalorder %s95, %s96
      %p108 = scmp.eq.s32.totalorder %s23, 1
      %p109 = por %p107, %p108
      %p111 = scmp.ne.s32.totalorder %s96, %s110
      %p112 = scmp.eq.s32.totalorder %s23, 0
      %p113 = por %p111, %p112
      %s114 = ssub.s32 %s17, %s24
      %p115 = scmp.eq.s32.totalorder %s114, 0
      %s117 = sadd.s32 %s116, 1
      %s118 = scalar_select %p115, %s116, %s117
      %p121 = pneg %p115
      %p122 = scmp.eq.s32.totalorder %s17, 1
      %p123 = por %p121, %p122
      %p124 = scmp.ne.s32.totalorder %s116, %s119
      %p125 = scmp.eq.s32.totalorder %s17, 0
      %p126 = por %p124, %p125
      %p127 = scmp.ne.s32.totalorder %s116, %s119
      %p128 = scmp.eq.s32.totalorder %s22, 1
      %p129 = por %p127, %p128
      %p130 = scmp.ne.s32.totalorder %s119, %s120
      %p131 = scmp.eq.s32.totalorder %s22, 0
      %p132 = por %p130, %p131
      %p133 = scmp.ne.s32.totalorder %s119, %s120
      %p134 = scmp.eq.s32.totalorder %s23, 1
      %p135 = por %p133, %p134
      %p137 = scmp.ne.s32.totalorder %s120, %s136
      %p138 = scmp.eq.s32.totalorder %s23, 0
      %p139 = por %p137, %p138
      %p140 = scmp.le.s32.totalorder 1, %s17
      %p141 = scmp.lt.s32.totalorder %s17, 3
      %p142 = pnand %p140, %p141
      %p143 = pneg %p142
      // Predicated region
      $region9: #{tpu_custom_call.1} parent=5 // pred_check
        _
      $region10: #{tpu_custom_call.1} parent=5 // pred_check_branch
        %145 = sbr.rel (%p142) target = $region12
      $region11: #{tpu_custom_call.1} parent=5 // pred_region
        %s146 = ssub.s32 %s17, 1
        // Predicated region
        $region13: #{tpu_custom_call.1} parent=11 // pred_check
          %p147 = pneg %p64
        $region14: #{tpu_custom_call.1} parent=11 // pred_check_branch
          %149 = sbr.rel (%p147) target = $region16
        $region15: #{tpu_custom_call.1} parent=11 // pred_region
          %s151 = ssub.s32 768, 768
          %152 = vsyncadd [#allocation7], %s151
          %s153 = sshll.u32 [#allocation6], 4
          %s154 = int_to_ptr.vmem [resolvable:$true] %s153
          %159 = dma.hbm_to_vmem [thread:$0]  %s1, 768, %s154, [#allocation7], 128, 128, 8
        $region16: #{tpu_custom_call.1} parent=11 // pred_fallthru
          _
        // Predicated region
        $region17: #{tpu_custom_call.1} parent=11 // pred_check
          %p160 = pneg %p85
        $region18: #{tpu_custom_call.1} parent=11 // pred_check_branch
          %162 = sbr.rel (%p160) target = $region20
        $region19: #{tpu_custom_call.1} parent=11 // pred_region
          %s164 = ssub.s32 1792, 1792
          %165 = vsyncadd [#allocation7], %s164
          %s166 = sshll.u32 [#allocation8], 4
          %s167 = int_to_ptr.vmem [resolvable:$true] %s166
          %172 = dma.hbm_to_vmem [thread:$0]  %s2, 1792, %s167, [#allocation7], 128, 128, 8
        $region20: #{tpu_custom_call.1} parent=11 // pred_fallthru
          _
        // Predicated region
        $region21: #{tpu_custom_call.1} parent=11 // pred_check
          %p173 = pneg %p106
        $region22: #{tpu_custom_call.1} parent=11 // pred_check_branch
          %175 = sbr.rel (%p173) target = $region24
        $region23: #{tpu_custom_call.1} parent=11 // pred_region
          _
        $region24: #{tpu_custom_call.1} parent=11 // pred_fallthru
          _
      $region12: #{tpu_custom_call.1} parent=5 // pred_fallthru
        _
      %p176 = scmp.lt.s32.totalorder %s17, 2
      // Predicated region
      $region25: #{tpu_custom_call.1} parent=5 // pred_check
        %p177 = pneg %p176
      $region26: #{tpu_custom_call.1} parent=5 // pred_check_branch
        %179 = sbr.rel (%p177) target = $region28
      $region27: #{tpu_custom_call.1} parent=5 // pred_region
        // Predicated region
        $region29: #{tpu_custom_call.1} parent=27 // pred_check
          %p180 = pneg %p37
        $region30: #{tpu_custom_call.1} parent=27 // pred_check_branch
          %182 = sbr.rel (%p180) target = $region32
        $region31: #{tpu_custom_call.1} parent=27 // pred_region
          %s183 = sand.u32 %s27, 1
          %s184 = scalar_lea.sflag [#allocation4], %s183
          %s185 = sand.u32 %s27, 1
          %s186 = smul.addr %s185, 128
          %s187 = scalar_lea.vmem [#allocation3], %s186
          %s189 = ssub.s32 2048, 2048
          %190 = vsyncadd %s184, %s189
          %s191 = smul.addr %s17, 16
          %s192 = smul.addr %s191, 128
          %s193 = scalar_lea.hbm %s0, %s192
          %s194 = sshll.u32 %s187, 4
          %s195 = int_to_ptr.vmem [resolvable:$true] %s194
          %200 = dma.hbm_to_vmem [thread:$0]  %s193, 2048, %s195, %s184, 128, 128, 8
        $region32: #{tpu_custom_call.1} parent=27 // pred_fallthru
          _
      $region28: #{tpu_custom_call.1} parent=5 // pred_fallthru
        _
      %p201 = scmp.le.s32.totalorder 1, %s17
      %p202 = scmp.lt.s32.totalorder %s17, 3
      %p203 = pnand %p201, %p202
      %p204 = pneg %p203
      // Predicated region
      $region33: #{tpu_custom_call.1} parent=5 // pred_check
        _
      $region34: #{tpu_custom_call.1} parent=5 // pred_check_branch
        %206 = sbr.rel (%p203) target = $region36
      $region35: #{tpu_custom_call.1} parent=5 // pred_region
        %s207 = ssub.s32 %s17, 1
        %s208 = sand.u32 %s30, 1
        %s209 = scalar_lea.sflag [#allocation4], %s208
        %s210 = sand.u32 %s30, 1
        %s211 = smul.addr %s210, 128
        %s212 = scalar_lea.vmem [#allocation3], %s211
        // Predicated region
        $region37: #{tpu_custom_call.1} parent=35 // pred_check
          %p213 = pneg %p43
        $region38: #{tpu_custom_call.1} parent=35 // pred_check_branch
          %215 = sbr.rel (%p213) target = $region40
        $region39: #{tpu_custom_call.1} parent=35 // pred_region
          %216 = dma.done %s209, 2048
        $region40: #{tpu_custom_call.1} parent=35 // pred_fallthru
          _
        // Predicated region
        $region41: #{tpu_custom_call.1} parent=35 // pred_check
          %p217 = pneg %p64
        $region42: #{tpu_custom_call.1} parent=35 // pred_check_branch
          %219 = sbr.rel (%p217) target = $region44
        $region43: #{tpu_custom_call.1} parent=35 // pred_region
          %220 = dma.done [#allocation7], 768
        $region44: #{tpu_custom_call.1} parent=35 // pred_fallthru
          _
        // Predicated region
        $region45: #{tpu_custom_call.1} parent=35 // pred_check
          %p221 = pneg %p85
        $region46: #{tpu_custom_call.1} parent=35 // pred_check_branch
          %223 = sbr.rel (%p221) target = $region48
        $region47: #{tpu_custom_call.1} parent=35 // pred_region
          %224 = dma.done [#allocation7], 1792
        $region48: #{tpu_custom_call.1} parent=35 // pred_fallthru
          _
        %s225 = sand.u32 %s30, 1
        %s226 = scalar_lea.sflag [#allocation4], %s225
        %s227 = sand.u32 %s30, 1
        %s228 = smul.addr %s227, 128
        %s229 = scalar_lea.vmem [#allocation3], %s228
        %p230 = pneg %p43
        %p231 = pneg %p40
        %p232 = pneg %p64
        %p233 = pneg %p61
        %p234 = pneg %p85
        %p235 = pneg %p82
        %p236 = pneg %p106
        %p237 = pneg %p103
        %p238 = pneg %p132
        %p239 = pneg %p129
        %s240 = sand.u32 %s119, 1
        %s241 = scalar_lea.sflag [#allocation5], %s240
        %s242 = sand.u32 %s119, 1
        %s243 = smul.addr %s242, 56
        %s244 = scalar_lea.vmem [#allocation9], %s243
        %vm245 = vcmask 130048
        %246 = vst.msk [vmem:[#allocation2] sm:$0xff] %vm245, 0.0
        %247 = vst.msk [vmem:[#allocation2 + $0x8] sm:$0xff] %vm245, 0.0
        %248 = vst.msk [vmem:[#allocation2 + $0x10] sm:$0xff] %vm245, 0.0
        %249 = vst.msk [vmem:[#allocation2 + $0x18] sm:$0xff] %vm245, 0.0
        %250 = vst.msk [vmem:[#allocation2 + $0x20] sm:$0xff] %vm245, 0.0
        %251 = vst.msk [vmem:[#allocation2 + $0x28] sm:$0xff] %vm245, 0.0
        %252 = vst.msk [vmem:[#allocation2 + $0x30] sm:$0xff] %vm245, 0.0
        %253 = vst.msk [vmem:[#allocation2 + $0x38] sm:$0xff] %vm245, 0.0
        %254 = vst.msk [vmem:[#allocation2 + $0x40] sm:$0xff] %vm245, 0.0
        %255 = vst.msk [vmem:[#allocation2 + $0x48] sm:$0xff] %vm245, 0.0
        %256 = vst.msk [vmem:[#allocation2 + $0x50] sm:$0xff] %vm245, 0.0
        %257 = vst.msk [vmem:[#allocation2 + $0x58] sm:$0xff] %vm245, 0.0
        %258 = vst.msk [vmem:[#allocation2 + $0x60] sm:$0xff] %vm245, 0.0
        %259 = vst.msk [vmem:[#allocation2 + $0x68] sm:$0xff] %vm245, 0.0
        %260 = vst.msk [vmem:[#allocation2 + $0x70] sm:$0xff] %vm245, 0.0
        %261 = vst.msk [vmem:[#allocation2 + $0x78] sm:$0xff] %vm245, 0.0
        %v262 = vld [vmem:[%s212] sm:$0xff]
        %v263 = vld [vmem:[%s212 + $0x8] sm:$0xff]
        %v264 = vld [vmem:[%s212 + $0x10] sm:$0xff]
        %v265 = vld [vmem:[%s212 + $0x18] sm:$0xff]
        %v266 = vld [vmem:[%s212 + $0x20] sm:$0xff]
        %v267 = vld [vmem:[%s212 + $0x28] sm:$0xff]
        %v268 = vld [vmem:[%s212 + $0x30] sm:$0xff]
        %v269 = vld [vmem:[%s212 + $0x38] sm:$0xff]
        %v270 = vld [vmem:[%s212 + $0x40] sm:$0xff]
        %v271 = vld [vmem:[%s212 + $0x48] sm:$0xff]
        %v272 = vld [vmem:[%s212 + $0x50] sm:$0xff]
        %v273 = vld [vmem:[%s212 + $0x58] sm:$0xff]
        %v274 = vld [vmem:[%s212 + $0x60] sm:$0xff]
        %v275 = vld [vmem:[%s212 + $0x68] sm:$0xff]
        %v276 = vld [vmem:[%s212 + $0x70] sm:$0xff]
        %v277 = vld [vmem:[%s212 + $0x78] sm:$0xff]
        %v278 = vld [vmem:[#allocation8] sm:$0xff]
        %v279 = vld [vmem:[#allocation8 + $0x8] sm:$0xff]
        %v280 = vld [vmem:[#allocation2] sm:$0xff]
        %v281 = vld [vmem:[#allocation2 + $0x8] sm:$0xff]
        %v282 = vld [vmem:[#allocation2 + $0x10] sm:$0xff]
        %v283 = vld [vmem:[#allocation2 + $0x18] sm:$0xff]
        %v284 = vld [vmem:[#allocation2 + $0x20] sm:$0xff]
        %v285 = vld [vmem:[#allocation2 + $0x28] sm:$0xff]
        %v286 = vld [vmem:[#allocation2 + $0x30] sm:$0xff]
        %v287 = vld [vmem:[#allocation2 + $0x38] sm:$0xff]
        %v288 = vld [vmem:[#allocation2 + $0x40] sm:$0xff]
        %v289 = vld [vmem:[#allocation2 + $0x48] sm:$0xff]
        %v290 = vld [vmem:[#allocation2 + $0x50] sm:$0xff]
        %v291 = vld [vmem:[#allocation2 + $0x58] sm:$0xff]
        %v292 = vld [vmem:[#allocation2 + $0x60] sm:$0xff]
        %v293 = vld [vmem:[#allocation2 + $0x68] sm:$0xff]
        %v294 = vld [vmem:[#allocation2 + $0x70] sm:$0xff]
        %v295 = vld [vmem:[#allocation2 + $0x78] sm:$0xff]
        %v297 = vsel %vm245, %v278, 0
        %v300 = vsel %vm245, %v279, 0
        %302 = vmatprep.subr.mxu0 0.0
        %303 = vmatpush1.msra.mxu0 %v262
        %304 = vmatprep.subr.mxu0 0.0
        %305 = vmatpush1.msra.mxu0 %v263
        %306 = vmatprep.subr.mxu0 0.0
        %307 = vmatpush1.msra.mxu0 0.0
        %308 = vmatprep.subr.mxu0 0.0
        %309 = vmatpush1.msra.mxu0 0.0
        %310 = vmatprep.subr.mxu0 0.0
        %311 = vmatpush1.msra.mxu0 0.0
        %312 = vmatprep.subr.mxu0 0.0
        %313 = vmatpush1.msra.mxu0 0.0
        %314 = vmatprep.subr.mxu0 0.0
        %315 = vmatpush1.msra.mxu0 0.0
        %316 = vmatprep.subr.mxu0 0.0
        %317 = vmatpush1.msra.mxu0 0.0
        %318 = vmatprep.subr.mxu0 0.0
        %319 = vmatpush1.msra.mxu0 0.0
        %320 = vmatprep.subr.mxu0 0.0
        %321 = vmatpush1.msra.mxu0 0.0
        %322 = vmatprep.subr.mxu0 0.0
        %323 = vmatpush1.msra.mxu0 0.0
        %324 = vmatprep.subr.mxu0 0.0
        %325 = vmatpush1.msra.mxu0 0.0
        %326 = vmatprep.subr.mxu0 0.0
        %327 = vmatpush1.msra.mxu0 0.0
        %328 = vmatprep.subr.mxu0 0.0
        %329 = vmatpush1.msra.mxu0 0.0
        %330 = vmatprep.subr.mxu0 0.0
        %331 = vmatpush1.msra.mxu0 0.0
        %332 = vmatprep.subr.mxu0 0.0
        %333 = vmatpush1.msra.mxu0 0.0
        %334 = vmatprep.subr.mxu0 0.0
        %335 = vmatpush1.msra.mxu0 0.0
        %336 = vmatprep.subr.mxu0 0.0
        %337 = vmatpush1.msra.mxu0 0.0
        %338 = vmatprep.subr.mxu0 0.0
        %339 = vmatpush1.msra.mxu0 0.0
        %340 = vmatprep.subr.mxu0 0.0
        %341 = vmatpush1.msra.mxu0 0.0
        %342 = vmatprep.subr.mxu0 0.0
        %343 = vmatpush1.msra.mxu0 0.0
        %344 = vmatprep.subr.mxu0 0.0
        %345 = vmatpush1.msra.mxu0 0.0
        %346 = vmatprep.subr.mxu0 0.0
        %347 = vmatpush1.msra.mxu0 0.0
        %348 = vmatprep.subr.mxu0 0.0
        %349 = vmatpush1.msra.mxu0 0.0
        %350 = vmatprep.subr.mxu0 0.0
        %351 = vmatpush1.msra.mxu0 0.0
        %352 = vmatprep.subr.mxu0 0.0
        %353 = vmatpush1.msra.mxu0 0.0
        %354 = vmatprep.subr.mxu0 0.0
        %355 = vmatpush1.msra.mxu0 0.0
        %356 = vmatprep.subr.mxu0 0.0
        %357 = vmatpush1.msra.mxu0 0.0
        %358 = vmatprep.subr.mxu0 0.0
        %359 = vmatpush1.msra.mxu0 0.0
        %360 = vmatprep.subr.mxu0 0.0
        %361 = vmatpush1.msra.mxu0 0.0
        %362 = vmatprep.subr.mxu0 0.0
        %363 = vmatpush1.msra.mxu0 0.0
        %364 = vmatprep.subr.mxu0 0.0
        %365 = vmatpush1.msra.mxu0 0.0
        %366 = vmatprep.mubr.f32.mxu0 0.0
        %367 = vmatmul.mubr.f32.gmra.mrb[0].mxu0 %v297
        %v368 = vpop.f32.mrb[0].mxu0
        %v369 = vadd.f32 0.0, %v368
        %v370 = vpop.f32.mrb[0].mxu0
        %371 = vmatprep.mubr.f32.mxu0 0.0
        %372 = vmatmul.mubr.f32.gmra.mrb[0].mxu0 %v300
        %v373 = vpop.f32.mrb[0].mxu0
        %v374 = vadd.f32 0.0, %v373
        %v375 = vpop.f32.mrb[0].mxu0
        %376 = vdwg.mxu0
        %377 = vmatprep.subr.mxu0 0.0
        %378 = vmatpush1.msra.mxu0 %v264
        %379 = vmatprep.subr.mxu0 0.0
        %380 = vmatpush1.msra.mxu0 %v265
        %381 = vmatprep.subr.mxu0 0.0
        %382 = vmatpush1.msra.mxu0 0.0
        %383 = vmatprep.subr.mxu0 0.0
        %384 = vmatpush1.msra.mxu0 0.0
        %385 = vmatprep.subr.mxu0 0.0
        %386 = vmatpush1.msra.mxu0 0.0
        %387 = vmatprep.subr.mxu0 0.0
        %388 = vmatpush1.msra.mxu0 0.0
        %389 = vmatprep.subr.mxu0 0.0
        %390 = vmatpush1.msra.mxu0 0.0
        %391 = vmatprep.subr.mxu0 0.0
        %392 = vmatpush1.msra.mxu0 0.0
        %393 = vmatprep.subr.mxu0 0.0
        %394 = vmatpush1.msra.mxu0 0.0
        %395 = vmatprep.subr.mxu0 0.0
        %396 = vmatpush1.msra.mxu0 0.0
        %397 = vmatprep.subr.mxu0 0.0
        %398 = vmatpush1.msra.mxu0 0.0
        %399 = vmatprep.subr.mxu0 0.0
        %400 = vmatpush1.msra.mxu0 0.0
        %401 = vmatprep.subr.mxu0 0.0
        %402 = vmatpush1.msra.mxu0 0.0
        %403 = vmatprep.subr.mxu0 0.0
        %404 = vmatpush1.msra.mxu0 0.0
        %405 = vmatprep.subr.mxu0 0.0
        %406 = vmatpush1.msra.mxu0 0.0
        %407 = vmatprep.subr.mxu0 0.0
        %408 = vmatpush1.msra.mxu0 0.0
        %409 = vmatprep.subr.mxu0 0.0
        %410 = vmatpush1.msra.mxu0 0.0
        %411 = vmatprep.subr.mxu0 0.0
        %412 = vmatpush1.msra.mxu0 0.0
        %413 = vmatprep.subr.mxu0 0.0
        %414 = vmatpush1.msra.mxu0 0.0
        %415 = vmatprep.subr.mxu0 0.0
        %416 = vmatpush1.msra.mxu0 0.0
        %417 = vmatprep.subr.mxu0 0.0
        %418 = vmatpush1.msra.mxu0 0.0
        %419 = vmatprep.subr.mxu0 0.0
        %420 = vmatpush1.msra.mxu0 0.0
        %421 = vmatprep.subr.mxu0 0.0
        %422 = vmatpush1.msra.mxu0 0.0
        %423 = vmatprep.subr.mxu0 0.0
        %424 = vmatpush1.msra.mxu0 0.0
        %425 = vmatprep.subr.mxu0 0.0
        %426 = vmatpush1.msra.mxu0 0.0
        %427 = vmatprep.subr.mxu0 0.0
        %428 = vmatpush1.msra.mxu0 0.0
        %429 = vmatprep.subr.mxu0 0.0
        %430 = vmatpush1.msra.mxu0 0.0
        %431 = vmatprep.subr.mxu0 0.0
        %432 = vmatpush1.msra.mxu0 0.0
        %433 = vmatprep.subr.mxu0 0.0
        %434 = vmatpush1.msra.mxu0 0.0
        %435 = vmatprep.subr.mxu0 0.0
        %436 = vmatpush1.msra.mxu0 0.0
        %437 = vmatprep.subr.mxu0 0.0
        %438 = vmatpush1.msra.mxu0 0.0
        %439 = vmatprep.subr.mxu0 0.0
        %440 = vmatpush1.msra.mxu0 0.0
        %441 = vmatprep.mubr.f32.mxu0 0.0
        %442 = vmatmul.mubr.f32.gmra.mrb[0].mxu0 %v297
        %v443 = vpop.f32.mrb[0].mxu0
        %v444 = vadd.f32 0.0, %v443
        %v445 = vpop.f32.mrb[0].mxu0
        %446 = vmatprep.mubr.f32.mxu0 0.0
        %447 = vmatmul.mubr.f32.gmra.mrb[0].mxu0 %v300
        %v448 = vpop.f32.mrb[0].mxu0
        %v449 = vadd.f32 0.0, %v448
        %v450 = vpop.f32.mrb[0].mxu0
        %451 = vdwg.mxu0
        %452 = vmatprep.subr.mxu0 0.0
        %453 = vmatpush1.msra.mxu0 %v266
        %454 = vmatprep.subr.mxu0 0.0
        %455 = vmatpush1.msra.mxu0 %v267
        %456 = vmatprep.subr.mxu0 0.0
        %457 = vmatpush1.msra.mxu0 0.0
        %458 = vmatprep.subr.mxu0 0.0
        %459 = vmatpush1.msra.mxu0 0.0
        %460 = vmatprep.subr.mxu0 0.0
        %461 = vmatpush1.msra.mxu0 0.0
        %462 = vmatprep.subr.mxu0 0.0
        %463 = vmatpush1.msra.mxu0 0.0
        %464 = vmatprep.subr.mxu0 0.0
        %465 = vmatpush1.msra.mxu0 0.0
        %466 = vmatprep.subr.mxu0 0.0
        %467 = vmatpush1.msra.mxu0 0.0
        %468 = vmatprep.subr.mxu0 0.0
        %469 = vmatpush1.msra.mxu0 0.0
        %470 = vmatprep.subr.mxu0 0.0
        %471 = vmatpush1.msra.mxu0 0.0
        %472 = vmatprep.subr.mxu0 0.0
        %473 = vmatpush1.msra.mxu0 0.0
        %474 = vmatprep.subr.mxu0 0.0
        %475 = vmatpush1.msra.mxu0 0.0
        %476 = vmatprep.subr.mxu0 0.0
        %477 = vmatpush1.msra.mxu0 0.0
        %478 = vmatprep.subr.mxu0 0.0
        %479 = vmatpush1.msra.mxu0 0.0
        %480 = vmatprep.subr.mxu0 0.0
        %481 = vmatpush1.msra.mxu0 0.0
        %482 = vmatprep.subr.mxu0 0.0
        %483 = vmatpush1.msra.mxu0 0.0
        %484 = vmatprep.subr.mxu0 0.0
        %485 = vmatpush1.msra.mxu0 0.0
        %486 = vmatprep.subr.mxu0 0.0
        %487 = vmatpush1.msra.mxu0 0.0
        %488 = vmatprep.subr.mxu0 0.0
        %489 = vmatpush1.msra.mxu0 0.0
        %490 = vmatprep.subr.mxu0 0.0
        %491 = vmatpush1.msra.mxu0 0.0
        %492 = vmatprep.subr.mxu0 0.0
        %493 = vmatpush1.msra.mxu0 0.0
        %494 = vmatprep.subr.mxu0 0.0
        %495 = vmatpush1.msra.mxu0 0.0
        %496 = vmatprep.subr.mxu0 0.0
        %497 = vmatpush1.msra.mxu0 0.0
        %498 = vmatprep.subr.mxu0 0.0
        %499 = vmatpush1.msra.mxu0 0.0
        %500 = vmatprep.subr.mxu0 0.0
        %501 = vmatpush1.msra.mxu0 0.0
        %502 = vmatprep.subr.mxu0 0.0
        %503 = vmatpush1.msra.mxu0 0.0
        %504 = vmatprep.subr.mxu0 0.0
        %505 = vmatpush1.msra.mxu0 0.0
        %506 = vmatprep.subr.mxu0 0.0
        %507 = vmatpush1.msra.mxu0 0.0
        %508 = vmatprep.subr.mxu0 0.0
        %509 = vmatpush1.msra.mxu0 0.0
        %510 = vmatprep.subr.mxu0 0.0
        %511 = vmatpush1.msra.mxu0 0.0
        %512 = vmatprep.subr.mxu0 0.0
        %513 = vmatpush1.msra.mxu0 0.0
        %514 = vmatprep.subr.mxu0 0.0
        %515 = vmatpush1.msra.mxu0 0.0
        %516 = vmatprep.mubr.f32.mxu0 0.0
        %517 = vmatmul.mubr.f32.gmra.mrb[0].mxu0 %v297
        %v518 = vpop.f32.mrb[0].mxu0
        %v519 = vadd.f32 0.0, %v518
        %v520 = vpop.f32.mrb[0].mxu0
        %521 = vmatprep.mubr.f32.mxu0 0.0
        %522 = vmatmul.mubr.f32.gmra.mrb[0].mxu0 %v300
        %v523 = vpop.f32.mrb[0].mxu0
        %v524 = vadd.f32 0.0, %v523
        %v525 = vpop.f32.mrb[0].mxu0
        %526 = vdwg.mxu0
        %527 = vmatprep.subr.mxu0 0.0
        %528 = vmatpush1.msra.mxu0 %v268
        %529 = vmatprep.subr.mxu0 0.0
        %530 = vmatpush1.msra.mxu0 %v269
        %531 = vmatprep.subr.mxu0 0.0
        %532 = vmatpush1.msra.mxu0 0.0
        %533 = vmatprep.subr.mxu0 0.0
        %534 = vmatpush1.msra.mxu0 0.0
        %535 = vmatprep.subr.mxu0 0.0
        %536 = vmatpush1.msra.mxu0 0.0
        %537 = vmatprep.subr.mxu0 0.0
        %538 = vmatpush1.msra.mxu0 0.0
        %539 = vmatprep.subr.mxu0 0.0
        %540 = vmatpush1.msra.mxu0 0.0
        %541 = vmatprep.subr.mxu0 0.0
        %542 = vmatpush1.msra.mxu0 0.0
        %543 = vmatprep.subr.mxu0 0.0
        %544 = vmatpush1.msra.mxu0 0.0
        %545 = vmatprep.subr.mxu0 0.0
        %546 = vmatpush1.msra.mxu0 0.0
        %547 = vmatprep.subr.mxu0 0.0
        %548 = vmatpush1.msra.mxu0 0.0
        %549 = vmatprep.subr.mxu0 0.0
        %550 = vmatpush1.msra.mxu0 0.0
        %551 = vmatprep.subr.mxu0 0.0
        %552 = vmatpush1.msra.mxu0 0.0
        %553 = vmatprep.subr.mxu0 0.0
        %554 = vmatpush1.msra.mxu0 0.0
        %555 = vmatprep.subr.mxu0 0.0
        %556 = vmatpush1.msra.mxu0 0.0
        %557 = vmatprep.subr.mxu0 0.0
        %558 = vmatpush1.msra.mxu0 0.0
        %559 = vmatprep.subr.mxu0 0.0
        %560 = vmatpush1.msra.mxu0 0.0
        %561 = vmatprep.subr.mxu0 0.0
        %562 = vmatpush1.msra.mxu0 0.0
        %563 = vmatprep.subr.mxu0 0.0
        %564 = vmatpush1.msra.mxu0 0.0
        %565 = vmatprep.subr.mxu0 0.0
        %566 = vmatpush1.msra.mxu0 0.0
        %567 = vmatprep.subr.mxu0 0.0
        %568 = vmatpush1.msra.mxu0 0.0
        %569 = vmatprep.subr.mxu0 0.0
        %570 = vmatpush1.msra.mxu0 0.0
        %571 = vmatprep.subr.mxu0 0.0
        %572 = vmatpush1.msra.mxu0 0.0
        %573 = vmatprep.subr.mxu0 0.0
        %574 = vmatpush1.msra.mxu0 0.0
        %575 = vmatprep.subr.mxu0 0.0
        %576 = vmatpush1.msra.mxu0 0.0
        %577 = vmatprep.subr.mxu0 0.0
        %578 = vmatpush1.msra.mxu0 0.0
        %579 = vmatprep.subr.mxu0 0.0
        %580 = vmatpush1.msra.mxu0 0.0
        %581 = vmatprep.subr.mxu0 0.0
        %582 = vmatpush1.msra.mxu0 0.0
        %583 = vmatprep.subr.mxu0 0.0
        %584 = vmatpush1.msra.mxu0 0.0
        %585 = vmatprep.subr.mxu0 0.0
        %586 = vmatpush1.msra.mxu0 0.0
        %587 = vmatprep.subr.mxu0 0.0
        %588 = vmatpush1.msra.mxu0 0.0
        %589 = vmatprep.subr.mxu0 0.0
        %590 = vmatpush1.msra.mxu0 0.0
        %591 = vmatprep.mubr.f32.mxu0 0.0
        %592 = vmatmul.mubr.f32.gmra.mrb[0].mxu0 %v297
        %v593 = vpop.f32.mrb[0].mxu0
        %v594 = vadd.f32 0.0, %v593
        %v595 = vpop.f32.mrb[0].mxu0
        %596 = vmatprep.mubr.f32.mxu0 0.0
        %597 = vmatmul.mubr.f32.gmra.mrb[0].mxu0 %v300
        %v598 = vpop.f32.mrb[0].mxu0
        %v599 = vadd.f32 0.0, %v598
        %v600 = vpop.f32.mrb[0].mxu0
        %601 = vdwg.mxu0
        %602 = vmatprep.subr.mxu0 0.0
        %603 = vmatpush1.msra.mxu0 %v270
        %604 = vmatprep.subr.mxu0 0.0
        %605 = vmatpush1.msra.mxu0 %v271
        %606 = vmatprep.subr.mxu0 0.0
        %607 = vmatpush1.msra.mxu0 0.0
        %608 = vmatprep.subr.mxu0 0.0
        %609 = vmatpush1.msra.mxu0 0.0
        %610 = vmatprep.subr.mxu0 0.0
        %611 = vmatpush1.msra.mxu0 0.0
        %612 = vmatprep.subr.mxu0 0.0
        %613 = vmatpush1.msra.mxu0 0.0
        %614 = vmatprep.subr.mxu0 0.0
        %615 = vmatpush1.msra.mxu0 0.0
        %616 = vmatprep.subr.mxu0 0.0
        %617 = vmatpush1.msra.mxu0 0.0
        %618 = vmatprep.subr.mxu0 0.0
        %619 = vmatpush1.msra.mxu0 0.0
        %620 = vmatprep.subr.mxu0 0.0
        %621 = vmatpush1.msra.mxu0 0.0
        %622 = vmatprep.subr.mxu0 0.0
        %623 = vmatpush1.msra.mxu0 0.0
        %624 = vmatprep.subr.mxu0 0.0
        %625 = vmatpush1.msra.mxu0 0.0
        %626 = vmatprep.subr.mxu0 0.0
        %627 = vmatpush1.msra.mxu0 0.0
        %628 = vmatprep.subr.mxu0 0.0
        %629 = vmatpush1.msra.mxu0 0.0
        %630 = vmatprep.subr.mxu0 0.0
        %631 = vmatpush1.msra.mxu0 0.0
        %632 = vmatprep.subr.mxu0 0.0
        %633 = vmatpush1.msra.mxu0 0.0
        %634 = vmatprep.subr.mxu0 0.0
        %635 = vmatpush1.msra.mxu0 0.0
        %636 = vmatprep.subr.mxu0 0.0
        %637 = vmatpush1.msra.mxu0 0.0
        %638 = vmatprep.subr.mxu0 0.0
        %639 = vmatpush1.msra.mxu0 0.0
        %640 = vmatprep.subr.mxu0 0.0
        %641 = vmatpush1.msra.mxu0 0.0
        %642 = vmatprep.subr.mxu0 0.0
        %643 = vmatpush1.msra.mxu0 0.0
        %644 = vmatprep.subr.mxu0 0.0
        %645 = vmatpush1.msra.mxu0 0.0
        %646 = vmatprep.subr.mxu0 0.0
        %647 = vmatpush1.msra.mxu0 0.0
        %648 = vmatprep.subr.mxu0 0.0
        %649 = vmatpush1.msra.mxu0 0.0
        %650 = vmatprep.subr.mxu0 0.0
        %651 = vmatpush1.msra.mxu0 0.0
        %652 = vmatprep.subr.mxu0 0.0
        %653 = vmatpush1.msra.mxu0 0.0
        %654 = vmatprep.subr.mxu0 0.0
        %655 = vmatpush1.msra.mxu0 0.0
        %656 = vmatprep.subr.mxu0 0.0
        %657 = vmatpush1.msra.mxu0 0.0
        %658 = vmatprep.subr.mxu0 0.0
        %659 = vmatpush1.msra.mxu0 0.0
        %660 = vmatprep.subr.mxu0 0.0
        %661 = vmatpush1.msra.mxu0 0.0
        %662 = vmatprep.subr.mxu0 0.0
        %663 = vmatpush1.msra.mxu0 0.0
        %664 = vmatprep.subr.mxu0 0.0
        %665 = vmatpush1.msra.mxu0 0.0
        %666 = vmatprep.mubr.f32.mxu0 0.0
        %667 = vmatmul.mubr.f32.gmra.mrb[0].mxu0 %v297
        %v668 = vpop.f32.mrb[0].mxu0
        %v669 = vadd.f32 0.0, %v668
        %v670 = vpop.f32.mrb[0].mxu0
        %671 = vmatprep.mubr.f32.mxu0 0.0
        %672 = vmatmul.mubr.f32.gmra.mrb[0].mxu0 %v300
        %v673 = vpop.f32.mrb[0].mxu0
        %v674 = vadd.f32 0.0, %v673
        %v675 = vpop.f32.mrb[0].mxu0
        %676 = vdwg.mxu0
        %677 = vmatprep.subr.mxu0 0.0
        %678 = vmatpush1.msra.mxu0 %v272
        %679 = vmatprep.subr.mxu0 0.0
        %680 = vmatpush1.msra.mxu0 %v273
        %681 = vmatprep.subr.mxu0 0.0
        %682 = vmatpush1.msra.mxu0 0.0
        %683 = vmatprep.subr.mxu0 0.0
        %684 = vmatpush1.msra.mxu0 0.0
        %685 = vmatprep.subr.mxu0 0.0
        %686 = vmatpush1.msra.mxu0 0.0
        %687 = vmatprep.subr.mxu0 0.0
        %688 = vmatpush1.msra.mxu0 0.0
        %689 = vmatprep.subr.mxu0 0.0
        %690 = vmatpush1.msra.mxu0 0.0
        %691 = vmatprep.subr.mxu0 0.0
        %692 = vmatpush1.msra.mxu0 0.0
        %693 = vmatprep.subr.mxu0 0.0
        %694 = vmatpush1.msra.mxu0 0.0
        %695 = vmatprep.subr.mxu0 0.0
        %696 = vmatpush1.msra.mxu0 0.0
        %697 = vmatprep.subr.mxu0 0.0
        %698 = vmatpush1.msra.mxu0 0.0
        %699 = vmatprep.subr.mxu0 0.0
        %700 = vmatpush1.msra.mxu0 0.0
        %701 = vmatprep.subr.mxu0 0.0
        %702 = vmatpush1.msra.mxu0 0.0
        %703 = vmatprep.subr.mxu0 0.0
        %704 = vmatpush1.msra.mxu0 0.0
        %705 = vmatprep.subr.mxu0 0.0
        %706 = vmatpush1.msra.mxu0 0.0
        %707 = vmatprep.subr.mxu0 0.0
        %708 = vmatpush1.msra.mxu0 0.0
        %709 = vmatprep.subr.mxu0 0.0
        %710 = vmatpush1.msra.mxu0 0.0
        %711 = vmatprep.subr.mxu0 0.0
        %712 = vmatpush1.msra.mxu0 0.0
        %713 = vmatprep.subr.mxu0 0.0
        %714 = vmatpush1.msra.mxu0 0.0
        %715 = vmatprep.subr.mxu0 0.0
        %716 = vmatpush1.msra.mxu0 0.0
        %717 = vmatprep.subr.mxu0 0.0
        %718 = vmatpush1.msra.mxu0 0.0
        %719 = vmatprep.subr.mxu0 0.0
        %720 = vmatpush1.msra.mxu0 0.0
        %721 = vmatprep.subr.mxu0 0.0
        %722 = vmatpush1.msra.mxu0 0.0
        %723 = vmatprep.subr.mxu0 0.0
        %724 = vmatpush1.msra.mxu0 0.0
        %725 = vmatprep.subr.mxu0 0.0
        %726 = vmatpush1.msra.mxu0 0.0
        %727 = vmatprep.subr.mxu0 0.0
        %728 = vmatpush1.msra.mxu0 0.0
        %729 = vmatprep.subr.mxu0 0.0
        %730 = vmatpush1.msra.mxu0 0.0
        %731 = vmatprep.subr.mxu0 0.0
        %732 = vmatpush1.msra.mxu0 0.0
        %733 = vmatprep.subr.mxu0 0.0
        %734 = vmatpush1.msra.mxu0 0.0
        %735 = vmatprep.subr.mxu0 0.0
        %736 = vmatpush1.msra.mxu0 0.0
        %737 = vmatprep.subr.mxu0 0.0
        %738 = vmatpush1.msra.mxu0 0.0
        %739 = vmatprep.subr.mxu0 0.0
        %740 = vmatpush1.msra.mxu0 0.0
        %741 = vmatprep.mubr.f32.mxu0 0.0
        %742 = vmatmul.mubr.f32.gmra.mrb[0].mxu0 %v297
        %v743 = vpop.f32.mrb[0].mxu0
        %v744 = vadd.f32 0.0, %v743
        %v745 = vpop.f32.mrb[0].mxu0
        %746 = vmatprep.mubr.f32.mxu0 0.0
        %747 = vmatmul.mubr.f32.gmra.mrb[0].mxu0 %v300
        %v748 = vpop.f32.mrb[0].mxu0
        %v749 = vadd.f32 0.0, %v748
        %v750 = vpop.f32.mrb[0].mxu0
        %751 = vdwg.mxu0
        %752 = vmatprep.subr.mxu0 0.0
        %753 = vmatpush1.msra.mxu0 %v274
        %754 = vmatprep.subr.mxu0 0.0
        %755 = vmatpush1.msra.mxu0 %v275
        %756 = vmatprep.subr.mxu0 0.0
        %757 = vmatpush1.msra.mxu0 0.0
        %758 = vmatprep.subr.mxu0 0.0
        %759 = vmatpush1.msra.mxu0 0.0
        %760 = vmatprep.subr.mxu0 0.0
        %761 = vmatpush1.msra.mxu0 0.0
        %762 = vmatprep.subr.mxu0 0.0
        %763 = vmatpush1.msra.mxu0 0.0
        %764 = vmatprep.subr.mxu0 0.0
        %765 = vmatpush1.msra.mxu0 0.0
        %766 = vmatprep.subr.mxu0 0.0
        %767 = vmatpush1.msra.mxu0 0.0
        %768 = vmatprep.subr.mxu0 0.0
        %769 = vmatpush1.msra.mxu0 0.0
        %770 = vmatprep.subr.mxu0 0.0
        %771 = vmatpush1.msra.mxu0 0.0
        %772 = vmatprep.subr.mxu0 0.0
        %773 = vmatpush1.msra.mxu0 0.0
        %774 = vmatprep.subr.mxu0 0.0
        %775 = vmatpush1.msra.mxu0 0.0
        %776 = vmatprep.subr.mxu0 0.0
        %777 = vmatpush1.msra.mxu0 0.0
        %778 = vmatprep.subr.mxu0 0.0
        %779 = vmatpush1.msra.mxu0 0.0
        %780 = vmatprep.subr.mxu0 0.0
        %781 = vmatpush1.msra.mxu0 0.0
        %782 = vmatprep.subr.mxu0 0.0
        %783 = vmatpush1.msra.mxu0 0.0
        %784 = vmatprep.subr.mxu0 0.0
        %785 = vmatpush1.msra.mxu0 0.0
        %786 = vmatprep.subr.mxu0 0.0
        %787 = vmatpush1.msra.mxu0 0.0
        %788 = vmatprep.subr.mxu0 0.0
        %789 = vmatpush1.msra.mxu0 0.0
        %790 = vmatprep.subr.mxu0 0.0
        %791 = vmatpush1.msra.mxu0 0.0
        %792 = vmatprep.subr.mxu0 0.0
        %793 = vmatpush1.msra.mxu0 0.0
        %794 = vmatprep.subr.mxu0 0.0
        %795 = vmatpush1.msra.mxu0 0.0
        %796 = vmatprep.subr.mxu0 0.0
        %797 = vmatpush1.msra.mxu0 0.0
        %798 = vmatprep.subr.mxu0 0.0
        %799 = vmatpush1.msra.mxu0 0.0
        %800 = vmatprep.subr.mxu0 0.0
        %801 = vmatpush1.msra.mxu0 0.0
        %802 = vmatprep.subr.mxu0 0.0
        %803 = vmatpush1.msra.mxu0 0.0
        %804 = vmatprep.subr.mxu0 0.0
        %805 = vmatpush1.msra.mxu0 0.0
        %806 = vmatprep.subr.mxu0 0.0
        %807 = vmatpush1.msra.mxu0 0.0
        %808 = vmatprep.subr.mxu0 0.0
        %809 = vmatpush1.msra.mxu0 0.0
        %810 = vmatprep.subr.mxu0 0.0
        %811 = vmatpush1.msra.mxu0 0.0
        %812 = vmatprep.subr.mxu0 0.0
        %813 = vmatpush1.msra.mxu0 0.0
        %814 = vmatprep.subr.mxu0 0.0
        %815 = vmatpush1.msra.mxu0 0.0
        %816 = vmatprep.mubr.f32.mxu0 0.0
        %817 = vmatmul.mubr.f32.gmra.mrb[0].mxu0 %v297
        %v818 = vpop.f32.mrb[0].mxu0
        %v819 = vadd.f32 0.0, %v818
        %v820 = vpop.f32.mrb[0].mxu0
        %821 = vmatprep.mubr.f32.mxu0 0.0
        %822 = vmatmul.mubr.f32.gmra.mrb[0].mxu0 %v300
        %v823 = vpop.f32.mrb[0].mxu0
        %v824 = vadd.f32 0.0, %v823
        %v825 = vpop.f32.mrb[0].mxu0
        %826 = vdwg.mxu0
        %827 = vmatprep.subr.mxu0 0.0
        %828 = vmatpush1.msra.mxu0 %v276
        %829 = vmatprep.subr.mxu0 0.0
        %830 = vmatpush1.msra.mxu0 %v277
        %831 = vmatprep.subr.mxu0 0.0
        %832 = vmatpush1.msra.mxu0 0.0
        %833 = vmatprep.subr.mxu0 0.0
        %834 = vmatpush1.msra.mxu0 0.0
        %835 = vmatprep.subr.mxu0 0.0
        %836 = vmatpush1.msra.mxu0 0.0
        %837 = vmatprep.subr.mxu0 0.0
        %838 = vmatpush1.msra.mxu0 0.0
        %839 = vmatprep.subr.mxu0 0.0
        %840 = vmatpush1.msra.mxu0 0.0
        %841 = vmatprep.subr.mxu0 0.0
        %842 = vmatpush1.msra.mxu0 0.0
        %843 = vmatprep.subr.mxu0 0.0
        %844 = vmatpush1.msra.mxu0 0.0
        %845 = vmatprep.subr.mxu0 0.0
        %846 = vmatpush1.msra.mxu0 0.0
        %847 = vmatprep.subr.mxu0 0.0
        %848 = vmatpush1.msra.mxu0 0.0
        %849 = vmatprep.subr.mxu0 0.0
        %850 = vmatpush1.msra.mxu0 0.0
        %851 = vmatprep.subr.mxu0 0.0
        %852 = vmatpush1.msra.mxu0 0.0
        %853 = vmatprep.subr.mxu0 0.0
        %854 = vmatpush1.msra.mxu0 0.0
        %855 = vmatprep.subr.mxu0 0.0
        %856 = vmatpush1.msra.mxu0 0.0
        %857 = vmatprep.subr.mxu0 0.0
        %858 = vmatpush1.msra.mxu0 0.0
        %859 = vmatprep.subr.mxu0 0.0
        %860 = vmatpush1.msra.mxu0 0.0
        %861 = vmatprep.subr.mxu0 0.0
        %862 = vmatpush1.msra.mxu0 0.0
        %863 = vmatprep.subr.mxu0 0.0
        %864 = vmatpush1.msra.mxu0 0.0
        %865 = vmatprep.subr.mxu0 0.0
        %866 = vmatpush1.msra.mxu0 0.0
        %867 = vmatprep.subr.mxu0 0.0
        %868 = vmatpush1.msra.mxu0 0.0
        %869 = vmatprep.subr.mxu0 0.0
        %870 = vmatpush1.msra.mxu0 0.0
        %871 = vmatprep.subr.mxu0 0.0
        %872 = vmatpush1.msra.mxu0 0.0
        %873 = vmatprep.subr.mxu0 0.0
        %874 = vmatpush1.msra.mxu0 0.0
        %875 = vmatprep.subr.mxu0 0.0
        %876 = vmatpush1.msra.mxu0 0.0
        %877 = vmatprep.subr.mxu0 0.0
        %878 = vmatpush1.msra.mxu0 0.0
        %879 = vmatprep.subr.mxu0 0.0
        %880 = vmatpush1.msra.mxu0 0.0
        %881 = vmatprep.subr.mxu0 0.0
        %882 = vmatpush1.msra.mxu0 0.0
        %883 = vmatprep.subr.mxu0 0.0
        %884 = vmatpush1.msra.mxu0 0.0
        %885 = vmatprep.subr.mxu0 0.0
        %886 = vmatpush1.msra.mxu0 0.0
        %887 = vmatprep.subr.mxu0 0.0
        %888 = vmatpush1.msra.mxu0 0.0
        %889 = vmatprep.subr.mxu0 0.0
        %890 = vmatpush1.msra.mxu0 0.0
        %891 = vmatprep.mubr.f32.mxu0 0.0
        %892 = vmatmul.mubr.f32.gmra.mrb[0].mxu0 %v297
        %v893 = vpop.f32.mrb[0].mxu0
        %v894 = vadd.f32 0.0, %v893
        %v895 = vpop.f32.mrb[0].mxu0
        %896 = vmatprep.mubr.f32.mxu0 0.0
        %897 = vmatmul.mubr.f32.gmra.mrb[0].mxu0 %v300
        %v898 = vpop.f32.mrb[0].mxu0
        %v899 = vadd.f32 0.0, %v898
        %v900 = vpop.f32.mrb[0].mxu0
        %901 = vdwg.mxu0
        %v902 = vadd.f32 %v280, %v369
        %v903 = vadd.f32 %v281, %v374
        %v904 = vadd.f32 %v282, %v444
        %v905 = vadd.f32 %v283, %v449
        %v906 = vadd.f32 %v284, %v519
        %v907 = vadd.f32 %v285, %v524
        %v908 = vadd.f32 %v286, %v594
        %v909 = vadd.f32 %v287, %v599
        %v910 = vadd.f32 %v288, %v669
        %v911 = vadd.f32 %v289, %v674
        %v912 = vadd.f32 %v290, %v744
        %v913 = vadd.f32 %v291, %v749
        %v914 = vadd.f32 %v292, %v819
        %v915 = vadd.f32 %v293, %v824
        %v916 = vadd.f32 %v294, %v894
        %v917 = vadd.f32 %v295, %v899
        %918 = vst.msk [vmem:[#allocation2] sm:$0xff] %vm245, %v902
        %919 = vst.msk [vmem:[#allocation2 + $0x8] sm:$0xff] %vm245, %v903
        %920 = vst.msk [vmem:[#allocation2 + $0x10] sm:$0xff] %vm245, %v904
        %921 = vst.msk [vmem:[#allocation2 + $0x18] sm:$0xff] %vm245, %v905
        %922 = vst.msk [vmem:[#allocation2 + $0x20] sm:$0xff] %vm245, %v906
        %923 = vst.msk [vmem:[#allocation2 + $0x28] sm:$0xff] %vm245, %v907
        %924 = vst.msk [vmem:[#allocation2 + $0x30] sm:$0xff] %vm245, %v908
        %925 = vst.msk [vmem:[#allocation2 + $0x38] sm:$0xff] %vm245, %v909
        %926 = vst.msk [vmem:[#allocation2 + $0x40] sm:$0xff] %vm245, %v910
        %927 = vst.msk [vmem:[#allocation2 + $0x48] sm:$0xff] %vm245, %v911
        %928 = vst.msk [vmem:[#allocation2 + $0x50] sm:$0xff] %vm245, %v912
        %929 = vst.msk [vmem:[#allocation2 + $0x58] sm:$0xff] %vm245, %v913
        %930 = vst.msk [vmem:[#allocation2 + $0x60] sm:$0xff] %vm245, %v914
        %931 = vst.msk [vmem:[#allocation2 + $0x68] sm:$0xff] %vm245, %v915
        %932 = vst.msk [vmem:[#allocation2 + $0x70] sm:$0xff] %vm245, %v916
        %933 = vst.msk [vmem:[#allocation2 + $0x78] sm:$0xff] %vm245, %v917
        %v934 = vld [vmem:[#allocation6] sm:$0xff]
        %v935 = vld [vmem:[#allocation6 + $0x8] sm:$0xff]
        %v937 = vsel %vm245, %v262, 0
        %v940 = vsel %vm245, %v263, 0
        %v943 = vsel %vm245, %v264, 0
        %v946 = vsel %vm245, %v265, 0
        %v949 = vsel %vm245, %v266, 0
        %v952 = vsel %vm245, %v267, 0
        %v955 = vsel %vm245, %v268, 0
        %v958 = vsel %vm245, %v269, 0
        %v961 = vsel %vm245, %v270, 0
        %v964 = vsel %vm245, %v271, 0
        %v967 = vsel %vm245, %v272, 0
        %v970 = vsel %vm245, %v273, 0
        %v973 = vsel %vm245, %v274, 0
        %v976 = vsel %vm245, %v275, 0
        %v979 = vsel %vm245, %v276, 0
        %v982 = vsel %vm245, %v277, 0
        %984 = vmatprep.subr.mxu0 0.0
        %985 = vmatpush1.msra.mxu0 %v934
        %986 = vmatprep.subr.mxu0 0.0
        %987 = vmatpush1.msra.mxu0 %v935
        %988 = vmatprep.subr.mxu0 0.0
        %989 = vmatpush1.msra.mxu0 0.0
        %990 = vmatprep.subr.mxu0 0.0
        %991 = vmatpush1.msra.mxu0 0.0
        %992 = vmatprep.subr.mxu0 0.0
        %993 = vmatpush1.msra.mxu0 0.0
        %994 = vmatprep.subr.mxu0 0.0
        %995 = vmatpush1.msra.mxu0 0.0
        %996 = vmatprep.subr.mxu0 0.0
        %997 = vmatpush1.msra.mxu0 0.0
        %998 = vmatprep.subr.mxu0 0.0
        %999 = vmatpush1.msra.mxu0 0.0
        %1000 = vmatprep.subr.mxu0 0.0
        %1001 = vmatpush1.msra.mxu0 0.0
        %1002 = vmatprep.subr.mxu0 0.0
        %1003 = vmatpush1.msra.mxu0 0.0
        %1004 = vmatprep.subr.mxu0 0.0
        %1005 = vmatpush1.msra.mxu0 0.0
        %1006 = vmatprep.subr.mxu0 0.0
        %1007 = vmatpush1.msra.mxu0 0.0
        %1008 = vmatprep.subr.mxu0 0.0
        %1009 = vmatpush1.msra.mxu0 0.0
        %1010 = vmatprep.subr.mxu0 0.0
        %1011 = vmatpush1.msra.mxu0 0.0
        %1012 = vmatprep.subr.mxu0 0.0
        %1013 = vmatpush1.msra.mxu0 0.0
        %1014 = vmatprep.subr.mxu0 0.0
        %1015 = vmatpush1.msra.mxu0 0.0
        %1016 = vmatprep.subr.mxu0 0.0
        %1017 = vmatpush1.msra.mxu0 0.0
        %1018 = vmatprep.subr.mxu0 0.0
        %1019 = vmatpush1.msra.mxu0 0.0
        %1020 = vmatprep.subr.mxu0 0.0
        %1021 = vmatpush1.msra.mxu0 0.0
        %1022 = vmatprep.subr.mxu0 0.0
        %1023 = vmatpush1.msra.mxu0 0.0
        %1024 = vmatprep.subr.mxu0 0.0
        %1025 = vmatpush1.msra.mxu0 0.0
        %1026 = vmatprep.subr.mxu0 0.0
        %1027 = vmatpush1.msra.mxu0 0.0
        %1028 = vmatprep.subr.mxu0 0.0
        %1029 = vmatpush1.msra.mxu0 0.0
        %1030 = vmatprep.subr.mxu0 0.0
        %1031 = vmatpush1.msra.mxu0 0.0
        %1032 = vmatprep.subr.mxu0 0.0
        %1033 = vmatpush1.msra.mxu0 0.0
        %1034 = vmatprep.subr.mxu0 0.0
        %1035 = vmatpush1.msra.mxu0 0.0
        %1036 = vmatprep.subr.mxu0 0.0
        %1037 = vmatpush1.msra.mxu0 0.0
        %1038 = vmatprep.subr.mxu0 0.0
        %1039 = vmatpush1.msra.mxu0 0.0
        %1040 = vmatprep.subr.mxu0 0.0
        %1041 = vmatpush1.msra.mxu0 0.0
        %1042 = vmatprep.subr.mxu0 0.0
        %1043 = vmatpush1.msra.mxu0 0.0
        %1044 = vmatprep.subr.mxu0 0.0
        %1045 = vmatpush1.msra.mxu0 0.0
        %1046 = vmatprep.subr.mxu0 0.0
        %1047 = vmatpush1.msra.mxu0 0.0
        %1048 = vmatprep.mubr.f32.mxu0 0.0
        %1049 = vmatmul.mubr.f32.gmra.mrb[0].mxu0 %v937
        %v1050 = vpop.f32.mrb[0].mxu0
        %v1051 = vadd.f32 0.0, %v1050
        %v1052 = vpop.f32.mrb[0].mxu0
        %1053 = vmatprep.mubr.f32.mxu0 0.0
        %1054 = vmatmul.mubr.f32.gmra.mrb[0].mxu0 %v940
        %v1055 = vpop.f32.mrb[0].mxu0
        %v1056 = vadd.f32 0.0, %v1055
        %v1057 = vpop.f32.mrb[0].mxu0
        %1058 = vmatprep.mubr.f32.mxu0 0.0
        %1059 = vmatmul.mubr.f32.gmra.mrb[0].mxu0 %v943
        %v1060 = vpop.f32.mrb[0].mxu0
        %v1061 = vadd.f32 0.0, %v1060
        %v1062 = vpop.f32.mrb[0].mxu0
        %1063 = vmatprep.mubr.f32.mxu0 0.0
        %1064 = vmatmul.mubr.f32.gmra.mrb[0].mxu0 %v946
        %v1065 = vpop.f32.mrb[0].mxu0
        %v1066 = vadd.f32 0.0, %v1065
        %v1067 = vpop.f32.mrb[0].mxu0
        %1068 = vmatprep.mubr.f32.mxu0 0.0
        %1069 = vmatmul.mubr.f32.gmra.mrb[0].mxu0 %v949
        %v1070 = vpop.f32.mrb[0].mxu0
        %v1071 = vadd.f32 0.0, %v1070
        %v1072 = vpop.f32.mrb[0].mxu0
        %1073 = vmatprep.mubr.f32.mxu0 0.0
        %1074 = vmatmul.mubr.f32.gmra.mrb[0].mxu0 %v952
        %v1075 = vpop.f32.mrb[0].mxu0
        %v1076 = vadd.f32 0.0, %v1075
        %v1077 = vpop.f32.mrb[0].mxu0
        %1078 = vmatprep.mubr.f32.mxu0 0.0
        %1079 = vmatmul.mubr.f32.gmra.mrb[0].mxu0 %v955
        %v1080 = vpop.f32.mrb[0].mxu0
        %v1081 = vadd.f32 0.0, %v1080
        %v1082 = vpop.f32.mrb[0].mxu0
        %1083 = vmatprep.mubr.f32.mxu0 0.0
        %1084 = vmatmul.mubr.f32.gmra.mrb[0].mxu0 %v958
        %v1085 = vpop.f32.mrb[0].mxu0
        %v1086 = vadd.f32 0.0, %v1085
        %v1087 = vpop.f32.mrb[0].mxu0
        %1088 = vmatprep.mubr.f32.mxu0 0.0
        %1089 = vmatmul.mubr.f32.gmra.mrb[0].mxu0 %v961
        %v1090 = vpop.f32.mrb[0].mxu0
        %v1091 = vadd.f32 0.0, %v1090
        %v1092 = vpop.f32.mrb[0].mxu0
        %1093 = vmatprep.mubr.f32.mxu0 0.0
        %1094 = vmatmul.mubr.f32.gmra.mrb[0].mxu0 %v964
        %v1095 = vpop.f32.mrb[0].mxu0
        %v1096 = vadd.f32 0.0, %v1095
        %v1097 = vpop.f32.mrb[0].mxu0
        %1098 = vmatprep.mubr.f32.mxu0 0.0
        %1099 = vmatmul.mubr.f32.gmra.mrb[0].mxu0 %v967
        %v1100 = vpop.f32.mrb[0].mxu0
        %v1101 = vadd.f32 0.0, %v1100
        %v1102 = vpop.f32.mrb[0].mxu0
        %1103 = vmatprep.mubr.f32.mxu0 0.0
        %1104 = vmatmul.mubr.f32.gmra.mrb[0].mxu0 %v970
        %v1105 = vpop.f32.mrb[0].mxu0
        %v1106 = vadd.f32 0.0, %v1105
        %v1107 = vpop.f32.mrb[0].mxu0
        %1108 = vmatprep.mubr.f32.mxu0 0.0
        %1109 = vmatmul.mubr.f32.gmra.mrb[0].mxu0 %v973
        %v1110 = vpop.f32.mrb[0].mxu0
        %v1111 = vadd.f32 0.0, %v1110
        %v1112 = vpop.f32.mrb[0].mxu0
        %1113 = vmatprep.mubr.f32.mxu0 0.0
        %1114 = vmatmul.mubr.f32.gmra.mrb[0].mxu0 %v976
        %v1115 = vpop.f32.mrb[0].mxu0
        %v1116 = vadd.f32 0.0, %v1115
        %v1117 = vpop.f32.mrb[0].mxu0
        %1118 = vmatprep.mubr.f32.mxu0 0.0
        %1119 = vmatmul.mubr.f32.gmra.mrb[0].mxu0 %v979
        %v1120 = vpop.f32.mrb[0].mxu0
        %v1121 = vadd.f32 0.0, %v1120
        %v1122 = vpop.f32.mrb[0].mxu0
        %1123 = vmatprep.mubr.f32.mxu0 0.0
        %1124 = vmatmul.mubr.f32.gmra.mrb[0].mxu0 %v982
        %v1125 = vpop.f32.mrb[0].mxu0
        %v1126 = vadd.f32 0.0, %v1125
        %v1127 = vpop.f32.mrb[0].mxu0
        %1128 = vdwg.mxu0
        %s1129 = scalar_lea.vmem [#allocation8], 16
        %v1130 = vld [vmem:[%s1129] sm:$0xff]
        %v1131 = vld [vmem:[%s1129 + $0x8] sm:$0xff]
        %v1132 = vld [vmem:[#allocation2] sm:$0xff]
        %v1133 = vld [vmem:[#allocation2 + $0x8] sm:$0xff]
        %v1134 = vld [vmem:[#allocation2 + $0x10] sm:$0xff]
        %v1135 = vld [vmem:[#allocation2 + $0x18] sm:$0xff]
        %v1136 = vld [vmem:[#allocation2 + $0x20] sm:$0xff]
        %v1137 = vld [vmem:[#allocation2 + $0x28] sm:$0xff]
        %v1138 = vld [vmem:[#allocation2 + $0x30] sm:$0xff]
        %v1139 = vld [vmem:[#allocation2 + $0x38] sm:$0xff]
        %v1140 = vld [vmem:[#allocation2 + $0x40] sm:$0xff]
        %v1141 = vld [vmem:[#allocation2 + $0x48] sm:$0xff]
        %v1142 = vld [vmem:[#allocation2 + $0x50] sm:$0xff]
        %v1143 = vld [vmem:[#allocation2 + $0x58] sm:$0xff]
        %v1144 = vld [vmem:[#allocation2 + $0x60] sm:$0xff]
        %v1145 = vld [vmem:[#allocation2 + $0x68] sm:$0xff]
        %v1146 = vld [vmem:[#allocation2 + $0x70] sm:$0xff]
        %v1147 = vld [vmem:[#allocation2 + $0x78] sm:$0xff]
        %v1149 = vsel %vm245, %v1130, 0
        %v1152 = vsel %vm245, %v1131, 0
        %1154 = vmatprep.subr.mxu0 0.0
        %1155 = vmatpush1.msra.mxu0 %v1051
        %1156 = vmatprep.subr.mxu0 0.0
        %1157 = vmatpush1.msra.mxu0 %v1056
        %1158 = vmatprep.subr.mxu0 0.0
        %1159 = vmatpush1.msra.mxu0 0.0
        %1160 = vmatprep.subr.mxu0 0.0
        %1161 = vmatpush1.msra.mxu0 0.0
        %1162 = vmatprep.subr.mxu0 0.0
        %1163 = vmatpush1.msra.mxu0 0.0
        %1164 = vmatprep.subr.mxu0 0.0
        %1165 = vmatpush1.msra.mxu0 0.0
        %1166 = vmatprep.subr.mxu0 0.0
        %1167 = vmatpush1.msra.mxu0 0.0
        %1168 = vmatprep.subr.mxu0 0.0
        %1169 = vmatpush1.msra.mxu0 0.0
        %1170 = vmatprep.subr.mxu0 0.0
        %1171 = vmatpush1.msra.mxu0 0.0
        %1172 = vmatprep.subr.mxu0 0.0
        %1173 = vmatpush1.msra.mxu0 0.0
        %1174 = vmatprep.subr.mxu0 0.0
        %1175 = vmatpush1.msra.mxu0 0.0
        %1176 = vmatprep.subr.mxu0 0.0
        %1177 = vmatpush1.msra.mxu0 0.0
        %1178 = vmatprep.subr.mxu0 0.0
        %1179 = vmatpush1.msra.mxu0 0.0
        %1180 = vmatprep.subr.mxu0 0.0
        %1181 = vmatpush1.msra.mxu0 0.0
        %1182 = vmatprep.subr.mxu0 0.0
        %1183 = vmatpush1.msra.mxu0 0.0
        %1184 = vmatprep.subr.mxu0 0.0
        %1185 = vmatpush1.msra.mxu0 0.0
        %1186 = vmatprep.subr.mxu0 0.0
        %1187 = vmatpush1.msra.mxu0 0.0
        %1188 = vmatprep.subr.mxu0 0.0
        %1189 = vmatpush1.msra.mxu0 0.0
        %1190 = vmatprep.subr.mxu0 0.0
        %1191 = vmatpush1.msra.mxu0 0.0
        %1192 = vmatprep.subr.mxu0 0.0
        %1193 = vmatpush1.msra.mxu0 0.0
        %1194 = vmatprep.subr.mxu0 0.0
        %1195 = vmatpush1.msra.mxu0 0.0
        %1196 = vmatprep.subr.mxu0 0.0
        %1197 = vmatpush1.msra.mxu0 0.0
        %1198 = vmatprep.subr.mxu0 0.0
        %1199 = vmatpush1.msra.mxu0 0.0
        %1200 = vmatprep.subr.mxu0 0.0
        %1201 = vmatpush1.msra.mxu0 0.0
        %1202 = vmatprep.subr.mxu0 0.0
        %1203 = vmatpush1.msra.mxu0 0.0
        %1204 = vmatprep.subr.mxu0 0.0
        %1205 = vmatpush1.msra.mxu0 0.0
        %1206 = vmatprep.subr.mxu0 0.0
        %1207 = vmatpush1.msra.mxu0 0.0
        %1208 = vmatprep.subr.mxu0 0.0
        %1209 = vmatpush1.msra.mxu0 0.0
        %1210 = vmatprep.subr.mxu0 0.0
        %1211 = vmatpush1.msra.mxu0 0.0
        %1212 = vmatprep.subr.mxu0 0.0
        %1213 = vmatpush1.msra.mxu0 0.0
        %1214 = vmatprep.subr.mxu0 0.0
        %1215 = vmatpush1.msra.mxu0 0.0
        %1216 = vmatprep.subr.mxu0 0.0
        %1217 = vmatpush1.msra.mxu0 0.0
        %1218 = vmatprep.mubr.f32.mxu0 0.0
        %1219 = vmatmul.mubr.f32.gmra.mrb[0].mxu0 %v1149
        %v1220 = vpop.f32.mrb[0].mxu0
        %v1221 = vadd.f32 0.0, %v1220
        %v1222 = vpop.f32.mrb[0].mxu0
        %1223 = vmatprep.mubr.f32.mxu0 0.0
        %1224 = vmatmul.mubr.f32.gmra.mrb[0].mxu0 %v1152
        %v1225 = vpop.f32.mrb[0].mxu0
        %v1226 = vadd.f32 0.0, %v1225
        %v1227 = vpop.f32.mrb[0].mxu0
        %1228 = vdwg.mxu0
        %1229 = vmatprep.subr.mxu0 0.0
        %1230 = vmatpush1.msra.mxu0 %v1061
        %1231 = vmatprep.subr.mxu0 0.0
        %1232 = vmatpush1.msra.mxu0 %v1066
        %1233 = vmatprep.subr.mxu0 0.0
        %1234 = vmatpush1.msra.mxu0 0.0
        %1235 = vmatprep.subr.mxu0 0.0
        %1236 = vmatpush1.msra.mxu0 0.0
        %1237 = vmatprep.subr.mxu0 0.0
        %1238 = vmatpush1.msra.mxu0 0.0
        %1239 = vmatprep.subr.mxu0 0.0
        %1240 = vmatpush1.msra.mxu0 0.0
        %1241 = vmatprep.subr.mxu0 0.0
        %1242 = vmatpush1.msra.mxu0 0.0
        %1243 = vmatprep.subr.mxu0 0.0
        %1244 = vmatpush1.msra.mxu0 0.0
        %1245 = vmatprep.subr.mxu0 0.0
        %1246 = vmatpush1.msra.mxu0 0.0
        %1247 = vmatprep.subr.mxu0 0.0
        %1248 = vmatpush1.msra.mxu0 0.0
        %1249 = vmatprep.subr.mxu0 0.0
        %1250 = vmatpush1.msra.mxu0 0.0
        %1251 = vmatprep.subr.mxu0 0.0
        %1252 = vmatpush1.msra.mxu0 0.0
        %1253 = vmatprep.subr.mxu0 0.0
        %1254 = vmatpush1.msra.mxu0 0.0
        %1255 = vmatprep.subr.mxu0 0.0
        %1256 = vmatpush1.msra.mxu0 0.0
        %1257 = vmatprep.subr.mxu0 0.0
        %1258 = vmatpush1.msra.mxu0 0.0
        %1259 = vmatprep.subr.mxu0 0.0
        %1260 = vmatpush1.msra.mxu0 0.0
        %1261 = vmatprep.subr.mxu0 0.0
        %1262 = vmatpush1.msra.mxu0 0.0
        %1263 = vmatprep.subr.mxu0 0.0
        %1264 = vmatpush1.msra.mxu0 0.0
        %1265 = vmatprep.subr.mxu0 0.0
        %1266 = vmatpush1.msra.mxu0 0.0
        %1267 = vmatprep.subr.mxu0 0.0
        %1268 = vmatpush1.msra.mxu0 0.0
        %1269 = vmatprep.subr.mxu0 0.0
        %1270 = vmatpush1.msra.mxu0 0.0
        %1271 = vmatprep.subr.mxu0 0.0
        %1272 = vmatpush1.msra.mxu0 0.0
        %1273 = vmatprep.subr.mxu0 0.0
        %1274 = vmatpush1.msra.mxu0 0.0
        %1275 = vmatprep.subr.mxu0 0.0
        %1276 = vmatpush1.msra.mxu0 0.0
        %1277 = vmatprep.subr.mxu0 0.0
        %1278 = vmatpush1.msra.mxu0 0.0
        %1279 = vmatprep.subr.mxu0 0.0
        %1280 = vmatpush1.msra.mxu0 0.0
        %1281 = vmatprep.subr.mxu0 0.0
        %1282 = vmatpush1.msra.mxu0 0.0
        %1283 = vmatprep.subr.mxu0 0.0
        %1284 = vmatpush1.msra.mxu0 0.0
        %1285 = vmatprep.subr.mxu0 0.0
        %1286 = vmatpush1.msra.mxu0 0.0
        %1287 = vmatprep.subr.mxu0 0.0
        %1288 = vmatpush1.msra.mxu0 0.0
        %1289 = vmatprep.subr.mxu0 0.0
        %1290 = vmatpush1.msra.mxu0 0.0
        %1291 = vmatprep.subr.mxu0 0.0
        %1292 = vmatpush1.msra.mxu0 0.0
        %1293 = vmatprep.mubr.f32.mxu0 0.0
        %1294 = vmatmul.mubr.f32.gmra.mrb[0].mxu0 %v1149
        %v1295 = vpop.f32.mrb[0].mxu0
        %v1296 = vadd.f32 0.0, %v1295
        %v1297 = vpop.f32.mrb[0].mxu0
        %1298 = vmatprep.mubr.f32.mxu0 0.0
        %1299 = vmatmul.mubr.f32.gmra.mrb[0].mxu0 %v1152
        %v1300 = vpop.f32.mrb[0].mxu0
        %v1301 = vadd.f32 0.0, %v1300
        %v1302 = vpop.f32.mrb[0].mxu0
        %1303 = vdwg.mxu0
        %1304 = vmatprep.subr.mxu0 0.0
        %1305 = vmatpush1.msra.mxu0 %v1071
        %1306 = vmatprep.subr.mxu0 0.0
        %1307 = vmatpush1.msra.mxu0 %v1076
        %1308 = vmatprep.subr.mxu0 0.0
        %1309 = vmatpush1.msra.mxu0 0.0
        %1310 = vmatprep.subr.mxu0 0.0
        %1311 = vmatpush1.msra.mxu0 0.0
        %1312 = vmatprep.subr.mxu0 0.0
        %1313 = vmatpush1.msra.mxu0 0.0
        %1314 = vmatprep.subr.mxu0 0.0
        %1315 = vmatpush1.msra.mxu0 0.0
        %1316 = vmatprep.subr.mxu0 0.0
        %1317 = vmatpush1.msra.mxu0 0.0
        %1318 = vmatprep.subr.mxu0 0.0
        %1319 = vmatpush1.msra.mxu0 0.0
        %1320 = vmatprep.subr.mxu0 0.0
        %1321 = vmatpush1.msra.mxu0 0.0
        %1322 = vmatprep.subr.mxu0 0.0
        %1323 = vmatpush1.msra.mxu0 0.0
        %1324 = vmatprep.subr.mxu0 0.0
        %1325 = vmatpush1.msra.mxu0 0.0
        %1326 = vmatprep.subr.mxu0 0.0
        %1327 = vmatpush1.msra.mxu0 0.0
        %1328 = vmatprep.subr.mxu0 0.0
        %1329 = vmatpush1.msra.mxu0 0.0
        %1330 = vmatprep.subr.mxu0 0.0
        %1331 = vmatpush1.msra.mxu0 0.0
        %1332 = vmatprep.subr.mxu0 0.0
        %1333 = vmatpush1.msra.mxu0 0.0
        %1334 = vmatprep.subr.mxu0 0.0
        %1335 = vmatpush1.msra.mxu0 0.0
        %1336 = vmatprep.subr.mxu0 0.0
        %1337 = vmatpush1.msra.mxu0 0.0
        %1338 = vmatprep.subr.mxu0 0.0
        %1339 = vmatpush1.msra.mxu0 0.0
        %1340 = vmatprep.subr.mxu0 0.0
        %1341 = vmatpush1.msra.mxu0 0.0
        %1342 = vmatprep.subr.mxu0 0.0
        %1343 = vmatpush1.msra.mxu0 0.0
        %1344 = vmatprep.subr.mxu0 0.0
        %1345 = vmatpush1.msra.mxu0 0.0
        %1346 = vmatprep.subr.mxu0 0.0
        %1347 = vmatpush1.msra.mxu0 0.0
        %1348 = vmatprep.subr.mxu0 0.0
        %1349 = vmatpush1.msra.mxu0 0.0
        %1350 = vmatprep.subr.mxu0 0.0
        %1351 = vmatpush1.msra.mxu0 0.0
        %1352 = vmatprep.subr.mxu0 0.0
        %1353 = vmatpush1.msra.mxu0 0.0
        %1354 = vmatprep.subr.mxu0 0.0
        %1355 = vmatpush1.msra.mxu0 0.0
        %1356 = vmatprep.subr.mxu0 0.0
        %1357 = vmatpush1.msra.mxu0 0.0
        %1358 = vmatprep.subr.mxu0 0.0
        %1359 = vmatpush1.msra.mxu0 0.0
        %1360 = vmatprep.subr.mxu0 0.0
        %1361 = vmatpush1.msra.mxu0 0.0
        %1362 = vmatprep.subr.mxu0 0.0
        %1363 = vmatpush1.msra.mxu0 0.0
        %1364 = vmatprep.subr.mxu0 0.0
        %1365 = vmatpush1.msra.mxu0 0.0
        %1366 = vmatprep.subr.mxu0 0.0
        %1367 = vmatpush1.msra.mxu0 0.0
        %1368 = vmatprep.mubr.f32.mxu0 0.0
        %1369 = vmatmul.mubr.f32.gmra.mrb[0].mxu0 %v1149
        %v1370 = vpop.f32.mrb[0].mxu0
        %v1371 = vadd.f32 0.0, %v1370
        %v1372 = vpop.f32.mrb[0].mxu0
        %1373 = vmatprep.mubr.f32.mxu0 0.0
        %1374 = vmatmul.mubr.f32.gmra.mrb[0].mxu0 %v1152
        %v1375 = vpop.f32.mrb[0].mxu0
        %v1376 = vadd.f32 0.0, %v1375
        %v1377 = vpop.f32.mrb[0].mxu0
        %1378 = vdwg.mxu0
        %1379 = vmatprep.subr.mxu0 0.0
        %1380 = vmatpush1.msra.mxu0 %v1081
        %1381 = vmatprep.subr.mxu0 0.0
        %1382 = vmatpush1.msra.mxu0 %v1086
        %1383 = vmatprep.subr.mxu0 0.0
        %1384 = vmatpush1.msra.mxu0 0.0
        %1385 = vmatprep.subr.mxu0 0.0
        %1386 = vmatpush1.msra.mxu0 0.0
        %1387 = vmatprep.subr.mxu0 0.0
        %1388 = vmatpush1.msra.mxu0 0.0
        %1389 = vmatprep.subr.mxu0 0.0
        %1390 = vmatpush1.msra.mxu0 0.0
        %1391 = vmatprep.subr.mxu0 0.0
        %1392 = vmatpush1.msra.mxu0 0.0
        %1393 = vmatprep.subr.mxu0 0.0
        %1394 = vmatpush1.msra.mxu0 0.0
        %1395 = vmatprep.subr.mxu0 0.0
        %1396 = vmatpush1.msra.mxu0 0.0
        %1397 = vmatprep.subr.mxu0 0.0
        %1398 = vmatpush1.msra.mxu0 0.0
        %1399 = vmatprep.subr.mxu0 0.0
        %1400 = vmatpush1.msra.mxu0 0.0
        %1401 = vmatprep.subr.mxu0 0.0
        %1402 = vmatpush1.msra.mxu0 0.0
        %1403 = vmatprep.subr.mxu0 0.0
        %1404 = vmatpush1.msra.mxu0 0.0
        %1405 = vmatprep.subr.mxu0 0.0
        %1406 = vmatpush1.msra.mxu0 0.0
        %1407 = vmatprep.subr.mxu0 0.0
        %1408 = vmatpush1.msra.mxu0 0.0
        %1409 = vmatprep.subr.mxu0 0.0
        %1410 = vmatpush1.msra.mxu0 0.0
        %1411 = vmatprep.subr.mxu0 0.0
        %1412 = vmatpush1.msra.mxu0 0.0
        %1413 = vmatprep.subr.mxu0 0.0
        %1414 = vmatpush1.msra.mxu0 0.0
        %1415 = vmatprep.subr.mxu0 0.0
        %1416 = vmatpush1.msra.mxu0 0.0
        %1417 = vmatprep.subr.mxu0 0.0
        %1418 = vmatpush1.msra.mxu0 0.0
        %1419 = vmatprep.subr.mxu0 0.0
        %1420 = vmatpush1.msra.mxu0 0.0
        %1421 = vmatprep.subr.mxu0 0.0
        %1422 = vmatpush1.msra.mxu0 0.0
        %1423 = vmatprep.subr.mxu0 0.0
        %1424 = vmatpush1.msra.mxu0 0.0
        %1425 = vmatprep.subr.mxu0 0.0
        %1426 = vmatpush1.msra.mxu0 0.0
        %1427 = vmatprep.subr.mxu0 0.0
        %1428 = vmatpush1.msra.mxu0 0.0
        %1429 = vmatprep.subr.mxu0 0.0
        %1430 = vmatpush1.msra.mxu0 0.0
        %1431 = vmatprep.subr.mxu0 0.0
        %1432 = vmatpush1.msra.mxu0 0.0
        %1433 = vmatprep.subr.mxu0 0.0
        %1434 = vmatpush1.msra.mxu0 0.0
        %1435 = vmatprep.subr.mxu0 0.0
        %1436 = vmatpush1.msra.mxu0 0.0
        %1437 = vmatprep.subr.mxu0 0.0
        %1438 = vmatpush1.msra.mxu0 0.0
        %1439 = vmatprep.subr.mxu0 0.0
        %1440 = vmatpush1.msra.mxu0 0.0
        %1441 = vmatprep.subr.mxu0 0.0
        %1442 = vmatpush1.msra.mxu0 0.0
        %1443 = vmatprep.mubr.f32.mxu0 0.0
        %1444 = vmatmul.mubr.f32.gmra.mrb[0].mxu0 %v1149
        %v1445 = vpop.f32.mrb[0].mxu0
        %v1446 = vadd.f32 0.0, %v1445
        %v1447 = vpop.f32.mrb[0].mxu0
        %1448 = vmatprep.mubr.f32.mxu0 0.0
        %1449 = vmatmul.mubr.f32.gmra.mrb[0].mxu0 %v1152
        %v1450 = vpop.f32.mrb[0].mxu0
        %v1451 = vadd.f32 0.0, %v1450
        %v1452 = vpop.f32.mrb[0].mxu0
        %1453 = vdwg.mxu0
        %1454 = vmatprep.subr.mxu0 0.0
        %1455 = vmatpush1.msra.mxu0 %v1091
        %1456 = vmatprep.subr.mxu0 0.0
        %1457 = vmatpush1.msra.mxu0 %v1096
        %1458 = vmatprep.subr.mxu0 0.0
        %1459 = vmatpush1.msra.mxu0 0.0
        %1460 = vmatprep.subr.mxu0 0.0
        %1461 = vmatpush1.msra.mxu0 0.0
        %1462 = vmatprep.subr.mxu0 0.0
        %1463 = vmatpush1.msra.mxu0 0.0
        %1464 = vmatprep.subr.mxu0 0.0
        %1465 = vmatpush1.msra.mxu0 0.0
        %1466 = vmatprep.subr.mxu0 0.0
        %1467 = vmatpush1.msra.mxu0 0.0
        %1468 = vmatprep.subr.mxu0 0.0
        %1469 = vmatpush1.msra.mxu0 0.0
        %1470 = vmatprep.subr.mxu0 0.0
        %1471 = vmatpush1.msra.mxu0 0.0
        %1472 = vmatprep.subr.mxu0 0.0
        %1473 = vmatpush1.msra.mxu0 0.0
        %1474 = vmatprep.subr.mxu0 0.0
        %1475 = vmatpush1.msra.mxu0 0.0
        %1476 = vmatprep.subr.mxu0 0.0
        %1477 = vmatpush1.msra.mxu0 0.0
        %1478 = vmatprep.subr.mxu0 0.0
        %1479 = vmatpush1.msra.mxu0 0.0
        %1480 = vmatprep.subr.mxu0 0.0
        %1481 = vmatpush1.msra.mxu0 0.0
        %1482 = vmatprep.subr.mxu0 0.0
        %1483 = vmatpush1.msra.mxu0 0.0
        %1484 = vmatprep.subr.mxu0 0.0
        %1485 = vmatpush1.msra.mxu0 0.0
        %1486 = vmatprep.subr.mxu0 0.0
        %1487 = vmatpush1.msra.mxu0 0.0
        %1488 = vmatprep.subr.mxu0 0.0
        %1489 = vmatpush1.msra.mxu0 0.0
        %1490 = vmatprep.subr.mxu0 0.0
        %1491 = vmatpush1.msra.mxu0 0.0
        %1492 = vmatprep.subr.mxu0 0.0
        %1493 = vmatpush1.msra.mxu0 0.0
        %1494 = vmatprep.subr.mxu0 0.0
        %1495 = vmatpush1.msra.mxu0 0.0
        %1496 = vmatprep.subr.mxu0 0.0
        %1497 = vmatpush1.msra.mxu0 0.0
        %1498 = vmatprep.subr.mxu0 0.0
        %1499 = vmatpush1.msra.mxu0 0.0
        %1500 = vmatprep.subr.mxu0 0.0
        %1501 = vmatpush1.msra.mxu0 0.0
        %1502 = vmatprep.subr.mxu0 0.0
        %1503 = vmatpush1.msra.mxu0 0.0
        %1504 = vmatprep.subr.mxu0 0.0
        %1505 = vmatpush1.msra.mxu0 0.0
        %1506 = vmatprep.subr.mxu0 0.0
        %1507 = vmatpush1.msra.mxu0 0.0
        %1508 = vmatprep.subr.mxu0 0.0
        %1509 = vmatpush1.msra.mxu0 0.0
        %1510 = vmatprep.subr.mxu0 0.0
        %1511 = vmatpush1.msra.mxu0 0.0
        %1512 = vmatprep.subr.mxu0 0.0
        %1513 = vmatpush1.msra.mxu0 0.0
        %1514 = vmatprep.subr.mxu0 0.0
        %1515 = vmatpush1.msra.mxu0 0.0
        %1516 = vmatprep.subr.mxu0 0.0
        %1517 = vmatpush1.msra.mxu0 0.0
        %1518 = vmatprep.mubr.f32.mxu0 0.0
        %1519 = vmatmul.mubr.f32.gmra.mrb[0].mxu0 %v1149
        %v1520 = vpop.f32.mrb[0].mxu0
        %v1521 = vadd.f32 0.0, %v1520
        %v1522 = vpop.f32.mrb[0].mxu0
        %1523 = vmatprep.mubr.f32.mxu0 0.0
        %1524 = vmatmul.mubr.f32.gmra.mrb[0].mxu0 %v1152
        %v1525 = vpop.f32.mrb[0].mxu0
        %v1526 = vadd.f32 0.0, %v1525
        %v1527 = vpop.f32.mrb[0].mxu0
        %1528 = vdwg.mxu0
        %1529 = vmatprep.subr.mxu0 0.0
        %1530 = vmatpush1.msra.mxu0 %v1101
        %1531 = vmatprep.subr.mxu0 0.0
        %1532 = vmatpush1.msra.mxu0 %v1106
        %1533 = vmatprep.subr.mxu0 0.0
        %1534 = vmatpush1.msra.mxu0 0.0
        %1535 = vmatprep.subr.mxu0 0.0
        %1536 = vmatpush1.msra.mxu0 0.0
        %1537 = vmatprep.subr.mxu0 0.0
        %1538 = vmatpush1.msra.mxu0 0.0
        %1539 = vmatprep.subr.mxu0 0.0
        %1540 = vmatpush1.msra.mxu0 0.0
        %1541 = vmatprep.subr.mxu0 0.0
        %1542 = vmatpush1.msra.mxu0 0.0
        %1543 = vmatprep.subr.mxu0 0.0
        %1544 = vmatpush1.msra.mxu0 0.0
        %1545 = vmatprep.subr.mxu0 0.0
        %1546 = vmatpush1.msra.mxu0 0.0
        %1547 = vmatprep.subr.mxu0 0.0
        %1548 = vmatpush1.msra.mxu0 0.0
        %1549 = vmatprep.subr.mxu0 0.0
        %1550 = vmatpush1.msra.mxu0 0.0
        %1551 = vmatprep.subr.mxu0 0.0
        %1552 = vmatpush1.msra.mxu0 0.0
        %1553 = vmatprep.subr.mxu0 0.0
        %1554 = vmatpush1.msra.mxu0 0.0
        %1555 = vmatprep.subr.mxu0 0.0
        %1556 = vmatpush1.msra.mxu0 0.0
        %1557 = vmatprep.subr.mxu0 0.0
        %1558 = vmatpush1.msra.mxu0 0.0
        %1559 = vmatprep.subr.mxu0 0.0
        %1560 = vmatpush1.msra.mxu0 0.0
        %1561 = vmatprep.subr.mxu0 0.0
        %1562 = vmatpush1.msra.mxu0 0.0
        %1563 = vmatprep.subr.mxu0 0.0
        %1564 = vmatpush1.msra.mxu0 0.0
        %1565 = vmatprep.subr.mxu0 0.0
        %1566 = vmatpush1.msra.mxu0 0.0
        %1567 = vmatprep.subr.mxu0 0.0
        %1568 = vmatpush1.msra.mxu0 0.0
        %1569 = vmatprep.subr.mxu0 0.0
        %1570 = vmatpush1.msra.mxu0 0.0
        %1571 = vmatprep.subr.mxu0 0.0
        %1572 = vmatpush1.msra.mxu0 0.0
        %1573 = vmatprep.subr.mxu0 0.0
        %1574 = vmatpush1.msra.mxu0 0.0
        %1575 = vmatprep.subr.mxu0 0.0
        %1576 = vmatpush1.msra.mxu0 0.0
        %1577 = vmatprep.subr.mxu0 0.0
        %1578 = vmatpush1.msra.mxu0 0.0
        %1579 = vmatprep.subr.mxu0 0.0
        %1580 = vmatpush1.msra.mxu0 0.0
        %1581 = vmatprep.subr.mxu0 0.0
        %1582 = vmatpush1.msra.mxu0 0.0
        %1583 = vmatprep.subr.mxu0 0.0
        %1584 = vmatpush1.msra.mxu0 0.0
        %1585 = vmatprep.subr.mxu0 0.0
        %1586 = vmatpush1.msra.mxu0 0.0
        %1587 = vmatprep.subr.mxu0 0.0
        %1588 = vmatpush1.msra.mxu0 0.0
        %1589 = vmatprep.subr.mxu0 0.0
        %1590 = vmatpush1.msra.mxu0 0.0
        %1591 = vmatprep.subr.mxu0 0.0
        %1592 = vmatpush1.msra.mxu0 0.0
        %1593 = vmatprep.mubr.f32.mxu0 0.0
        %1594 = vmatmul.mubr.f32.gmra.mrb[0].mxu0 %v1149
        %v1595 = vpop.f32.mrb[0].mxu0
        %v1596 = vadd.f32 0.0, %v1595
        %v1597 = vpop.f32.mrb[0].mxu0
        %1598 = vmatprep.mubr.f32.mxu0 0.0
        %1599 = vmatmul.mubr.f32.gmra.mrb[0].mxu0 %v1152
        %v1600 = vpop.f32.mrb[0].mxu0
        %v1601 = vadd.f32 0.0, %v1600
        %v1602 = vpop.f32.mrb[0].mxu0
        %1603 = vdwg.mxu0
        %1604 = vmatprep.subr.mxu0 0.0
        %1605 = vmatpush1.msra.mxu0 %v1111
        %1606 = vmatprep.subr.mxu0 0.0
        %1607 = vmatpush1.msra.mxu0 %v1116
        %1608 = vmatprep.subr.mxu0 0.0
        %1609 = vmatpush1.msra.mxu0 0.0
        %1610 = vmatprep.subr.mxu0 0.0
        %1611 = vmatpush1.msra.mxu0 0.0
        %1612 = vmatprep.subr.mxu0 0.0
        %1613 = vmatpush1.msra.mxu0 0.0
        %1614 = vmatprep.subr.mxu0 0.0
        %1615 = vmatpush1.msra.mxu0 0.0
        %1616 = vmatprep.subr.mxu0 0.0
        %1617 = vmatpush1.msra.mxu0 0.0
        %1618 = vmatprep.subr.mxu0 0.0
        %1619 = vmatpush1.msra.mxu0 0.0
        %1620 = vmatprep.subr.mxu0 0.0
        %1621 = vmatpush1.msra.mxu0 0.0
        %1622 = vmatprep.subr.mxu0 0.0
        %1623 = vmatpush1.msra.mxu0 0.0
        %1624 = vmatprep.subr.mxu0 0.0
        %1625 = vmatpush1.msra.mxu0 0.0
        %1626 = vmatprep.subr.mxu0 0.0
        %1627 = vmatpush1.msra.mxu0 0.0
        %1628 = vmatprep.subr.mxu0 0.0
        %1629 = vmatpush1.msra.mxu0 0.0
        %1630 = vmatprep.subr.mxu0 0.0
        %1631 = vmatpush1.msra.mxu0 0.0
        %1632 = vmatprep.subr.mxu0 0.0
        %1633 = vmatpush1.msra.mxu0 0.0
        %1634 = vmatprep.subr.mxu0 0.0
        %1635 = vmatpush1.msra.mxu0 0.0
        %1636 = vmatprep.subr.mxu0 0.0
        %1637 = vmatpush1.msra.mxu0 0.0
        %1638 = vmatprep.subr.mxu0 0.0
        %1639 = vmatpush1.msra.mxu0 0.0
        %1640 = vmatprep.subr.mxu0 0.0
        %1641 = vmatpush1.msra.mxu0 0.0
        %1642 = vmatprep.subr.mxu0 0.0
        %1643 = vmatpush1.msra.mxu0 0.0
        %1644 = vmatprep.subr.mxu0 0.0
        %1645 = vmatpush1.msra.mxu0 0.0
        %1646 = vmatprep.subr.mxu0 0.0
        %1647 = vmatpush1.msra.mxu0 0.0
        %1648 = vmatprep.subr.mxu0 0.0
        %1649 = vmatpush1.msra.mxu0 0.0
        %1650 = vmatprep.subr.mxu0 0.0
        %1651 = vmatpush1.msra.mxu0 0.0
        %1652 = vmatprep.subr.mxu0 0.0
        %1653 = vmatpush1.msra.mxu0 0.0
        %1654 = vmatprep.subr.mxu0 0.0
        %1655 = vmatpush1.msra.mxu0 0.0
        %1656 = vmatprep.subr.mxu0 0.0
        %1657 = vmatpush1.msra.mxu0 0.0
        %1658 = vmatprep.subr.mxu0 0.0
        %1659 = vmatpush1.msra.mxu0 0.0
        %1660 = vmatprep.subr.mxu0 0.0
        %1661 = vmatpush1.msra.mxu0 0.0
        %1662 = vmatprep.subr.mxu0 0.0
        %1663 = vmatpush1.msra.mxu0 0.0
        %1664 = vmatprep.subr.mxu0 0.0
        %1665 = vmatpush1.msra.mxu0 0.0
        %1666 = vmatprep.subr.mxu0 0.0
        %1667 = vmatpush1.msra.mxu0 0.0
        %1668 = vmatprep.mubr.f32.mxu0 0.0
        %1669 = vmatmul.mubr.f32.gmra.mrb[0].mxu0 %v1149
        %v1670 = vpop.f32.mrb[0].mxu0
        %v1671 = vadd.f32 0.0, %v1670
        %v1672 = vpop.f32.mrb[0].mxu0
        %1673 = vmatprep.mubr.f32.mxu0 0.0
        %1674 = vmatmul.mubr.f32.gmra.mrb[0].mxu0 %v1152
        %v1675 = vpop.f32.mrb[0].mxu0
        %v1676 = vadd.f32 0.0, %v1675
        %v1677 = vpop.f32.mrb[0].mxu0
        %1678 = vdwg.mxu0
        %1679 = vmatprep.subr.mxu0 0.0
        %1680 = vmatpush1.msra.mxu0 %v1121
        %1681 = vmatprep.subr.mxu0 0.0
        %1682 = vmatpush1.msra.mxu0 %v1126
        %1683 = vmatprep.subr.mxu0 0.0
        %1684 = vmatpush1.msra.mxu0 0.0
        %1685 = vmatprep.subr.mxu0 0.0
        %1686 = vmatpush1.msra.mxu0 0.0
        %1687 = vmatprep.subr.mxu0 0.0
        %1688 = vmatpush1.msra.mxu0 0.0
        %1689 = vmatprep.subr.mxu0 0.0
        %1690 = vmatpush1.msra.mxu0 0.0
        %1691 = vmatprep.subr.mxu0 0.0
        %1692 = vmatpush1.msra.mxu0 0.0
        %1693 = vmatprep.subr.mxu0 0.0
        %1694 = vmatpush1.msra.mxu0 0.0
        %1695 = vmatprep.subr.mxu0 0.0
        %1696 = vmatpush1.msra.mxu0 0.0
        %1697 = vmatprep.subr.mxu0 0.0
        %1698 = vmatpush1.msra.mxu0 0.0
        %1699 = vmatprep.subr.mxu0 0.0
        %1700 = vmatpush1.msra.mxu0 0.0
        %1701 = vmatprep.subr.mxu0 0.0
        %1702 = vmatpush1.msra.mxu0 0.0
        %1703 = vmatprep.subr.mxu0 0.0
        %1704 = vmatpush1.msra.mxu0 0.0
        %1705 = vmatprep.subr.mxu0 0.0
        %1706 = vmatpush1.msra.mxu0 0.0
        %1707 = vmatprep.subr.mxu0 0.0
        %1708 = vmatpush1.msra.mxu0 0.0
        %1709 = vmatprep.subr.mxu0 0.0
        %1710 = vmatpush1.msra.mxu0 0.0
        %1711 = vmatprep.subr.mxu0 0.0
        %1712 = vmatpush1.msra.mxu0 0.0
        %1713 = vmatprep.subr.mxu0 0.0
        %1714 = vmatpush1.msra.mxu0 0.0
        %1715 = vmatprep.subr.mxu0 0.0
        %1716 = vmatpush1.msra.mxu0 0.0
        %1717 = vmatprep.subr.mxu0 0.0
        %1718 = vmatpush1.msra.mxu0 0.0
        %1719 = vmatprep.subr.mxu0 0.0
        %1720 = vmatpush1.msra.mxu0 0.0
        %1721 = vmatprep.subr.mxu0 0.0
        %1722 = vmatpush1.msra.mxu0 0.0
        %1723 = vmatprep.subr.mxu0 0.0
        %1724 = vmatpush1.msra.mxu0 0.0
        %1725 = vmatprep.subr.mxu0 0.0
        %1726 = vmatpush1.msra.mxu0 0.0
        %1727 = vmatprep.subr.mxu0 0.0
        %1728 = vmatpush1.msra.mxu0 0.0
        %1729 = vmatprep.subr.mxu0 0.0
        %1730 = vmatpush1.msra.mxu0 0.0
        %1731 = vmatprep.subr.mxu0 0.0
        %1732 = vmatpush1.msra.mxu0 0.0
        %1733 = vmatprep.subr.mxu0 0.0
        %1734 = vmatpush1.msra.mxu0 0.0
        %1735 = vmatprep.subr.mxu0 0.0
        %1736 = vmatpush1.msra.mxu0 0.0
        %1737 = vmatprep.subr.mxu0 0.0
        %1738 = vmatpush1.msra.mxu0 0.0
        %1739 = vmatprep.subr.mxu0 0.0
        %1740 = vmatpush1.msra.mxu0 0.0
        %1741 = vmatprep.subr.mxu0 0.0
        %1742 = vmatpush1.msra.mxu0 0.0
        %1743 = vmatprep.mubr.f32.mxu0 0.0
        %1744 = vmatmul.mubr.f32.gmra.mrb[0].mxu0 %v1149
        %v1745 = vpop.f32.mrb[0].mxu0
        %v1746 = vadd.f32 0.0, %v1745
        %v1747 = vpop.f32.mrb[0].mxu0
        %1748 = vmatprep.mubr.f32.mxu0 0.0
        %1749 = vmatmul.mubr.f32.gmra.mrb[0].mxu0 %v1152
        %v1750 = vpop.f32.mrb[0].mxu0
        %v1751 = vadd.f32 0.0, %v1750
        %v1752 = vpop.f32.mrb[0].mxu0
        %1753 = vdwg.mxu0
        %v1754 = vadd.f32 %v1132, %v1221
        %v1755 = vadd.f32 %v1133, %v1226
        %v1756 = vadd.f32 %v1134, %v1296
        %v1757 = vadd.f32 %v1135, %v1301
        %v1758 = vadd.f32 %v1136, %v1371
        %v1759 = vadd.f32 %v1137, %v1376
        %v1760 = vadd.f32 %v1138, %v1446
        %v1761 = vadd.f32 %v1139, %v1451
        %v1762 = vadd.f32 %v1140, %v1521
        %v1763 = vadd.f32 %v1141, %v1526
        %v1764 = vadd.f32 %v1142, %v1596
        %v1765 = vadd.f32 %v1143, %v1601
        %v1766 = vadd.f32 %v1144, %v1671
        %v1767 = vadd.f32 %v1145, %v1676
        %v1768 = vadd.f32 %v1146, %v1746
        %v1769 = vadd.f32 %v1147, %v1751
        %1770 = vst.msk [vmem:[#allocation2] sm:$0xff] %vm245, %v1754
        %1771 = vst.msk [vmem:[#allocation2 + $0x8] sm:$0xff] %vm245, %v1755
        %1772 = vst.msk [vmem:[#allocation2 + $0x10] sm:$0xff] %vm245, %v1756
        %1773 = vst.msk [vmem:[#allocation2 + $0x18] sm:$0xff] %vm245, %v1757
        %1774 = vst.msk [vmem:[#allocation2 + $0x20] sm:$0xff] %vm245, %v1758
        %1775 = vst.msk [vmem:[#allocation2 + $0x28] sm:$0xff] %vm245, %v1759
        %1776 = vst.msk [vmem:[#allocation2 + $0x30] sm:$0xff] %vm245, %v1760
        %1777 = vst.msk [vmem:[#allocation2 + $0x38] sm:$0xff] %vm245, %v1761
        %1778 = vst.msk [vmem:[#allocation2 + $0x40] sm:$0xff] %vm245, %v1762
        %1779 = vst.msk [vmem:[#allocation2 + $0x48] sm:$0xff] %vm245, %v1763
        %1780 = vst.msk [vmem:[#allocation2 + $0x50] sm:$0xff] %vm245, %v1764
        %1781 = vst.msk [vmem:[#allocation2 + $0x58] sm:$0xff] %vm245, %v1765
        %1782 = vst.msk [vmem:[#allocation2 + $0x60] sm:$0xff] %vm245, %v1766
        %1783 = vst.msk [vmem:[#allocation2 + $0x68] sm:$0xff] %vm245, %v1767
        %1784 = vst.msk [vmem:[#allocation2 + $0x70] sm:$0xff] %vm245, %v1768
        %1785 = vst.msk [vmem:[#allocation2 + $0x78] sm:$0xff] %vm245, %v1769
        %v1787 = vsel %vm245, %v1051, 0
        %v1790 = vsel %vm245, %v1056, 0
        %v1793 = vsel %vm245, %v1061, 0
        %v1796 = vsel %vm245, %v1066, 0
        %v1799 = vsel %vm245, %v1071, 0
        %v1802 = vsel %vm245, %v1076, 0
        %v1805 = vsel %vm245, %v1081, 0
        %v1808 = vsel %vm245, %v1086, 0
        %v1811 = vsel %vm245, %v1091, 0
        %v1814 = vsel %vm245, %v1096, 0
        %v1817 = vsel %vm245, %v1101, 0
        %v1820 = vsel %vm245, %v1106, 0
        %v1823 = vsel %vm245, %v1111, 0
        %v1826 = vsel %vm245, %v1116, 0
        %v1829 = vsel %vm245, %v1121, 0
        %v1832 = vsel %vm245, %v1126, 0
        %1834 = vmatprep.subr.mxu0 0.0
        %1835 = vmatpush1.msra.mxu0 %v934
        %1836 = vmatprep.subr.mxu0 0.0
        %1837 = vmatpush1.msra.mxu0 %v935
        %1838 = vmatprep.subr.mxu0 0.0
        %1839 = vmatpush1.msra.mxu0 0.0
        %1840 = vmatprep.subr.mxu0 0.0
        %1841 = vmatpush1.msra.mxu0 0.0
        %1842 = vmatprep.subr.mxu0 0.0
        %1843 = vmatpush1.msra.mxu0 0.0
        %1844 = vmatprep.subr.mxu0 0.0
        %1845 = vmatpush1.msra.mxu0 0.0
        %1846 = vmatprep.subr.mxu0 0.0
        %1847 = vmatpush1.msra.mxu0 0.0
        %1848 = vmatprep.subr.mxu0 0.0
        %1849 = vmatpush1.msra.mxu0 0.0
        %1850 = vmatprep.subr.mxu0 0.0
        %1851 = vmatpush1.msra.mxu0 0.0
        %1852 = vmatprep.subr.mxu0 0.0
        %1853 = vmatpush1.msra.mxu0 0.0
        %1854 = vmatprep.subr.mxu0 0.0
        %1855 = vmatpush1.msra.mxu0 0.0
        %1856 = vmatprep.subr.mxu0 0.0
        %1857 = vmatpush1.msra.mxu0 0.0
        %1858 = vmatprep.subr.mxu0 0.0
        %1859 = vmatpush1.msra.mxu0 0.0
        %1860 = vmatprep.subr.mxu0 0.0
        %1861 = vmatpush1.msra.mxu0 0.0
        %1862 = vmatprep.subr.mxu0 0.0
        %1863 = vmatpush1.msra.mxu0 0.0
        %1864 = vmatprep.subr.mxu0 0.0
        %1865 = vmatpush1.msra.mxu0 0.0
        %1866 = vmatprep.subr.mxu0 0.0
        %1867 = vmatpush1.msra.mxu0 0.0
        %1868 = vmatprep.subr.mxu0 0.0
        %1869 = vmatpush1.msra.mxu0 0.0
        %1870 = vmatprep.subr.mxu0 0.0
        %1871 = vmatpush1.msra.mxu0 0.0
        %1872 = vmatprep.subr.mxu0 0.0
        %1873 = vmatpush1.msra.mxu0 0.0
        %1874 = vmatprep.subr.mxu0 0.0
        %1875 = vmatpush1.msra.mxu0 0.0
        %1876 = vmatprep.subr.mxu0 0.0
        %1877 = vmatpush1.msra.mxu0 0.0
        %1878 = vmatprep.subr.mxu0 0.0
        %1879 = vmatpush1.msra.mxu0 0.0
        %1880 = vmatprep.subr.mxu0 0.0
        %1881 = vmatpush1.msra.mxu0 0.0
        %1882 = vmatprep.subr.mxu0 0.0
        %1883 = vmatpush1.msra.mxu0 0.0
        %1884 = vmatprep.subr.mxu0 0.0
        %1885 = vmatpush1.msra.mxu0 0.0
        %1886 = vmatprep.subr.mxu0 0.0
        %1887 = vmatpush1.msra.mxu0 0.0
        %1888 = vmatprep.subr.mxu0 0.0
        %1889 = vmatpush1.msra.mxu0 0.0
        %1890 = vmatprep.subr.mxu0 0.0
        %1891 = vmatpush1.msra.mxu0 0.0
        %1892 = vmatprep.subr.mxu0 0.0
        %1893 = vmatpush1.msra.mxu0 0.0
        %1894 = vmatprep.subr.mxu0 0.0
        %1895 = vmatpush1.msra.mxu0 0.0
        %1896 = vmatprep.subr.mxu0 0.0
        %1897 = vmatpush1.msra.mxu0 0.0
        %1898 = vmatprep.mubr.f32.mxu0 0.0
        %1899 = vmatmul.mubr.f32.gmra.mrb[0].mxu0 %v1787
        %v1900 = vpop.f32.mrb[0].mxu0
        %v1901 = vadd.f32 0.0, %v1900
        %v1902 = vpop.f32.mrb[0].mxu0
        %1903 = vmatprep.mubr.f32.mxu0 0.0
        %1904 = vmatmul.mubr.f32.gmra.mrb[0].mxu0 %v1790
        %v1905 = vpop.f32.mrb[0].mxu0
        %v1906 = vadd.f32 0.0, %v1905
        %v1907 = vpop.f32.mrb[0].mxu0
        %1908 = vmatprep.mubr.f32.mxu0 0.0
        %1909 = vmatmul.mubr.f32.gmra.mrb[0].mxu0 %v1793
        %v1910 = vpop.f32.mrb[0].mxu0
        %v1911 = vadd.f32 0.0, %v1910
        %v1912 = vpop.f32.mrb[0].mxu0
        %1913 = vmatprep.mubr.f32.mxu0 0.0
        %1914 = vmatmul.mubr.f32.gmra.mrb[0].mxu0 %v1796
        %v1915 = vpop.f32.mrb[0].mxu0
        %v1916 = vadd.f32 0.0, %v1915
        %v1917 = vpop.f32.mrb[0].mxu0
        %1918 = vmatprep.mubr.f32.mxu0 0.0
        %1919 = vmatmul.mubr.f32.gmra.mrb[0].mxu0 %v1799
        %v1920 = vpop.f32.mrb[0].mxu0
        %v1921 = vadd.f32 0.0, %v1920
        %v1922 = vpop.f32.mrb[0].mxu0
        %1923 = vmatprep.mubr.f32.mxu0 0.0
        %1924 = vmatmul.mubr.f32.gmra.mrb[0].mxu0 %v1802
        %v1925 = vpop.f32.mrb[0].mxu0
        %v1926 = vadd.f32 0.0, %v1925
        %v1927 = vpop.f32.mrb[0].mxu0
        %1928 = vmatprep.mubr.f32.mxu0 0.0
        %1929 = vmatmul.mubr.f32.gmra.mrb[0].mxu0 %v1805
        %v1930 = vpop.f32.mrb[0].mxu0
        %v1931 = vadd.f32 0.0, %v1930
        %v1932 = vpop.f32.mrb[0].mxu0
        %1933 = vmatprep.mubr.f32.mxu0 0.0
        %1934 = vmatmul.mubr.f32.gmra.mrb[0].mxu0 %v1808
        %v1935 = vpop.f32.mrb[0].mxu0
        %v1936 = vadd.f32 0.0, %v1935
        %v1937 = vpop.f32.mrb[0].mxu0
        %1938 = vmatprep.mubr.f32.mxu0 0.0
        %1939 = vmatmul.mubr.f32.gmra.mrb[0].mxu0 %v1811
        %v1940 = vpop.f32.mrb[0].mxu0
        %v1941 = vadd.f32 0.0, %v1940
        %v1942 = vpop.f32.mrb[0].mxu0
        %1943 = vmatprep.mubr.f32.mxu0 0.0
        %1944 = vmatmul.mubr.f32.gmra.mrb[0].mxu0 %v1814
        %v1945 = vpop.f32.mrb[0].mxu0
        %v1946 = vadd.f32 0.0, %v1945
        %v1947 = vpop.f32.mrb[0].mxu0
        %1948 = vmatprep.mubr.f32.mxu0 0.0
        %1949 = vmatmul.mubr.f32.gmra.mrb[0].mxu0 %v1817
        %v1950 = vpop.f32.mrb[0].mxu0
        %v1951 = vadd.f32 0.0, %v1950
        %v1952 = vpop.f32.mrb[0].mxu0
        %1953 = vmatprep.mubr.f32.mxu0 0.0
        %1954 = vmatmul.mubr.f32.gmra.mrb[0].mxu0 %v1820
        %v1955 = vpop.f32.mrb[0].mxu0
        %v1956 = vadd.f32 0.0, %v1955
        %v1957 = vpop.f32.mrb[0].mxu0
        %1958 = vmatprep.mubr.f32.mxu0 0.0
        %1959 = vmatmul.mubr.f32.gmra.mrb[0].mxu0 %v1823
        %v1960 = vpop.f32.mrb[0].mxu0
        %v1961 = vadd.f32 0.0, %v1960
        %v1962 = vpop.f32.mrb[0].mxu0
        %1963 = vmatprep.mubr.f32.mxu0 0.0
        %1964 = vmatmul.mubr.f32.gmra.mrb[0].mxu0 %v1826
        %v1965 = vpop.f32.mrb[0].mxu0
        %v1966 = vadd.f32 0.0, %v1965
        %v1967 = vpop.f32.mrb[0].mxu0
        %1968 = vmatprep.mubr.f32.mxu0 0.0
        %1969 = vmatmul.mubr.f32.gmra.mrb[0].mxu0 %v1829
        %v1970 = vpop.f32.mrb[0].mxu0
        %v1971 = vadd.f32 0.0, %v1970
        %v1972 = vpop.f32.mrb[0].mxu0
        %1973 = vmatprep.mubr.f32.mxu0 0.0
        %1974 = vmatmul.mubr.f32.gmra.mrb[0].mxu0 %v1832
        %v1975 = vpop.f32.mrb[0].mxu0
        %v1976 = vadd.f32 0.0, %v1975
        %v1977 = vpop.f32.mrb[0].mxu0
        %1978 = vdwg.mxu0
        %s1979 = scalar_lea.vmem [#allocation8], 32
        %v1980 = vld [vmem:[%s1979] sm:$0xff]
        %v1981 = vld [vmem:[%s1979 + $0x8] sm:$0xff]
        %v1982 = vld [vmem:[#allocation2] sm:$0xff]
        %v1983 = vld [vmem:[#allocation2 + $0x8] sm:$0xff]
        %v1984 = vld [vmem:[#allocation2 + $0x10] sm:$0xff]
        %v1985 = vld [vmem:[#allocation2 + $0x18] sm:$0xff]
        %v1986 = vld [vmem:[#allocation2 + $0x20] sm:$0xff]
        %v1987 = vld [vmem:[#allocation2 + $0x28] sm:$0xff]
        %v1988 = vld [vmem:[#allocation2 + $0x30] sm:$0xff]
        %v1989 = vld [vmem:[#allocation2 + $0x38] sm:$0xff]
        %v1990 = vld [vmem:[#allocation2 + $0x40] sm:$0xff]
        %v1991 = vld [vmem:[#allocation2 + $0x48] sm:$0xff]
        %v1992 = vld [vmem:[#allocation2 + $0x50] sm:$0xff]
        %v1993 = vld [vmem:[#allocation2 + $0x58] sm:$0xff]
        %v1994 = vld [vmem:[#allocation2 + $0x60] sm:$0xff]
        %v1995 = vld [vmem:[#allocation2 + $0x68] sm:$0xff]
        %v1996 = vld [vmem:[#allocation2 + $0x70] sm:$0xff]
        %v1997 = vld [vmem:[#allocation2 + $0x78] sm:$0xff]
        %v1999 = vsel %vm245, %v1980, 0
        %v2002 = vsel %vm245, %v1981, 0
        %2004 = vmatprep.subr.mxu0 0.0
        %2005 = vmatpush1.msra.mxu0 %v1901
        %2006 = vmatprep.subr.mxu0 0.0
        %2007 = vmatpush1.msra.mxu0 %v1906
        %2008 = vmatprep.subr.mxu0 0.0
        %2009 = vmatpush1.msra.mxu0 0.0
        %2010 = vmatprep.subr.mxu0 0.0
        %2011 = vmatpush1.msra.mxu0 0.0
        %2012 = vmatprep.subr.mxu0 0.0
        %2013 = vmatpush1.msra.mxu0 0.0
        %2014 = vmatprep.subr.mxu0 0.0
        %2015 = vmatpush1.msra.mxu0 0.0
        %2016 = vmatprep.subr.mxu0 0.0
        %2017 = vmatpush1.msra.mxu0 0.0
        %2018 = vmatprep.subr.mxu0 0.0
        %2019 = vmatpush1.msra.mxu0 0.0
        %2020 = vmatprep.subr.mxu0 0.0
        %2021 = vmatpush1.msra.mxu0 0.0
        %2022 = vmatprep.subr.mxu0 0.0
        %2023 = vmatpush1.msra.mxu0 0.0
        %2024 = vmatprep.subr.mxu0 0.0
        %2025 = vmatpush1.msra.mxu0 0.0
        %2026 = vmatprep.subr.mxu0 0.0
        %2027 = vmatpush1.msra.mxu0 0.0
        %2028 = vmatprep.subr.mxu0 0.0
        %2029 = vmatpush1.msra.mxu0 0.0
        %2030 = vmatprep.subr.mxu0 0.0
        %2031 = vmatpush1.msra.mxu0 0.0
        %2032 = vmatprep.subr.mxu0 0.0
        %2033 = vmatpush1.msra.mxu0 0.0
        %2034 = vmatprep.subr.mxu0 0.0
        %2035 = vmatpush1.msra.mxu0 0.0
        %2036 = vmatprep.subr.mxu0 0.0
        %2037 = vmatpush1.msra.mxu0 0.0
        %2038 = vmatprep.subr.mxu0 0.0
        %2039 = vmatpush1.msra.mxu0 0.0
        %2040 = vmatprep.subr.mxu0 0.0
        %2041 = vmatpush1.msra.mxu0 0.0
        %2042 = vmatprep.subr.mxu0 0.0
        %2043 = vmatpush1.msra.mxu0 0.0
        %2044 = vmatprep.subr.mxu0 0.0
        %2045 = vmatpush1.msra.mxu0 0.0
        %2046 = vmatprep.subr.mxu0 0.0
        %2047 = vmatpush1.msra.mxu0 0.0
        %2048 = vmatprep.subr.mxu0 0.0
        %2049 = vmatpush1.msra.mxu0 0.0
        %2050 = vmatprep.subr.mxu0 0.0
        %2051 = vmatpush1.msra.mxu0 0.0
        %2052 = vmatprep.subr.mxu0 0.0
        %2053 = vmatpush1.msra.mxu0 0.0
        %2054 = vmatprep.subr.mxu0 0.0
        %2055 = vmatpush1.msra.mxu0 0.0
        %2056 = vmatprep.subr.mxu0 0.0
        %2057 = vmatpush1.msra.mxu0 0.0
        %2058 = vmatprep.subr.mxu0 0.0
        %2059 = vmatpush1.msra.mxu0 0.0
        %2060 = vmatprep.subr.mxu0 0.0
        %2061 = vmatpush1.msra.mxu0 0.0
        %2062 = vmatprep.subr.mxu0 0.0
        %2063 = vmatpush1.msra.mxu0 0.0
        %2064 = vmatprep.subr.mxu0 0.0
        %2065 = vmatpush1.msra.mxu0 0.0
        %2066 = vmatprep.subr.mxu0 0.0
        %2067 = vmatpush1.msra.mxu0 0.0
        %2068 = vmatprep.mubr.f32.mxu0 0.0
        %2069 = vmatmul.mubr.f32.gmra.mrb[0].mxu0 %v1999
        %v2070 = vpop.f32.mrb[0].mxu0
        %v2071 = vadd.f32 0.0, %v2070
        %v2072 = vpop.f32.mrb[0].mxu0
        %2073 = vmatprep.mubr.f32.mxu0 0.0
        %2074 = vmatmul.mubr.f32.gmra.mrb[0].mxu0 %v2002
        %v2075 = vpop.f32.mrb[0].mxu0
        %v2076 = vadd.f32 0.0, %v2075
        %v2077 = vpop.f32.mrb[0].mxu0
        %2078 = vdwg.mxu0
        %2079 = vmatprep.subr.mxu0 0.0
        %2080 = vmatpush1.msra.mxu0 %v1911
        %2081 = vmatprep.subr.mxu0 0.0
        %2082 = vmatpush1.msra.mxu0 %v1916
        %2083 = vmatprep.subr.mxu0 0.0
        %2084 = vmatpush1.msra.mxu0 0.0
        %2085 = vmatprep.subr.mxu0 0.0
        %2086 = vmatpush1.msra.mxu0 0.0
        %2087 = vmatprep.subr.mxu0 0.0
        %2088 = vmatpush1.msra.mxu0 0.0
        %2089 = vmatprep.subr.mxu0 0.0
        %2090 = vmatpush1.msra.mxu0 0.0
        %2091 = vmatprep.subr.mxu0 0.0
        %2092 = vmatpush1.msra.mxu0 0.0
        %2093 = vmatprep.subr.mxu0 0.0
        %2094 = vmatpush1.msra.mxu0 0.0
        %2095 = vmatprep.subr.mxu0 0.0
        %2096 = vmatpush1.msra.mxu0 0.0
        %2097 = vmatprep.subr.mxu0 0.0
        %2098 = vmatpush1.msra.mxu0 0.0
        %2099 = vmatprep.subr.mxu0 0.0
        %2100 = vmatpush1.msra.mxu0 0.0
        %2101 = vmatprep.subr.mxu0 0.0
        %2102 = vmatpush1.msra.mxu0 0.0
        %2103 = vmatprep.subr.mxu0 0.0
        %2104 = vmatpush1.msra.mxu0 0.0
        %2105 = vmatprep.subr.mxu0 0.0
        %2106 = vmatpush1.msra.mxu0 0.0
        %2107 = vmatprep.subr.mxu0 0.0
        %2108 = vmatpush1.msra.mxu0 0.0
        %2109 = vmatprep.subr.mxu0 0.0
        %2110 = vmatpush1.msra.mxu0 0.0
        %2111 = vmatprep.subr.mxu0 0.0
        %2112 = vmatpush1.msra.mxu0 0.0
        %2113 = vmatprep.subr.mxu0 0.0
        %2114 = vmatpush1.msra.mxu0 0.0
        %2115 = vmatprep.subr.mxu0 0.0
        %2116 = vmatpush1.msra.mxu0 0.0
        %2117 = vmatprep.subr.mxu0 0.0
        %2118 = vmatpush1.msra.mxu0 0.0
        %2119 = vmatprep.subr.mxu0 0.0
        %2120 = vmatpush1.msra.mxu0 0.0
        %2121 = vmatprep.subr.mxu0 0.0
        %2122 = vmatpush1.msra.mxu0 0.0
        %2123 = vmatprep.subr.mxu0 0.0
        %2124 = vmatpush1.msra.mxu0 0.0
        %2125 = vmatprep.subr.mxu0 0.0
        %2126 = vmatpush1.msra.mxu0 0.0
        %2127 = vmatprep.subr.mxu0 0.0
        %2128 = vmatpush1.msra.mxu0 0.0
        %2129 = vmatprep.subr.mxu0 0.0
        %2130 = vmatpush1.msra.mxu0 0.0
        %2131 = vmatprep.subr.mxu0 0.0
        %2132 = vmatpush1.msra.mxu0 0.0
        %2133 = vmatprep.subr.mxu0 0.0
        %2134 = vmatpush1.msra.mxu0 0.0
        %2135 = vmatprep.subr.mxu0 0.0
        %2136 = vmatpush1.msra.mxu0 0.0
        %2137 = vmatprep.subr.mxu0 0.0
        %2138 = vmatpush1.msra.mxu0 0.0
        %2139 = vmatprep.subr.mxu0 0.0
        %2140 = vmatpush1.msra.mxu0 0.0
        %2141 = vmatprep.subr.mxu0 0.0
        %2142 = vmatpush1.msra.mxu0 0.0
        %2143 = vmatprep.mubr.f32.mxu0 0.0
        %2144 = vmatmul.mubr.f32.gmra.mrb[0].mxu0 %v1999
        %v2145 = vpop.f32.mrb[0].mxu0
        %v2146 = vadd.f32 0.0, %v2145
        %v2147 = vpop.f32.mrb[0].mxu0
        %2148 = vmatprep.mubr.f32.mxu0 0.0
        %2149 = vmatmul.mubr.f32.gmra.mrb[0].mxu0 %v2002
        %v2150 = vpop.f32.mrb[0].mxu0
        %v2151 = vadd.f32 0.0, %v2150
        %v2152 = vpop.f32.mrb[0].mxu0
        %2153 = vdwg.mxu0
        %2154 = vmatprep.subr.mxu0 0.0
        %2155 = vmatpush1.msra.mxu0 %v1921
        %2156 = vmatprep.subr.mxu0 0.0
        %2157 = vmatpush1.msra.mxu0 %v1926
        %2158 = vmatprep.subr.mxu0 0.0
        %2159 = vmatpush1.msra.mxu0 0.0
        %2160 = vmatprep.subr.mxu0 0.0
        %2161 = vmatpush1.msra.mxu0 0.0
        %2162 = vmatprep.subr.mxu0 0.0
        %2163 = vmatpush1.msra.mxu0 0.0
        %2164 = vmatprep.subr.mxu0 0.0
        %2165 = vmatpush1.msra.mxu0 0.0
        %2166 = vmatprep.subr.mxu0 0.0
        %2167 = vmatpush1.msra.mxu0 0.0
        %2168 = vmatprep.subr.mxu0 0.0
        %2169 = vmatpush1.msra.mxu0 0.0
        %2170 = vmatprep.subr.mxu0 0.0
        %2171 = vmatpush1.msra.mxu0 0.0
        %2172 = vmatprep.subr.mxu0 0.0
        %2173 = vmatpush1.msra.mxu0 0.0
        %2174 = vmatprep.subr.mxu0 0.0
        %2175 = vmatpush1.msra.mxu0 0.0
        %2176 = vmatprep.subr.mxu0 0.0
        %2177 = vmatpush1.msra.mxu0 0.0
        %2178 = vmatprep.subr.mxu0 0.0
        %2179 = vmatpush1.msra.mxu0 0.0
        %2180 = vmatprep.subr.mxu0 0.0
        %2181 = vmatpush1.msra.mxu0 0.0
        %2182 = vmatprep.subr.mxu0 0.0
        %2183 = vmatpush1.msra.mxu0 0.0
        %2184 = vmatprep.subr.mxu0 0.0
        %2185 = vmatpush1.msra.mxu0 0.0
        %2186 = vmatprep.subr.mxu0 0.0
        %2187 = vmatpush1.msra.mxu0 0.0
        %2188 = vmatprep.subr.mxu0 0.0
        %2189 = vmatpush1.msra.mxu0 0.0
        %2190 = vmatprep.subr.mxu0 0.0
        %2191 = vmatpush1.msra.mxu0 0.0
        %2192 = vmatprep.subr.mxu0 0.0
        %2193 = vmatpush1.msra.mxu0 0.0
        %2194 = vmatprep.subr.mxu0 0.0
        %2195 = vmatpush1.msra.mxu0 0.0
        %2196 = vmatprep.subr.mxu0 0.0
        %2197 = vmatpush1.msra.mxu0 0.0
        %2198 = vmatprep.subr.mxu0 0.0
        %2199 = vmatpush1.msra.mxu0 0.0
        %2200 = vmatprep.subr.mxu0 0.0
        %2201 = vmatpush1.msra.mxu0 0.0
        %2202 = vmatprep.subr.mxu0 0.0
        %2203 = vmatpush1.msra.mxu0 0.0
        %2204 = vmatprep.subr.mxu0 0.0
        %2205 = vmatpush1.msra.mxu0 0.0
        %2206 = vmatprep.subr.mxu0 0.0
        %2207 = vmatpush1.msra.mxu0 0.0
        %2208 = vmatprep.subr.mxu0 0.0
        %2209 = vmatpush1.msra.mxu0 0.0
        %2210 = vmatprep.subr.mxu0 0.0
        %2211 = vmatpush1.msra.mxu0 0.0
        %2212 = vmatprep.subr.mxu0 0.0
        %2213 = vmatpush1.msra.mxu0 0.0
        %2214 = vmatprep.subr.mxu0 0.0
        %2215 = vmatpush1.msra.mxu0 0.0
        %2216 = vmatprep.subr.mxu0 0.0
        %2217 = vmatpush1.msra.mxu0 0.0
        %2218 = vmatprep.mubr.f32.mxu0 0.0
        %2219 = vmatmul.mubr.f32.gmra.mrb[0].mxu0 %v1999
        %v2220 = vpop.f32.mrb[0].mxu0
        %v2221 = vadd.f32 0.0, %v2220
        %v2222 = vpop.f32.mrb[0].mxu0
        %2223 = vmatprep.mubr.f32.mxu0 0.0
        %2224 = vmatmul.mubr.f32.gmra.mrb[0].mxu0 %v2002
        %v2225 = vpop.f32.mrb[0].mxu0
        %v2226 = vadd.f32 0.0, %v2225
        %v2227 = vpop.f32.mrb[0].mxu0
        %2228 = vdwg.mxu0
        %2229 = vmatprep.subr.mxu0 0.0
        %2230 = vmatpush1.msra.mxu0 %v1931
        %2231 = vmatprep.subr.mxu0 0.0
        %2232 = vmatpush1.msra.mxu0 %v1936
        %2233 = vmatprep.subr.mxu0 0.0
        %2234 = vmatpush1.msra.mxu0 0.0
        %2235 = vmatprep.subr.mxu0 0.0
        %2236 = vmatpush1.msra.mxu0 0.0
        %2237 = vmatprep.subr.mxu0 0.0
        %2238 = vmatpush1.msra.mxu0 0.0
        %2239 = vmatprep.subr.mxu0 0.0
        %2240 = vmatpush1.msra.mxu0 0.0
        %2241 = vmatprep.subr.mxu0 0.0
        %2242 = vmatpush1.msra.mxu0 0.0
        %2243 = vmatprep.subr.mxu0 0.0
        %2244 = vmatpush1.msra.mxu0 0.0
        %2245 = vmatprep.subr.mxu0 0.0
        %2246 = vmatpush1.msra.mxu0 0.0
        %2247 = vmatprep.subr.mxu0 0.0
        %2248 = vmatpush1.msra.mxu0 0.0
        %2249 = vmatprep.subr.mxu0 0.0
        %2250 = vmatpush1.msra.mxu0 0.0
        %2251 = vmatprep.subr.mxu0 0.0
        %2252 = vmatpush1.msra.mxu0 0.0
        %2253 = vmatprep.subr.mxu0 0.0
        %2254 = vmatpush1.msra.mxu0 0.0
        %2255 = vmatprep.subr.mxu0 0.0
        %2256 = vmatpush1.msra.mxu0 0.0
        %2257 = vmatprep.subr.mxu0 0.0
        %2258 = vmatpush1.msra.mxu0 0.0
        %2259 = vmatprep.subr.mxu0 0.0
        %2260 = vmatpush1.msra.mxu0 0.0
        %2261 = vmatprep.subr.mxu0 0.0
        %2262 = vmatpush1.msra.mxu0 0.0
        %2263 = vmatprep.subr.mxu0 0.0
        %2264 = vmatpush1.msra.mxu0 0.0
        %2265 = vmatprep.subr.mxu0 0.0
        %2266 = vmatpush1.msra.mxu0 0.0
        %2267 = vmatprep.subr.mxu0 0.0
        %2268 = vmatpush1.msra.mxu0 0.0
        %2269 = vmatprep.subr.mxu0 0.0
        %2270 = vmatpush1.msra.mxu0 0.0
        %2271 = vmatprep.subr.mxu0 0.0
        %2272 = vmatpush1.msra.mxu0 0.0
        %2273 = vmatprep.subr.mxu0 0.0
        %2274 = vmatpush1.msra.mxu0 0.0
        %2275 = vmatprep.subr.mxu0 0.0
        %2276 = vmatpush1.msra.mxu0 0.0
        %2277 = vmatprep.subr.mxu0 0.0
        %2278 = vmatpush1.msra.mxu0 0.0
        %2279 = vmatprep.subr.mxu0 0.0
        %2280 = vmatpush1.msra.mxu0 0.0
        %2281 = vmatprep.subr.mxu0 0.0
        %2282 = vmatpush1.msra.mxu0 0.0
        %2283 = vmatprep.subr.mxu0 0.0
        %2284 = vmatpush1.msra.mxu0 0.0
        %2285 = vmatprep.subr.mxu0 0.0
        %2286 = vmatpush1.msra.mxu0 0.0
        %2287 = vmatprep.subr.mxu0 0.0
        %2288 = vmatpush1.msra.mxu0 0.0
        %2289 = vmatprep.subr.mxu0 0.0
        %2290 = vmatpush1.msra.mxu0 0.0
        %2291 = vmatprep.subr.mxu0 0.0
        %2292 = vmatpush1.msra.mxu0 0.0
        %2293 = vmatprep.mubr.f32.mxu0 0.0
        %2294 = vmatmul.mubr.f32.gmra.mrb[0].mxu0 %v1999
        %v2295 = vpop.f32.mrb[0].mxu0
        %v2296 = vadd.f32 0.0, %v2295
        %v2297 = vpop.f32.mrb[0].mxu0
        %2298 = vmatprep.mubr.f32.mxu0 0.0
        %2299 = vmatmul.mubr.f32.gmra.mrb[0].mxu0 %v2002
        %v2300 = vpop.f32.mrb[0].mxu0
        %v2301 = vadd.f32 0.0, %v2300
        %v2302 = vpop.f32.mrb[0].mxu0
        %2303 = vdwg.mxu0
        %2304 = vmatprep.subr.mxu0 0.0
        %2305 = vmatpush1.msra.mxu0 %v1941
        %2306 = vmatprep.subr.mxu0 0.0
        %2307 = vmatpush1.msra.mxu0 %v1946
        %2308 = vmatprep.subr.mxu0 0.0
        %2309 = vmatpush1.msra.mxu0 0.0
        %2310 = vmatprep.subr.mxu0 0.0
        %2311 = vmatpush1.msra.mxu0 0.0
        %2312 = vmatprep.subr.mxu0 0.0
        %2313 = vmatpush1.msra.mxu0 0.0
        %2314 = vmatprep.subr.mxu0 0.0
        %2315 = vmatpush1.msra.mxu0 0.0
        %2316 = vmatprep.subr.mxu0 0.0
        %2317 = vmatpush1.msra.mxu0 0.0
        %2318 = vmatprep.subr.mxu0 0.0
        %2319 = vmatpush1.msra.mxu0 0.0
        %2320 = vmatprep.subr.mxu0 0.0
        %2321 = vmatpush1.msra.mxu0 0.0
        %2322 = vmatprep.subr.mxu0 0.0
        %2323 = vmatpush1.msra.mxu0 0.0
        %2324 = vmatprep.subr.mxu0 0.0
        %2325 = vmatpush1.msra.mxu0 0.0
        %2326 = vmatprep.subr.mxu0 0.0
        %2327 = vmatpush1.msra.mxu0 0.0
        %2328 = vmatprep.subr.mxu0 0.0
        %2329 = vmatpush1.msra.mxu0 0.0
        %2330 = vmatprep.subr.mxu0 0.0
        %2331 = vmatpush1.msra.mxu0 0.0
        %2332 = vmatprep.subr.mxu0 0.0
        %2333 = vmatpush1.msra.mxu0 0.0
        %2334 = vmatprep.subr.mxu0 0.0
        %2335 = vmatpush1.msra.mxu0 0.0
        %2336 = vmatprep.subr.mxu0 0.0
        %2337 = vmatpush1.msra.mxu0 0.0
        %2338 = vmatprep.subr.mxu0 0.0
        %2339 = vmatpush1.msra.mxu0 0.0
        %2340 = vmatprep.subr.mxu0 0.0
        %2341 = vmatpush1.msra.mxu0 0.0
        %2342 = vmatprep.subr.mxu0 0.0
        %2343 = vmatpush1.msra.mxu0 0.0
        %2344 = vmatprep.subr.mxu0 0.0
        %2345 = vmatpush1.msra.mxu0 0.0
        %2346 = vmatprep.subr.mxu0 0.0
        %2347 = vmatpush1.msra.mxu0 0.0
        %2348 = vmatprep.subr.mxu0 0.0
        %2349 = vmatpush1.msra.mxu0 0.0
        %2350 = vmatprep.subr.mxu0 0.0
        %2351 = vmatpush1.msra.mxu0 0.0
        %2352 = vmatprep.subr.mxu0 0.0
        %2353 = vmatpush1.msra.mxu0 0.0
        %2354 = vmatprep.subr.mxu0 0.0
        %2355 = vmatpush1.msra.mxu0 0.0
        %2356 = vmatprep.subr.mxu0 0.0
        %2357 = vmatpush1.msra.mxu0 0.0
        %2358 = vmatprep.subr.mxu0 0.0
        %2359 = vmatpush1.msra.mxu0 0.0
        %2360 = vmatprep.subr.mxu0 0.0
        %2361 = vmatpush1.msra.mxu0 0.0
        %2362 = vmatprep.subr.mxu0 0.0
        %2363 = vmatpush1.msra.mxu0 0.0
        %2364 = vmatprep.subr.mxu0 0.0
        %2365 = vmatpush1.msra.mxu0 0.0
        %2366 = vmatprep.subr.mxu0 0.0
        %2367 = vmatpush1.msra.mxu0 0.0
        %2368 = vmatprep.mubr.f32.mxu0 0.0
        %2369 = vmatmul.mubr.f32.gmra.mrb[0].mxu0 %v1999
        %v2370 = vpop.f32.mrb[0].mxu0
        %v2371 = vadd.f32 0.0, %v2370
        %v2372 = vpop.f32.mrb[0].mxu0
        %2373 = vmatprep.mubr.f32.mxu0 0.0
        %2374 = vmatmul.mubr.f32.gmra.mrb[0].mxu0 %v2002
        %v2375 = vpop.f32.mrb[0].mxu0
        %v2376 = vadd.f32 0.0, %v2375
        %v2377 = vpop.f32.mrb[0].mxu0
        %2378 = vdwg.mxu0
        %2379 = vmatprep.subr.mxu0 0.0
        %2380 = vmatpush1.msra.mxu0 %v1951
        %2381 = vmatprep.subr.mxu0 0.0
        %2382 = vmatpush1.msra.mxu0 %v1956
        %2383 = vmatprep.subr.mxu0 0.0
        %2384 = vmatpush1.msra.mxu0 0.0
        %2385 = vmatprep.subr.mxu0 0.0
        %2386 = vmatpush1.msra.mxu0 0.0
        %2387 = vmatprep.subr.mxu0 0.0
        %2388 = vmatpush1.msra.mxu0 0.0
        %2389 = vmatprep.subr.mxu0 0.0
        %2390 = vmatpush1.msra.mxu0 0.0
        %2391 = vmatprep.subr.mxu0 0.0
        %2392 = vmatpush1.msra.mxu0 0.0
        %2393 = vmatprep.subr.mxu0 0.0
        %2394 = vmatpush1.msra.mxu0 0.0
        %2395 = vmatprep.subr.mxu0 0.0
        %2396 = vmatpush1.msra.mxu0 0.0
        %2397 = vmatprep.subr.mxu0 0.0
        %2398 = vmatpush1.msra.mxu0 0.0
        %2399 = vmatprep.subr.mxu0 0.0
        %2400 = vmatpush1.msra.mxu0 0.0
        %2401 = vmatprep.subr.mxu0 0.0
        %2402 = vmatpush1.msra.mxu0 0.0
        %2403 = vmatprep.subr.mxu0 0.0
        %2404 = vmatpush1.msra.mxu0 0.0
        %2405 = vmatprep.subr.mxu0 0.0
        %2406 = vmatpush1.msra.mxu0 0.0
        %2407 = vmatprep.subr.mxu0 0.0
        %2408 = vmatpush1.msra.mxu0 0.0
        %2409 = vmatprep.subr.mxu0 0.0
        %2410 = vmatpush1.msra.mxu0 0.0
        %2411 = vmatprep.subr.mxu0 0.0
        %2412 = vmatpush1.msra.mxu0 0.0
        %2413 = vmatprep.subr.mxu0 0.0
        %2414 = vmatpush1.msra.mxu0 0.0
        %2415 = vmatprep.subr.mxu0 0.0
        %2416 = vmatpush1.msra.mxu0 0.0
        %2417 = vmatprep.subr.mxu0 0.0
        %2418 = vmatpush1.msra.mxu0 0.0
        %2419 = vmatprep.subr.mxu0 0.0
        %2420 = vmatpush1.msra.mxu0 0.0
        %2421 = vmatprep.subr.mxu0 0.0
        %2422 = vmatpush1.msra.mxu0 0.0
        %2423 = vmatprep.subr.mxu0 0.0
        %2424 = vmatpush1.msra.mxu0 0.0
        %2425 = vmatprep.subr.mxu0 0.0
        %2426 = vmatpush1.msra.mxu0 0.0
        %2427 = vmatprep.subr.mxu0 0.0
        %2428 = vmatpush1.msra.mxu0 0.0
        %2429 = vmatprep.subr.mxu0 0.0
        %2430 = vmatpush1.msra.mxu0 0.0
        %2431 = vmatprep.subr.mxu0 0.0
        %2432 = vmatpush1.msra.mxu0 0.0
        %2433 = vmatprep.subr.mxu0 0.0
        %2434 = vmatpush1.msra.mxu0 0.0
        %2435 = vmatprep.subr.mxu0 0.0
        %2436 = vmatpush1.msra.mxu0 0.0
        %2437 = vmatprep.subr.mxu0 0.0
        %2438 = vmatpush1.msra.mxu0 0.0
        %2439 = vmatprep.subr.mxu0 0.0
        %2440 = vmatpush1.msra.mxu0 0.0
        %2441 = vmatprep.subr.mxu0 0.0
        %2442 = vmatpush1.msra.mxu0 0.0
        %2443 = vmatprep.mubr.f32.mxu0 0.0
        %2444 = vmatmul.mubr.f32.gmra.mrb[0].mxu0 %v1999
        %v2445 = vpop.f32.mrb[0].mxu0
        %v2446 = vadd.f32 0.0, %v2445
        %v2447 = vpop.f32.mrb[0].mxu0
        %2448 = vmatprep.mubr.f32.mxu0 0.0
        %2449 = vmatmul.mubr.f32.gmra.mrb[0].mxu0 %v2002
        %v2450 = vpop.f32.mrb[0].mxu0
        %v2451 = vadd.f32 0.0, %v2450
        %v2452 = vpop.f32.mrb[0].mxu0
        %2453 = vdwg.mxu0
        %2454 = vmatprep.subr.mxu0 0.0
        %2455 = vmatpush1.msra.mxu0 %v1961
        %2456 = vmatprep.subr.mxu0 0.0
        %2457 = vmatpush1.msra.mxu0 %v1966
        %2458 = vmatprep.subr.mxu0 0.0
        %2459 = vmatpush1.msra.mxu0 0.0
        %2460 = vmatprep.subr.mxu0 0.0
        %2461 = vmatpush1.msra.mxu0 0.0
        %2462 = vmatprep.subr.mxu0 0.0
        %2463 = vmatpush1.msra.mxu0 0.0
        %2464 = vmatprep.subr.mxu0 0.0
        %2465 = vmatpush1.msra.mxu0 0.0
        %2466 = vmatprep.subr.mxu0 0.0
        %2467 = vmatpush1.msra.mxu0 0.0
        %2468 = vmatprep.subr.mxu0 0.0
        %2469 = vmatpush1.msra.mxu0 0.0
        %2470 = vmatprep.subr.mxu0 0.0
        %2471 = vmatpush1.msra.mxu0 0.0
        %2472 = vmatprep.subr.mxu0 0.0
        %2473 = vmatpush1.msra.mxu0 0.0
        %2474 = vmatprep.subr.mxu0 0.0
        %2475 = vmatpush1.msra.mxu0 0.0
        %2476 = vmatprep.subr.mxu0 0.0
        %2477 = vmatpush1.msra.mxu0 0.0
        %2478 = vmatprep.subr.mxu0 0.0
        %2479 = vmatpush1.msra.mxu0 0.0
        %2480 = vmatprep.subr.mxu0 0.0
        %2481 = vmatpush1.msra.mxu0 0.0
        %2482 = vmatprep.subr.mxu0 0.0
        %2483 = vmatpush1.msra.mxu0 0.0
        %2484 = vmatprep.subr.mxu0 0.0
        %2485 = vmatpush1.msra.mxu0 0.0
        %2486 = vmatprep.subr.mxu0 0.0
        %2487 = vmatpush1.msra.mxu0 0.0
        %2488 = vmatprep.subr.mxu0 0.0
        %2489 = vmatpush1.msra.mxu0 0.0
        %2490 = vmatprep.subr.mxu0 0.0
        %2491 = vmatpush1.msra.mxu0 0.0
        %2492 = vmatprep.subr.mxu0 0.0
        %2493 = vmatpush1.msra.mxu0 0.0
        %2494 = vmatprep.subr.mxu0 0.0
        %2495 = vmatpush1.msra.mxu0 0.0
        %2496 = vmatprep.subr.mxu0 0.0
        %2497 = vmatpush1.msra.mxu0 0.0
        %2498 = vmatprep.subr.mxu0 0.0
        %2499 = vmatpush1.msra.mxu0 0.0
        %2500 = vmatprep.subr.mxu0 0.0
        %2501 = vmatpush1.msra.mxu0 0.0
        %2502 = vmatprep.subr.mxu0 0.0
        %2503 = vmatpush1.msra.mxu0 0.0
        %2504 = vmatprep.subr.mxu0 0.0
        %2505 = vmatpush1.msra.mxu0 0.0
        %2506 = vmatprep.subr.mxu0 0.0
        %2507 = vmatpush1.msra.mxu0 0.0
        %2508 = vmatprep.subr.mxu0 0.0
        %2509 = vmatpush1.msra.mxu0 0.0
        %2510 = vmatprep.subr.mxu0 0.0
        %2511 = vmatpush1.msra.mxu0 0.0
        %2512 = vmatprep.subr.mxu0 0.0
        %2513 = vmatpush1.msra.mxu0 0.0
        %2514 = vmatprep.subr.mxu0 0.0
        %2515 = vmatpush1.msra.mxu0 0.0
        %2516 = vmatprep.subr.mxu0 0.0
        %2517 = vmatpush1.msra.mxu0 0.0
        %2518 = vmatprep.mubr.f32.mxu0 0.0
        %2519 = vmatmul.mubr.f32.gmra.mrb[0].mxu0 %v1999
        %v2520 = vpop.f32.mrb[0].mxu0
        %v2521 = vadd.f32 0.0, %v2520
        %v2522 = vpop.f32.mrb[0].mxu0
        %2523 = vmatprep.mubr.f32.mxu0 0.0
        %2524 = vmatmul.mubr.f32.gmra.mrb[0].mxu0 %v2002
        %v2525 = vpop.f32.mrb[0].mxu0
        %v2526 = vadd.f32 0.0, %v2525
        %v2527 = vpop.f32.mrb[0].mxu0
        %2528 = vdwg.mxu0
        %2529 = vmatprep.subr.mxu0 0.0
        %2530 = vmatpush1.msra.mxu0 %v1971
        %2531 = vmatprep.subr.mxu0 0.0
        %2532 = vmatpush1.msra.mxu0 %v1976
        %2533 = vmatprep.subr.mxu0 0.0
        %2534 = vmatpush1.msra.mxu0 0.0
        %2535 = vmatprep.subr.mxu0 0.0
        %2536 = vmatpush1.msra.mxu0 0.0
        %2537 = vmatprep.subr.mxu0 0.0
        %2538 = vmatpush1.msra.mxu0 0.0
        %2539 = vmatprep.subr.mxu0 0.0
        %2540 = vmatpush1.msra.mxu0 0.0
        %2541 = vmatprep.subr.mxu0 0.0
        %2542 = vmatpush1.msra.mxu0 0.0
        %2543 = vmatprep.subr.mxu0 0.0
        %2544 = vmatpush1.msra.mxu0 0.0
        %2545 = vmatprep.subr.mxu0 0.0
        %2546 = vmatpush1.msra.mxu0 0.0
        %2547 = vmatprep.subr.mxu0 0.0
        %2548 = vmatpush1.msra.mxu0 0.0
        %2549 = vmatprep.subr.mxu0 0.0
        %2550 = vmatpush1.msra.mxu0 0.0
        %2551 = vmatprep.subr.mxu0 0.0
        %2552 = vmatpush1.msra.mxu0 0.0
        %2553 = vmatprep.subr.mxu0 0.0
        %2554 = vmatpush1.msra.mxu0 0.0
        %2555 = vmatprep.subr.mxu0 0.0
        %2556 = vmatpush1.msra.mxu0 0.0
        %2557 = vmatprep.subr.mxu0 0.0
        %2558 = vmatpush1.msra.mxu0 0.0
        %2559 = vmatprep.subr.mxu0 0.0
        %2560 = vmatpush1.msra.mxu0 0.0
        %2561 = vmatprep.subr.mxu0 0.0
        %2562 = vmatpush1.msra.mxu0 0.0
        %2563 = vmatprep.subr.mxu0 0.0
        %2564 = vmatpush1.msra.mxu0 0.0
        %2565 = vmatprep.subr.mxu0 0.0
        %2566 = vmatpush1.msra.mxu0 0.0
        %2567 = vmatprep.subr.mxu0 0.0
        %2568 = vmatpush1.msra.mxu0 0.0
        %2569 = vmatprep.subr.mxu0 0.0
        %2570 = vmatpush1.msra.mxu0 0.0
        %2571 = vmatprep.subr.mxu0 0.0
        %2572 = vmatpush1.msra.mxu0 0.0
        %2573 = vmatprep.subr.mxu0 0.0
        %2574 = vmatpush1.msra.mxu0 0.0
        %2575 = vmatprep.subr.mxu0 0.0
        %2576 = vmatpush1.msra.mxu0 0.0
        %2577 = vmatprep.subr.mxu0 0.0
        %2578 = vmatpush1.msra.mxu0 0.0
        %2579 = vmatprep.subr.mxu0 0.0
        %2580 = vmatpush1.msra.mxu0 0.0
        %2581 = vmatprep.subr.mxu0 0.0
        %2582 = vmatpush1.msra.mxu0 0.0
        %2583 = vmatprep.subr.mxu0 0.0
        %2584 = vmatpush1.msra.mxu0 0.0
        %2585 = vmatprep.subr.mxu0 0.0
        %2586 = vmatpush1.msra.mxu0 0.0
        %2587 = vmatprep.subr.mxu0 0.0
        %2588 = vmatpush1.msra.mxu0 0.0
        %2589 = vmatprep.subr.mxu0 0.0
        %2590 = vmatpush1.msra.mxu0 0.0
        %2591 = vmatprep.subr.mxu0 0.0
        %2592 = vmatpush1.msra.mxu0 0.0
        %2593 = vmatprep.mubr.f32.mxu0 0.0
        %2594 = vmatmul.mubr.f32.gmra.mrb[0].mxu0 %v1999
        %v2595 = vpop.f32.mrb[0].mxu0
        %v2596 = vadd.f32 0.0, %v2595
        %v2597 = vpop.f32.mrb[0].mxu0
        %2598 = vmatprep.mubr.f32.mxu0 0.0
        %2599 = vmatmul.mubr.f32.gmra.mrb[0].mxu0 %v2002
        %v2600 = vpop.f32.mrb[0].mxu0
        %v2601 = vadd.f32 0.0, %v2600
        %v2602 = vpop.f32.mrb[0].mxu0
        %2603 = vdwg.mxu0
        %v2604 = vadd.f32 %v1982, %v2071
        %v2605 = vadd.f32 %v1983, %v2076
        %v2606 = vadd.f32 %v1984, %v2146
        %v2607 = vadd.f32 %v1985, %v2151
        %v2608 = vadd.f32 %v1986, %v2221
        %v2609 = vadd.f32 %v1987, %v2226
        %v2610 = vadd.f32 %v1988, %v2296
        %v2611 = vadd.f32 %v1989, %v2301
        %v2612 = vadd.f32 %v1990, %v2371
        %v2613 = vadd.f32 %v1991, %v2376
        %v2614 = vadd.f32 %v1992, %v2446
        %v2615 = vadd.f32 %v1993, %v2451
        %v2616 = vadd.f32 %v1994, %v2521
        %v2617 = vadd.f32 %v1995, %v2526
        %v2618 = vadd.f32 %v1996, %v2596
        %v2619 = vadd.f32 %v1997, %v2601
        %2620 = vst.msk [vmem:[#allocation2] sm:$0xff] %vm245, %v2604
        %2621 = vst.msk [vmem:[#allocation2 + $0x8] sm:$0xff] %vm245, %v2605
        %2622 = vst.msk [vmem:[#allocation2 + $0x10] sm:$0xff] %vm245, %v2606
        %2623 = vst.msk [vmem:[#allocation2 + $0x18] sm:$0xff] %vm245, %v2607
        %2624 = vst.msk [vmem:[#allocation2 + $0x20] sm:$0xff] %vm245, %v2608
        %2625 = vst.msk [vmem:[#allocation2 + $0x28] sm:$0xff] %vm245, %v2609
        %2626 = vst.msk [vmem:[#allocation2 + $0x30] sm:$0xff] %vm245, %v2610
        %2627 = vst.msk [vmem:[#allocation2 + $0x38] sm:$0xff] %vm245, %v2611
        %2628 = vst.msk [vmem:[#allocation2 + $0x40] sm:$0xff] %vm245, %v2612
        %2629 = vst.msk [vmem:[#allocation2 + $0x48] sm:$0xff] %vm245, %v2613
        %2630 = vst.msk [vmem:[#allocation2 + $0x50] sm:$0xff] %vm245, %v2614
        %2631 = vst.msk [vmem:[#allocation2 + $0x58] sm:$0xff] %vm245, %v2615
        %2632 = vst.msk [vmem:[#allocation2 + $0x60] sm:$0xff] %vm245, %v2616
        %2633 = vst.msk [vmem:[#allocation2 + $0x68] sm:$0xff] %vm245, %v2617
        %2634 = vst.msk [vmem:[#allocation2 + $0x70] sm:$0xff] %vm245, %v2618
        %2635 = vst.msk [vmem:[#allocation2 + $0x78] sm:$0xff] %vm245, %v2619
        %s2636 = scalar_lea.vmem [#allocation6], 16
        %v2637 = vld [vmem:[%s2636] sm:$0xff]
        %v2638 = vld [vmem:[%s2636 + $0x8] sm:$0xff]
        %2639 = vmatprep.subr.mxu0 0.0
        %2640 = vmatpush1.msra.mxu0 %v2637
        %2641 = vmatprep.subr.mxu0 0.0
        %2642 = vmatpush1.msra.mxu0 %v2638
        %2643 = vmatprep.subr.mxu0 0.0
        %2644 = vmatpush1.msra.mxu0 0.0
        %2645 = vmatprep.subr.mxu0 0.0
        %2646 = vmatpush1.msra.mxu0 0.0
        %2647 = vmatprep.subr.mxu0 0.0
        %2648 = vmatpush1.msra.mxu0 0.0
        %2649 = vmatprep.subr.mxu0 0.0
        %2650 = vmatpush1.msra.mxu0 0.0
        %2651 = vmatprep.subr.mxu0 0.0
        %2652 = vmatpush1.msra.mxu0 0.0
        %2653 = vmatprep.subr.mxu0 0.0
        %2654 = vmatpush1.msra.mxu0 0.0
        %2655 = vmatprep.subr.mxu0 0.0
        %2656 = vmatpush1.msra.mxu0 0.0
        %2657 = vmatprep.subr.mxu0 0.0
        %2658 = vmatpush1.msra.mxu0 0.0
        %2659 = vmatprep.subr.mxu0 0.0
        %2660 = vmatpush1.msra.mxu0 0.0
        %2661 = vmatprep.subr.mxu0 0.0
        %2662 = vmatpush1.msra.mxu0 0.0
        %2663 = vmatprep.subr.mxu0 0.0
        %2664 = vmatpush1.msra.mxu0 0.0
        %2665 = vmatprep.subr.mxu0 0.0
        %2666 = vmatpush1.msra.mxu0 0.0
        %2667 = vmatprep.subr.mxu0 0.0
        %2668 = vmatpush1.msra.mxu0 0.0
        %2669 = vmatprep.subr.mxu0 0.0
        %2670 = vmatpush1.msra.mxu0 0.0
        %2671 = vmatprep.subr.mxu0 0.0
        %2672 = vmatpush1.msra.mxu0 0.0
        %2673 = vmatprep.subr.mxu0 0.0
        %2674 = vmatpush1.msra.mxu0 0.0
        %2675 = vmatprep.subr.mxu0 0.0
        %2676 = vmatpush1.msra.mxu0 0.0
        %2677 = vmatprep.subr.mxu0 0.0
        %2678 = vmatpush1.msra.mxu0 0.0
        %2679 = vmatprep.subr.mxu0 0.0
        %2680 = vmatpush1.msra.mxu0 0.0
        %2681 = vmatprep.subr.mxu0 0.0
        %2682 = vmatpush1.msra.mxu0 0.0
        %2683 = vmatprep.subr.mxu0 0.0
        %2684 = vmatpush1.msra.mxu0 0.0
        %2685 = vmatprep.subr.mxu0 0.0
        %2686 = vmatpush1.msra.mxu0 0.0
        %2687 = vmatprep.subr.mxu0 0.0
        %2688 = vmatpush1.msra.mxu0 0.0
        %2689 = vmatprep.subr.mxu0 0.0
        %2690 = vmatpush1.msra.mxu0 0.0
        %2691 = vmatprep.subr.mxu0 0.0
        %2692 = vmatpush1.msra.mxu0 0.0
        %2693 = vmatprep.subr.mxu0 0.0
        %2694 = vmatpush1.msra.mxu0 0.0
        %2695 = vmatprep.subr.mxu0 0.0
        %2696 = vmatpush1.msra.mxu0 0.0
        %2697 = vmatprep.subr.mxu0 0.0
        %2698 = vmatpush1.msra.mxu0 0.0
        %2699 = vmatprep.subr.mxu0 0.0
        %2700 = vmatpush1.msra.mxu0 0.0
        %2701 = vmatprep.subr.mxu0 0.0
        %2702 = vmatpush1.msra.mxu0 0.0
        %2703 = vmatprep.mubr.f32.mxu0 0.0
        %2704 = vmatmul.mubr.f32.gmra.mrb[0].mxu0 %v937
        %v2705 = vpop.f32.mrb[0].mxu0
        %v2706 = vadd.f32 0.0, %v2705
        %v2707 = vpop.f32.mrb[0].mxu0
        %2708 = vmatprep.mubr.f32.mxu0 0.0
        %2709 = vmatmul.mubr.f32.gmra.mrb[0].mxu0 %v940
        %v2710 = vpop.f32.mrb[0].mxu0
        %v2711 = vadd.f32 0.0, %v2710
        %v2712 = vpop.f32.mrb[0].mxu0
        %2713 = vmatprep.mubr.f32.mxu0 0.0
        %2714 = vmatmul.mubr.f32.gmra.mrb[0].mxu0 %v943
        %v2715 = vpop.f32.mrb[0].mxu0
        %v2716 = vadd.f32 0.0, %v2715
        %v2717 = vpop.f32.mrb[0].mxu0
        %2718 = vmatprep.mubr.f32.mxu0 0.0
        %2719 = vmatmul.mubr.f32.gmra.mrb[0].mxu0 %v946
        %v2720 = vpop.f32.mrb[0].mxu0
        %v2721 = vadd.f32 0.0, %v2720
        %v2722 = vpop.f32.mrb[0].mxu0
        %2723 = vmatprep.mubr.f32.mxu0 0.0
        %2724 = vmatmul.mubr.f32.gmra.mrb[0].mxu0 %v949
        %v2725 = vpop.f32.mrb[0].mxu0
        %v2726 = vadd.f32 0.0, %v2725
        %v2727 = vpop.f32.mrb[0].mxu0
        %2728 = vmatprep.mubr.f32.mxu0 0.0
        %2729 = vmatmul.mubr.f32.gmra.mrb[0].mxu0 %v952
        %v2730 = vpop.f32.mrb[0].mxu0
        %v2731 = vadd.f32 0.0, %v2730
        %v2732 = vpop.f32.mrb[0].mxu0
        %2733 = vmatprep.mubr.f32.mxu0 0.0
        %2734 = vmatmul.mubr.f32.gmra.mrb[0].mxu0 %v955
        %v2735 = vpop.f32.mrb[0].mxu0
        %v2736 = vadd.f32 0.0, %v2735
        %v2737 = vpop.f32.mrb[0].mxu0
        %2738 = vmatprep.mubr.f32.mxu0 0.0
        %2739 = vmatmul.mubr.f32.gmra.mrb[0].mxu0 %v958
        %v2740 = vpop.f32.mrb[0].mxu0
        %v2741 = vadd.f32 0.0, %v2740
        %v2742 = vpop.f32.mrb[0].mxu0
        %2743 = vmatprep.mubr.f32.mxu0 0.0
        %2744 = vmatmul.mubr.f32.gmra.mrb[0].mxu0 %v961
        %v2745 = vpop.f32.mrb[0].mxu0
        %v2746 = vadd.f32 0.0, %v2745
        %v2747 = vpop.f32.mrb[0].mxu0
        %2748 = vmatprep.mubr.f32.mxu0 0.0
        %2749 = vmatmul.mubr.f32.gmra.mrb[0].mxu0 %v964
        %v2750 = vpop.f32.mrb[0].mxu0
        %v2751 = vadd.f32 0.0, %v2750
        %v2752 = vpop.f32.mrb[0].mxu0
        %2753 = vmatprep.mubr.f32.mxu0 0.0
        %2754 = vmatmul.mubr.f32.gmra.mrb[0].mxu0 %v967
        %v2755 = vpop.f32.mrb[0].mxu0
        %v2756 = vadd.f32 0.0, %v2755
        %v2757 = vpop.f32.mrb[0].mxu0
        %2758 = vmatprep.mubr.f32.mxu0 0.0
        %2759 = vmatmul.mubr.f32.gmra.mrb[0].mxu0 %v970
        %v2760 = vpop.f32.mrb[0].mxu0
        %v2761 = vadd.f32 0.0, %v2760
        %v2762 = vpop.f32.mrb[0].mxu0
        %2763 = vmatprep.mubr.f32.mxu0 0.0
        %2764 = vmatmul.mubr.f32.gmra.mrb[0].mxu0 %v973
        %v2765 = vpop.f32.mrb[0].mxu0
        %v2766 = vadd.f32 0.0, %v2765
        %v2767 = vpop.f32.mrb[0].mxu0
        %2768 = vmatprep.mubr.f32.mxu0 0.0
        %2769 = vmatmul.mubr.f32.gmra.mrb[0].mxu0 %v976
        %v2770 = vpop.f32.mrb[0].mxu0
        %v2771 = vadd.f32 0.0, %v2770
        %v2772 = vpop.f32.mrb[0].mxu0
        %2773 = vmatprep.mubr.f32.mxu0 0.0
        %2774 = vmatmul.mubr.f32.gmra.mrb[0].mxu0 %v979
        %v2775 = vpop.f32.mrb[0].mxu0
        %v2776 = vadd.f32 0.0, %v2775
        %v2777 = vpop.f32.mrb[0].mxu0
        %2778 = vmatprep.mubr.f32.mxu0 0.0
        %2779 = vmatmul.mubr.f32.gmra.mrb[0].mxu0 %v982
        %v2780 = vpop.f32.mrb[0].mxu0
        %v2781 = vadd.f32 0.0, %v2780
        %v2782 = vpop.f32.mrb[0].mxu0
        %2783 = vdwg.mxu0
        %s2784 = scalar_lea.vmem [#allocation8], 48
        %v2785 = vld [vmem:[%s2784] sm:$0xff]
        %v2786 = vld [vmem:[%s2784 + $0x8] sm:$0xff]
        %v2787 = vld [vmem:[#allocation2] sm:$0xff]
        %v2788 = vld [vmem:[#allocation2 + $0x8] sm:$0xff]
        %v2789 = vld [vmem:[#allocation2 + $0x10] sm:$0xff]
        %v2790 = vld [vmem:[#allocation2 + $0x18] sm:$0xff]
        %v2791 = vld [vmem:[#allocation2 + $0x20] sm:$0xff]
        %v2792 = vld [vmem:[#allocation2 + $0x28] sm:$0xff]
        %v2793 = vld [vmem:[#allocation2 + $0x30] sm:$0xff]
        %v2794 = vld [vmem:[#allocation2 + $0x38] sm:$0xff]
        %v2795 = vld [vmem:[#allocation2 + $0x40] sm:$0xff]
        %v2796 = vld [vmem:[#allocation2 + $0x48] sm:$0xff]
        %v2797 = vld [vmem:[#allocation2 + $0x50] sm:$0xff]
        %v2798 = vld [vmem:[#allocation2 + $0x58] sm:$0xff]
        %v2799 = vld [vmem:[#allocation2 + $0x60] sm:$0xff]
        %v2800 = vld [vmem:[#allocation2 + $0x68] sm:$0xff]
        %v2801 = vld [vmem:[#allocation2 + $0x70] sm:$0xff]
        %v2802 = vld [vmem:[#allocation2 + $0x78] sm:$0xff]
        %v2804 = vsel %vm245, %v2785, 0
        %v2807 = vsel %vm245, %v2786, 0
        %2809 = vmatprep.subr.mxu0 0.0
        %2810 = vmatpush1.msra.mxu0 %v2706
        %2811 = vmatprep.subr.mxu0 0.0
        %2812 = vmatpush1.msra.mxu0 %v2711
        %2813 = vmatprep.subr.mxu0 0.0
        %2814 = vmatpush1.msra.mxu0 0.0
        %2815 = vmatprep.subr.mxu0 0.0
        %2816 = vmatpush1.msra.mxu0 0.0
        %2817 = vmatprep.subr.mxu0 0.0
        %2818 = vmatpush1.msra.mxu0 0.0
        %2819 = vmatprep.subr.mxu0 0.0
        %2820 = vmatpush1.msra.mxu0 0.0
        %2821 = vmatprep.subr.mxu0 0.0
        %2822 = vmatpush1.msra.mxu0 0.0
        %2823 = vmatprep.subr.mxu0 0.0
        %2824 = vmatpush1.msra.mxu0 0.0
        %2825 = vmatprep.subr.mxu0 0.0
        %2826 = vmatpush1.msra.mxu0 0.0
        %2827 = vmatprep.subr.mxu0 0.0
        %2828 = vmatpush1.msra.mxu0 0.0
        %2829 = vmatprep.subr.mxu0 0.0
        %2830 = vmatpush1.msra.mxu0 0.0
        %2831 = vmatprep.subr.mxu0 0.0
        %2832 = vmatpush1.msra.mxu0 0.0
        %2833 = vmatprep.subr.mxu0 0.0
        %2834 = vmatpush1.msra.mxu0 0.0
        %2835 = vmatprep.subr.mxu0 0.0
        %2836 = vmatpush1.msra.mxu0 0.0
        %2837 = vmatprep.subr.mxu0 0.0
        %2838 = vmatpush1.msra.mxu0 0.0
        %2839 = vmatprep.subr.mxu0 0.0
        %2840 = vmatpush1.msra.mxu0 0.0
        %2841 = vmatprep.subr.mxu0 0.0
        %2842 = vmatpush1.msra.mxu0 0.0
        %2843 = vmatprep.subr.mxu0 0.0
        %2844 = vmatpush1.msra.mxu0 0.0
        %2845 = vmatprep.subr.mxu0 0.0
        %2846 = vmatpush1.msra.mxu0 0.0
        %2847 = vmatprep.subr.mxu0 0.0
        %2848 = vmatpush1.msra.mxu0 0.0
        %2849 = vmatprep.subr.mxu0 0.0
        %2850 = vmatpush1.msra.mxu0 0.0
        %2851 = vmatprep.subr.mxu0 0.0
        %2852 = vmatpush1.msra.mxu0 0.0
        %2853 = vmatprep.subr.mxu0 0.0
        %2854 = vmatpush1.msra.mxu0 0.0
        %2855 = vmatprep.subr.mxu0 0.0
        %2856 = vmatpush1.msra.mxu0 0.0
        %2857 = vmatprep.subr.mxu0 0.0
        %2858 = vmatpush1.msra.mxu0 0.0
        %2859 = vmatprep.subr.mxu0 0.0
        %2860 = vmatpush1.msra.mxu0 0.0
        %2861 = vmatprep.subr.mxu0 0.0
        %2862 = vmatpush1.msra.mxu0 0.0
        %2863 = vmatprep.subr.mxu0 0.0
        %2864 = vmatpush1.msra.mxu0 0.0
        %2865 = vmatprep.subr.mxu0 0.0
        %2866 = vmatpush1.msra.mxu0 0.0
        %2867 = vmatprep.subr.mxu0 0.0
        %2868 = vmatpush1.msra.mxu0 0.0
        %2869 = vmatprep.subr.mxu0 0.0
        %2870 = vmatpush1.msra.mxu0 0.0
        %2871 = vmatprep.subr.mxu0 0.0
        %2872 = vmatpush1.msra.mxu0 0.0
        %2873 = vmatprep.mubr.f32.mxu0 0.0
        %2874 = vmatmul.mubr.f32.gmra.mrb[0].mxu0 %v2804
        %v2875 = vpop.f32.mrb[0].mxu0
        %v2876 = vadd.f32 0.0, %v2875
        %v2877 = vpop.f32.mrb[0].mxu0
        %2878 = vmatprep.mubr.f32.mxu0 0.0
        %2879 = vmatmul.mubr.f32.gmra.mrb[0].mxu0 %v2807
        %v2880 = vpop.f32.mrb[0].mxu0
        %v2881 = vadd.f32 0.0, %v2880
        %v2882 = vpop.f32.mrb[0].mxu0
        %2883 = vdwg.mxu0
        %2884 = vmatprep.subr.mxu0 0.0
        %2885 = vmatpush1.msra.mxu0 %v2716
        %2886 = vmatprep.subr.mxu0 0.0
        %2887 = vmatpush1.msra.mxu0 %v2721
        %2888 = vmatprep.subr.mxu0 0.0
        %2889 = vmatpush1.msra.mxu0 0.0
        %2890 = vmatprep.subr.mxu0 0.0
        %2891 = vmatpush1.msra.mxu0 0.0
        %2892 = vmatprep.subr.mxu0 0.0
        %2893 = vmatpush1.msra.mxu0 0.0
        %2894 = vmatprep.subr.mxu0 0.0
        %2895 = vmatpush1.msra.mxu0 0.0
        %2896 = vmatprep.subr.mxu0 0.0
        %2897 = vmatpush1.msra.mxu0 0.0
        %2898 = vmatprep.subr.mxu0 0.0
        %2899 = vmatpush1.msra.mxu0 0.0
        %2900 = vmatprep.subr.mxu0 0.0
        %2901 = vmatpush1.msra.mxu0 0.0
        %2902 = vmatprep.subr.mxu0 0.0
        %2903 = vmatpush1.msra.mxu0 0.0
        %2904 = vmatprep.subr.mxu0 0.0
        %2905 = vmatpush1.msra.mxu0 0.0
        %2906 = vmatprep.subr.mxu0 0.0
        %2907 = vmatpush1.msra.mxu0 0.0
        %2908 = vmatprep.subr.mxu0 0.0
        %2909 = vmatpush1.msra.mxu0 0.0
        %2910 = vmatprep.subr.mxu0 0.0
        %2911 = vmatpush1.msra.mxu0 0.0
        %2912 = vmatprep.subr.mxu0 0.0
        %2913 = vmatpush1.msra.mxu0 0.0
        %2914 = vmatprep.subr.mxu0 0.0
        %2915 = vmatpush1.msra.mxu0 0.0
        %2916 = vmatprep.subr.mxu0 0.0
        %2917 = vmatpush1.msra.mxu0 0.0
        %2918 = vmatprep.subr.mxu0 0.0
        %2919 = vmatpush1.msra.mxu0 0.0
        %2920 = vmatprep.subr.mxu0 0.0
        %2921 = vmatpush1.msra.mxu0 0.0
        %2922 = vmatprep.subr.mxu0 0.0
        %2923 = vmatpush1.msra.mxu0 0.0
        %2924 = vmatprep.subr.mxu0 0.0
        %2925 = vmatpush1.msra.mxu0 0.0
        %2926 = vmatprep.subr.mxu0 0.0
        %2927 = vmatpush1.msra.mxu0 0.0
        %2928 = vmatprep.subr.mxu0 0.0
        %2929 = vmatpush1.msra.mxu0 0.0
        %2930 = vmatprep.subr.mxu0 0.0
        %2931 = vmatpush1.msra.mxu0 0.0
        %2932 = vmatprep.subr.mxu0 0.0
        %2933 = vmatpush1.msra.mxu0 0.0
        %2934 = vmatprep.subr.mxu0 0.0
        %2935 = vmatpush1.msra.mxu0 0.0
        %2936 = vmatprep.subr.mxu0 0.0
        %2937 = vmatpush1.msra.mxu0 0.0
        %2938 = vmatprep.subr.mxu0 0.0
        %2939 = vmatpush1.msra.mxu0 0.0
        %2940 = vmatprep.subr.mxu0 0.0
        %2941 = vmatpush1.msra.mxu0 0.0
        %2942 = vmatprep.subr.mxu0 0.0
        %2943 = vmatpush1.msra.mxu0 0.0
        %2944 = vmatprep.subr.mxu0 0.0
        %2945 = vmatpush1.msra.mxu0 0.0
        %2946 = vmatprep.subr.mxu0 0.0
        %2947 = vmatpush1.msra.mxu0 0.0
        %2948 = vmatprep.mubr.f32.mxu0 0.0
        %2949 = vmatmul.mubr.f32.gmra.mrb[0].mxu0 %v2804
        %v2950 = vpop.f32.mrb[0].mxu0
        %v2951 = vadd.f32 0.0, %v2950
        %v2952 = vpop.f32.mrb[0].mxu0
        %2953 = vmatprep.mubr.f32.mxu0 0.0
        %2954 = vmatmul.mubr.f32.gmra.mrb[0].mxu0 %v2807
        %v2955 = vpop.f32.mrb[0].mxu0
        %v2956 = vadd.f32 0.0, %v2955
        %v2957 = vpop.f32.mrb[0].mxu0
        %2958 = vdwg.mxu0
        %2959 = vmatprep.subr.mxu0 0.0
        %2960 = vmatpush1.msra.mxu0 %v2726
        %2961 = vmatprep.subr.mxu0 0.0
        %2962 = vmatpush1.msra.mxu0 %v2731
        %2963 = vmatprep.subr.mxu0 0.0
        %2964 = vmatpush1.msra.mxu0 0.0
        %2965 = vmatprep.subr.mxu0 0.0
        %2966 = vmatpush1.msra.mxu0 0.0
        %2967 = vmatprep.subr.mxu0 0.0
        %2968 = vmatpush1.msra.mxu0 0.0
        %2969 = vmatprep.subr.mxu0 0.0
        %2970 = vmatpush1.msra.mxu0 0.0
        %2971 = vmatprep.subr.mxu0 0.0
        %2972 = vmatpush1.msra.mxu0 0.0
        %2973 = vmatprep.subr.mxu0 0.0
        %2974 = vmatpush1.msra.mxu0 0.0
        %2975 = vmatprep.subr.mxu0 0.0
        %2976 = vmatpush1.msra.mxu0 0.0
        %2977 = vmatprep.subr.mxu0 0.0
        %2978 = vmatpush1.msra.mxu0 0.0
        %2979 = vmatprep.subr.mxu0 0.0
        %2980 = vmatpush1.msra.mxu0 0.0
        %2981 = vmatprep.subr.mxu0 0.0
        %2982 = vmatpush1.msra.mxu0 0.0
        %2983 = vmatprep.subr.mxu0 0.0
        %2984 = vmatpush1.msra.mxu0 0.0
        %2985 = vmatprep.subr.mxu0 0.0
        %2986 = vmatpush1.msra.mxu0 0.0
        %2987 = vmatprep.subr.mxu0 0.0
        %2988 = vmatpush1.msra.mxu0 0.0
        %2989 = vmatprep.subr.mxu0 0.0
        %2990 = vmatpush1.msra.mxu0 0.0
        %2991 = vmatprep.subr.mxu0 0.0
        %2992 = vmatpush1.msra.mxu0 0.0
        %2993 = vmatprep.subr.mxu0 0.0
        %2994 = vmatpush1.msra.mxu0 0.0
        %2995 = vmatprep.subr.mxu0 0.0
        %2996 = vmatpush1.msra.mxu0 0.0
        %2997 = vmatprep.subr.mxu0 0.0
        %2998 = vmatpush1.msra.mxu0 0.0
        %2999 = vmatprep.subr.mxu0 0.0
        %3000 = vmatpush1.msra.mxu0 0.0
        %3001 = vmatprep.subr.mxu0 0.0
        %3002 = vmatpush1.msra.mxu0 0.0
        %3003 = vmatprep.subr.mxu0 0.0
        %3004 = vmatpush1.msra.mxu0 0.0
        %3005 = vmatprep.subr.mxu0 0.0
        %3006 = vmatpush1.msra.mxu0 0.0
        %3007 = vmatprep.subr.mxu0 0.0
        %3008 = vmatpush1.msra.mxu0 0.0
        %3009 = vmatprep.subr.mxu0 0.0
        %3010 = vmatpush1.msra.mxu0 0.0
        %3011 = vmatprep.subr.mxu0 0.0
        %3012 = vmatpush1.msra.mxu0 0.0
        %3013 = vmatprep.subr.mxu0 0.0
        %3014 = vmatpush1.msra.mxu0 0.0
        %3015 = vmatprep.subr.mxu0 0.0
        %3016 = vmatpush1.msra.mxu0 0.0
        %3017 = vmatprep.subr.mxu0 0.0
        %3018 = vmatpush1.msra.mxu0 0.0
        %3019 = vmatprep.subr.mxu0 0.0
        %3020 = vmatpush1.msra.mxu0 0.0
        %3021 = vmatprep.subr.mxu0 0.0
        %3022 = vmatpush1.msra.mxu0 0.0
        %3023 = vmatprep.mubr.f32.mxu0 0.0
        %3024 = vmatmul.mubr.f32.gmra.mrb[0].mxu0 %v2804
        %v3025 = vpop.f32.mrb[0].mxu0
        %v3026 = vadd.f32 0.0, %v3025
        %v3027 = vpop.f32.mrb[0].mxu0
        %3028 = vmatprep.mubr.f32.mxu0 0.0
        %3029 = vmatmul.mubr.f32.gmra.mrb[0].mxu0 %v2807
        %v3030 = vpop.f32.mrb[0].mxu0
        %v3031 = vadd.f32 0.0, %v3030
        %v3032 = vpop.f32.mrb[0].mxu0
        %3033 = vdwg.mxu0
        %3034 = vmatprep.subr.mxu0 0.0
        %3035 = vmatpush1.msra.mxu0 %v2736
        %3036 = vmatprep.subr.mxu0 0.0
        %3037 = vmatpush1.msra.mxu0 %v2741
        %3038 = vmatprep.subr.mxu0 0.0
        %3039 = vmatpush1.msra.mxu0 0.0
        %3040 = vmatprep.subr.mxu0 0.0
        %3041 = vmatpush1.msra.mxu0 0.0
        %3042 = vmatprep.subr.mxu0 0.0
        %3043 = vmatpush1.msra.mxu0 0.0
        %3044 = vmatprep.subr.mxu0 0.0
        %3045 = vmatpush1.msra.mxu0 0.0
        %3046 = vmatprep.subr.mxu0 0.0
        %3047 = vmatpush1.msra.mxu0 0.0
        %3048 = vmatprep.subr.mxu0 0.0
        %3049 = vmatpush1.msra.mxu0 0.0
        %3050 = vmatprep.subr.mxu0 0.0
        %3051 = vmatpush1.msra.mxu0 0.0
        %3052 = vmatprep.subr.mxu0 0.0
        %3053 = vmatpush1.msra.mxu0 0.0
        %3054 = vmatprep.subr.mxu0 0.0
        %3055 = vmatpush1.msra.mxu0 0.0
        %3056 = vmatprep.subr.mxu0 0.0
        %3057 = vmatpush1.msra.mxu0 0.0
        %3058 = vmatprep.subr.mxu0 0.0
        %3059 = vmatpush1.msra.mxu0 0.0
        %3060 = vmatprep.subr.mxu0 0.0
        %3061 = vmatpush1.msra.mxu0 0.0
        %3062 = vmatprep.subr.mxu0 0.0
        %3063 = vmatpush1.msra.mxu0 0.0
        %3064 = vmatprep.subr.mxu0 0.0
        %3065 = vmatpush1.msra.mxu0 0.0
        %3066 = vmatprep.subr.mxu0 0.0
        %3067 = vmatpush1.msra.mxu0 0.0
        %3068 = vmatprep.subr.mxu0 0.0
        %3069 = vmatpush1.msra.mxu0 0.0
        %3070 = vmatprep.subr.mxu0 0.0
        %3071 = vmatpush1.msra.mxu0 0.0
        %3072 = vmatprep.subr.mxu0 0.0
        %3073 = vmatpush1.msra.mxu0 0.0
        %3074 = vmatprep.subr.mxu0 0.0
        %3075 = vmatpush1.msra.mxu0 0.0
        %3076 = vmatprep.subr.mxu0 0.0
        %3077 = vmatpush1.msra.mxu0 0.0
        %3078 = vmatprep.subr.mxu0 0.0
        %3079 = vmatpush1.msra.mxu0 0.0
        %3080 = vmatprep.subr.mxu0 0.0
        %3081 = vmatpush1.msra.mxu0 0.0
        %3082 = vmatprep.subr.mxu0 0.0
        %3083 = vmatpush1.msra.mxu0 0.0
        %3084 = vmatprep.subr.mxu0 0.0
        %3085 = vmatpush1.msra.mxu0 0.0
        %3086 = vmatprep.subr.mxu0 0.0
        %3087 = vmatpush1.msra.mxu0 0.0
        %3088 = vmatprep.subr.mxu0 0.0
        %3089 = vmatpush1.msra.mxu0 0.0
        %3090 = vmatprep.subr.mxu0 0.0
        %3091 = vmatpush1.msra.mxu0 0.0
        %3092 = vmatprep.subr.mxu0 0.0
        %3093 = vmatpush1.msra.mxu0 0.0
        %3094 = vmatprep.subr.mxu0 0.0
        %3095 = vmatpush1.msra.mxu0 0.0
        %3096 = vmatprep.subr.mxu0 0.0
        %3097 = vmatpush1.msra.mxu0 0.0
        %3098 = vmatprep.mubr.f32.mxu0 0.0
        %3099 = vmatmul.mubr.f32.gmra.mrb[0].mxu0 %v2804
        %v3100 = vpop.f32.mrb[0].mxu0
        %v3101 = vadd.f32 0.0, %v3100
        %v3102 = vpop.f32.mrb[0].mxu0
        %3103 = vmatprep.mubr.f32.mxu0 0.0
        %3104 = vmatmul.mubr.f32.gmra.mrb[0].mxu0 %v2807
        %v3105 = vpop.f32.mrb[0].mxu0
        %v3106 = vadd.f32 0.0, %v3105
        %v3107 = vpop.f32.mrb[0].mxu0
        %3108 = vdwg.mxu0
        %3109 = vmatprep.subr.mxu0 0.0
        %3110 = vmatpush1.msra.mxu0 %v2746
        %3111 = vmatprep.subr.mxu0 0.0
        %3112 = vmatpush1.msra.mxu0 %v2751
        %3113 = vmatprep.subr.mxu0 0.0
        %3114 = vmatpush1.msra.mxu0 0.0
        %3115 = vmatprep.subr.mxu0 0.0
        %3116 = vmatpush1.msra.mxu0 0.0
        %3117 = vmatprep.subr.mxu0 0.0
        %3118 = vmatpush1.msra.mxu0 0.0
        %3119 = vmatprep.subr.mxu0 0.0
        %3120 = vmatpush1.msra.mxu0 0.0
        %3121 = vmatprep.subr.mxu0 0.0
        %3122 = vmatpush1.msra.mxu0 0.0
        %3123 = vmatprep.subr.mxu0 0.0
        %3124 = vmatpush1.msra.mxu0 0.0
        %3125 = vmatprep.subr.mxu0 0.0
        %3126 = vmatpush1.msra.mxu0 0.0
        %3127 = vmatprep.subr.mxu0 0.0
        %3128 = vmatpush1.msra.mxu0 0.0
        %3129 = vmatprep.subr.mxu0 0.0
        %3130 = vmatpush1.msra.mxu0 0.0
        %3131 = vmatprep.subr.mxu0 0.0
        %3132 = vmatpush1.msra.mxu0 0.0
        %3133 = vmatprep.subr.mxu0 0.0
        %3134 = vmatpush1.msra.mxu0 0.0
        %3135 = vmatprep.subr.mxu0 0.0
        %3136 = vmatpush1.msra.mxu0 0.0
        %3137 = vmatprep.subr.mxu0 0.0
        %3138 = vmatpush1.msra.mxu0 0.0
        %3139 = vmatprep.subr.mxu0 0.0
        %3140 = vmatpush1.msra.mxu0 0.0
        %3141 = vmatprep.subr.mxu0 0.0
        %3142 = vmatpush1.msra.mxu0 0.0
        %3143 = vmatprep.subr.mxu0 0.0
        %3144 = vmatpush1.msra.mxu0 0.0
        %3145 = vmatprep.subr.mxu0 0.0
        %3146 = vmatpush1.msra.mxu0 0.0
        %3147 = vmatprep.subr.mxu0 0.0
        %3148 = vmatpush1.msra.mxu0 0.0
        %3149 = vmatprep.subr.mxu0 0.0
        %3150 = vmatpush1.msra.mxu0 0.0
        %3151 = vmatprep.subr.mxu0 0.0
        %3152 = vmatpush1.msra.mxu0 0.0
        %3153 = vmatprep.subr.mxu0 0.0
        %3154 = vmatpush1.msra.mxu0 0.0
        %3155 = vmatprep.subr.mxu0 0.0
        %3156 = vmatpush1.msra.mxu0 0.0
        %3157 = vmatprep.subr.mxu0 0.0
        %3158 = vmatpush1.msra.mxu0 0.0
        %3159 = vmatprep.subr.mxu0 0.0
        %3160 = vmatpush1.msra.mxu0 0.0
        %3161 = vmatprep.subr.mxu0 0.0
        %3162 = vmatpush1.msra.mxu0 0.0
        %3163 = vmatprep.subr.mxu0 0.0
        %3164 = vmatpush1.msra.mxu0 0.0
        %3165 = vmatprep.subr.mxu0 0.0
        %3166 = vmatpush1.msra.mxu0 0.0
        %3167 = vmatprep.subr.mxu0 0.0
        %3168 = vmatpush1.msra.mxu0 0.0
        %3169 = vmatprep.subr.mxu0 0.0
        %3170 = vmatpush1.msra.mxu0 0.0
        %3171 = vmatprep.subr.mxu0 0.0
        %3172 = vmatpush1.msra.mxu0 0.0
        %3173 = vmatprep.mubr.f32.mxu0 0.0
        %3174 = vmatmul.mubr.f32.gmra.mrb[0].mxu0 %v2804
        %v3175 = vpop.f32.mrb[0].mxu0
        %v3176 = vadd.f32 0.0, %v3175
        %v3177 = vpop.f32.mrb[0].mxu0
        %3178 = vmatprep.mubr.f32.mxu0 0.0
        %3179 = vmatmul.mubr.f32.gmra.mrb[0].mxu0 %v2807
        %v3180 = vpop.f32.mrb[0].mxu0
        %v3181 = vadd.f32 0.0, %v3180
        %v3182 = vpop.f32.mrb[0].mxu0
        %3183 = vdwg.mxu0
        %3184 = vmatprep.subr.mxu0 0.0
        %3185 = vmatpush1.msra.mxu0 %v2756
        %3186 = vmatprep.subr.mxu0 0.0
        %3187 = vmatpush1.msra.mxu0 %v2761
        %3188 = vmatprep.subr.mxu0 0.0
        %3189 = vmatpush1.msra.mxu0 0.0
        %3190 = vmatprep.subr.mxu0 0.0
        %3191 = vmatpush1.msra.mxu0 0.0
        %3192 = vmatprep.subr.mxu0 0.0
        %3193 = vmatpush1.msra.mxu0 0.0
        %3194 = vmatprep.subr.mxu0 0.0
        %3195 = vmatpush1.msra.mxu0 0.0
        %3196 = vmatprep.subr.mxu0 0.0
        %3197 = vmatpush1.msra.mxu0 0.0
        %3198 = vmatprep.subr.mxu0 0.0
        %3199 = vmatpush1.msra.mxu0 0.0
        %3200 = vmatprep.subr.mxu0 0.0
        %3201 = vmatpush1.msra.mxu0 0.0
        %3202 = vmatprep.subr.mxu0 0.0
        %3203 = vmatpush1.msra.mxu0 0.0
        %3204 = vmatprep.subr.mxu0 0.0
        %3205 = vmatpush1.msra.mxu0 0.0
        %3206 = vmatprep.subr.mxu0 0.0
        %3207 = vmatpush1.msra.mxu0 0.0
        %3208 = vmatprep.subr.mxu0 0.0
        %3209 = vmatpush1.msra.mxu0 0.0
        %3210 = vmatprep.subr.mxu0 0.0
        %3211 = vmatpush1.msra.mxu0 0.0
        %3212 = vmatprep.subr.mxu0 0.0
        %3213 = vmatpush1.msra.mxu0 0.0
        %3214 = vmatprep.subr.mxu0 0.0
        %3215 = vmatpush1.msra.mxu0 0.0
        %3216 = vmatprep.subr.mxu0 0.0
        %3217 = vmatpush1.msra.mxu0 0.0
        %3218 = vmatprep.subr.mxu0 0.0
        %3219 = vmatpush1.msra.mxu0 0.0
        %3220 = vmatprep.subr.mxu0 0.0
        %3221 = vmatpush1.msra.mxu0 0.0
        %3222 = vmatprep.subr.mxu0 0.0
        %3223 = vmatpush1.msra.mxu0 0.0
        %3224 = vmatprep.subr.mxu0 0.0
        %3225 = vmatpush1.msra.mxu0 0.0
        %3226 = vmatprep.subr.mxu0 0.0
        %3227 = vmatpush1.msra.mxu0 0.0
        %3228 = vmatprep.subr.mxu0 0.0
        %3229 = vmatpush1.msra.mxu0 0.0
        %3230 = vmatprep.subr.mxu0 0.0
        %3231 = vmatpush1.msra.mxu0 0.0
        %3232 = vmatprep.subr.mxu0 0.0
        %3233 = vmatpush1.msra.mxu0 0.0
        %3234 = vmatprep.subr.mxu0 0.0
        %3235 = vmatpush1.msra.mxu0 0.0
        %3236 = vmatprep.subr.mxu0 0.0
        %3237 = vmatpush1.msra.mxu0 0.0
        %3238 = vmatprep.subr.mxu0 0.0
        %3239 = vmatpush1.msra.mxu0 0.0
        %3240 = vmatprep.subr.mxu0 0.0
        %3241 = vmatpush1.msra.mxu0 0.0
        %3242 = vmatprep.subr.mxu0 0.0
        %3243 = vmatpush1.msra.mxu0 0.0
        %3244 = vmatprep.subr.mxu0 0.0
        %3245 = vmatpush1.msra.mxu0 0.0
        %3246 = vmatprep.subr.mxu0 0.0
        %3247 = vmatpush1.msra.mxu0 0.0
        %3248 = vmatprep.mubr.f32.mxu0 0.0
        %3249 = vmatmul.mubr.f32.gmra.mrb[0].mxu0 %v2804
        %v3250 = vpop.f32.mrb[0].mxu0
        %v3251 = vadd.f32 0.0, %v3250
        %v3252 = vpop.f32.mrb[0].mxu0
        %3253 = vmatprep.mubr.f32.mxu0 0.0
        %3254 = vmatmul.mubr.f32.gmra.mrb[0].mxu0 %v2807
        %v3255 = vpop.f32.mrb[0].mxu0
        %v3256 = vadd.f32 0.0, %v3255
        %v3257 = vpop.f32.mrb[0].mxu0
        %3258 = vdwg.mxu0
        %3259 = vmatprep.subr.mxu0 0.0
        %3260 = vmatpush1.msra.mxu0 %v2766
        %3261 = vmatprep.subr.mxu0 0.0
        %3262 = vmatpush1.msra.mxu0 %v2771
        %3263 = vmatprep.subr.mxu0 0.0
        %3264 = vmatpush1.msra.mxu0 0.0
        %3265 = vmatprep.subr.mxu0 0.0
        %3266 = vmatpush1.msra.mxu0 0.0
        %3267 = vmatprep.subr.mxu0 0.0
        %3268 = vmatpush1.msra.mxu0 0.0
        %3269 = vmatprep.subr.mxu0 0.0
        %3270 = vmatpush1.msra.mxu0 0.0
        %3271 = vmatprep.subr.mxu0 0.0
        %3272 = vmatpush1.msra.mxu0 0.0
        %3273 = vmatprep.subr.mxu0 0.0
        %3274 = vmatpush1.msra.mxu0 0.0
        %3275 = vmatprep.subr.mxu0 0.0
        %3276 = vmatpush1.msra.mxu0 0.0
        %3277 = vmatprep.subr.mxu0 0.0
        %3278 = vmatpush1.msra.mxu0 0.0
        %3279 = vmatprep.subr.mxu0 0.0
        %3280 = vmatpush1.msra.mxu0 0.0
        %3281 = vmatprep.subr.mxu0 0.0
        %3282 = vmatpush1.msra.mxu0 0.0
        %3283 = vmatprep.subr.mxu0 0.0
        %3284 = vmatpush1.msra.mxu0 0.0
        %3285 = vmatprep.subr.mxu0 0.0
        %3286 = vmatpush1.msra.mxu0 0.0
        %3287 = vmatprep.subr.mxu0 0.0
        %3288 = vmatpush1.msra.mxu0 0.0
        %3289 = vmatprep.subr.mxu0 0.0
        %3290 = vmatpush1.msra.mxu0 0.0
        %3291 = vmatprep.subr.mxu0 0.0
        %3292 = vmatpush1.msra.mxu0 0.0
        %3293 = vmatprep.subr.mxu0 0.0
        %3294 = vmatpush1.msra.mxu0 0.0
        %3295 = vmatprep.subr.mxu0 0.0
        %3296 = vmatpush1.msra.mxu0 0.0
        %3297 = vmatprep.subr.mxu0 0.0
        %3298 = vmatpush1.msra.mxu0 0.0
        %3299 = vmatprep.subr.mxu0 0.0
        %3300 = vmatpush1.msra.mxu0 0.0
        %3301 = vmatprep.subr.mxu0 0.0
        %3302 = vmatpush1.msra.mxu0 0.0
        %3303 = vmatprep.subr.mxu0 0.0
        %3304 = vmatpush1.msra.mxu0 0.0
        %3305 = vmatprep.subr.mxu0 0.0
        %3306 = vmatpush1.msra.mxu0 0.0
        %3307 = vmatprep.subr.mxu0 0.0
        %3308 = vmatpush1.msra.mxu0 0.0
        %3309 = vmatprep.subr.mxu0 0.0
        %3310 = vmatpush1.msra.mxu0 0.0
        %3311 = vmatprep.subr.mxu0 0.0
        %3312 = vmatpush1.msra.mxu0 0.0
        %3313 = vmatprep.subr.mxu0 0.0
        %3314 = vmatpush1.msra.mxu0 0.0
        %3315 = vmatprep.subr.mxu0 0.0
        %3316 = vmatpush1.msra.mxu0 0.0
        %3317 = vmatprep.subr.mxu0 0.0
        %3318 = vmatpush1.msra.mxu0 0.0
        %3319 = vmatprep.subr.mxu0 0.0
        %3320 = vmatpush1.msra.mxu0 0.0
        %3321 = vmatprep.subr.mxu0 0.0
        %3322 = vmatpush1.msra.mxu0 0.0
        %3323 = vmatprep.mubr.f32.mxu0 0.0
        %3324 = vmatmul.mubr.f32.gmra.mrb[0].mxu0 %v2804
        %v3325 = vpop.f32.mrb[0].mxu0
        %v3326 = vadd.f32 0.0, %v3325
        %v3327 = vpop.f32.mrb[0].mxu0
        %3328 = vmatprep.mubr.f32.mxu0 0.0
        %3329 = vmatmul.mubr.f32.gmra.mrb[0].mxu0 %v2807
        %v3330 = vpop.f32.mrb[0].mxu0
        %v3331 = vadd.f32 0.0, %v3330
        %v3332 = vpop.f32.mrb[0].mxu0
        %3333 = vdwg.mxu0
        %3334 = vmatprep.subr.mxu0 0.0
        %3335 = vmatpush1.msra.mxu0 %v2776
        %3336 = vmatprep.subr.mxu0 0.0
        %3337 = vmatpush1.msra.mxu0 %v2781
        %3338 = vmatprep.subr.mxu0 0.0
        %3339 = vmatpush1.msra.mxu0 0.0
        %3340 = vmatprep.subr.mxu0 0.0
        %3341 = vmatpush1.msra.mxu0 0.0
        %3342 = vmatprep.subr.mxu0 0.0
        %3343 = vmatpush1.msra.mxu0 0.0
        %3344 = vmatprep.subr.mxu0 0.0
        %3345 = vmatpush1.msra.mxu0 0.0
        %3346 = vmatprep.subr.mxu0 0.0
        %3347 = vmatpush1.msra.mxu0 0.0
        %3348 = vmatprep.subr.mxu0 0.0
        %3349 = vmatpush1.msra.mxu0 0.0
        %3350 = vmatprep.subr.mxu0 0.0
        %3351 = vmatpush1.msra.mxu0 0.0
        %3352 = vmatprep.subr.mxu0 0.0
        %3353 = vmatpush1.msra.mxu0 0.0
        %3354 = vmatprep.subr.mxu0 0.0
        %3355 = vmatpush1.msra.mxu0 0.0
        %3356 = vmatprep.subr.mxu0 0.0
        %3357 = vmatpush1.msra.mxu0 0.0
        %3358 = vmatprep.subr.mxu0 0.0
        %3359 = vmatpush1.msra.mxu0 0.0
        %3360 = vmatprep.subr.mxu0 0.0
        %3361 = vmatpush1.msra.mxu0 0.0
        %3362 = vmatprep.subr.mxu0 0.0
        %3363 = vmatpush1.msra.mxu0 0.0
        %3364 = vmatprep.subr.mxu0 0.0
        %3365 = vmatpush1.msra.mxu0 0.0
        %3366 = vmatprep.subr.mxu0 0.0
        %3367 = vmatpush1.msra.mxu0 0.0
        %3368 = vmatprep.subr.mxu0 0.0
        %3369 = vmatpush1.msra.mxu0 0.0
        %3370 = vmatprep.subr.mxu0 0.0
        %3371 = vmatpush1.msra.mxu0 0.0
        %3372 = vmatprep.subr.mxu0 0.0
        %3373 = vmatpush1.msra.mxu0 0.0
        %3374 = vmatprep.subr.mxu0 0.0
        %3375 = vmatpush1.msra.mxu0 0.0
        %3376 = vmatprep.subr.mxu0 0.0
        %3377 = vmatpush1.msra.mxu0 0.0
        %3378 = vmatprep.subr.mxu0 0.0
        %3379 = vmatpush1.msra.mxu0 0.0
        %3380 = vmatprep.subr.mxu0 0.0
        %3381 = vmatpush1.msra.mxu0 0.0
        %3382 = vmatprep.subr.mxu0 0.0
        %3383 = vmatpush1.msra.mxu0 0.0
        %3384 = vmatprep.subr.mxu0 0.0
        %3385 = vmatpush1.msra.mxu0 0.0
        %3386 = vmatprep.subr.mxu0 0.0
        %3387 = vmatpush1.msra.mxu0 0.0
        %3388 = vmatprep.subr.mxu0 0.0
        %3389 = vmatpush1.msra.mxu0 0.0
        %3390 = vmatprep.subr.mxu0 0.0
        %3391 = vmatpush1.msra.mxu0 0.0
        %3392 = vmatprep.subr.mxu0 0.0
        %3393 = vmatpush1.msra.mxu0 0.0
        %3394 = vmatprep.subr.mxu0 0.0
        %3395 = vmatpush1.msra.mxu0 0.0
        %3396 = vmatprep.subr.mxu0 0.0
        %3397 = vmatpush1.msra.mxu0 0.0
        %3398 = vmatprep.mubr.f32.mxu0 0.0
        %3399 = vmatmul.mubr.f32.gmra.mrb[0].mxu0 %v2804
        %v3400 = vpop.f32.mrb[0].mxu0
        %v3401 = vadd.f32 0.0, %v3400
        %v3402 = vpop.f32.mrb[0].mxu0
        %3403 = vmatprep.mubr.f32.mxu0 0.0
        %3404 = vmatmul.mubr.f32.gmra.mrb[0].mxu0 %v2807
        %v3405 = vpop.f32.mrb[0].mxu0
        %v3406 = vadd.f32 0.0, %v3405
        %v3407 = vpop.f32.mrb[0].mxu0
        %3408 = vdwg.mxu0
        %v3409 = vadd.f32 %v2787, %v2876
        %v3410 = vadd.f32 %v2788, %v2881
        %v3411 = vadd.f32 %v2789, %v2951
        %v3412 = vadd.f32 %v2790, %v2956
        %v3413 = vadd.f32 %v2791, %v3026
        %v3414 = vadd.f32 %v2792, %v3031
        %v3415 = vadd.f32 %v2793, %v3101
        %v3416 = vadd.f32 %v2794, %v3106
        %v3417 = vadd.f32 %v2795, %v3176
        %v3418 = vadd.f32 %v2796, %v3181
        %v3419 = vadd.f32 %v2797, %v3251
        %v3420 = vadd.f32 %v2798, %v3256
        %v3421 = vadd.f32 %v2799, %v3326
        %v3422 = vadd.f32 %v2800, %v3331
        %v3423 = vadd.f32 %v2801, %v3401
        %v3424 = vadd.f32 %v2802, %v3406
        %3425 = vst.msk [vmem:[#allocation2] sm:$0xff] %vm245, %v3409
        %3426 = vst.msk [vmem:[#allocation2 + $0x8] sm:$0xff] %vm245, %v3410
        %3427 = vst.msk [vmem:[#allocation2 + $0x10] sm:$0xff] %vm245, %v3411
        %3428 = vst.msk [vmem:[#allocation2 + $0x18] sm:$0xff] %vm245, %v3412
        %3429 = vst.msk [vmem:[#allocation2 + $0x20] sm:$0xff] %vm245, %v3413
        %3430 = vst.msk [vmem:[#allocation2 + $0x28] sm:$0xff] %vm245, %v3414
        %3431 = vst.msk [vmem:[#allocation2 + $0x30] sm:$0xff] %vm245, %v3415
        %3432 = vst.msk [vmem:[#allocation2 + $0x38] sm:$0xff] %vm245, %v3416
        %3433 = vst.msk [vmem:[#allocation2 + $0x40] sm:$0xff] %vm245, %v3417
        %3434 = vst.msk [vmem:[#allocation2 + $0x48] sm:$0xff] %vm245, %v3418
        %3435 = vst.msk [vmem:[#allocation2 + $0x50] sm:$0xff] %vm245, %v3419
        %3436 = vst.msk [vmem:[#allocation2 + $0x58] sm:$0xff] %vm245, %v3420
        %3437 = vst.msk [vmem:[#allocation2 + $0x60] sm:$0xff] %vm245, %v3421
        %3438 = vst.msk [vmem:[#allocation2 + $0x68] sm:$0xff] %vm245, %v3422
        %3439 = vst.msk [vmem:[#allocation2 + $0x70] sm:$0xff] %vm245, %v3423
        %3440 = vst.msk [vmem:[#allocation2 + $0x78] sm:$0xff] %vm245, %v3424
        %v3442 = vsel %vm245, %v2706, 0
        %v3445 = vsel %vm245, %v2711, 0
        %v3448 = vsel %vm245, %v2716, 0
        %v3451 = vsel %vm245, %v2721, 0
        %v3454 = vsel %vm245, %v2726, 0
        %v3457 = vsel %vm245, %v2731, 0
        %v3460 = vsel %vm245, %v2736, 0
        %v3463 = vsel %vm245, %v2741, 0
        %v3466 = vsel %vm245, %v2746, 0
        %v3469 = vsel %vm245, %v2751, 0
        %v3472 = vsel %vm245, %v2756, 0
        %v3475 = vsel %vm245, %v2761, 0
        %v3478 = vsel %vm245, %v2766, 0
        %v3481 = vsel %vm245, %v2771, 0
        %v3484 = vsel %vm245, %v2776, 0
        %v3487 = vsel %vm245, %v2781, 0
        %3489 = vmatprep.subr.mxu0 0.0
        %3490 = vmatpush1.msra.mxu0 %v2637
        %3491 = vmatprep.subr.mxu0 0.0
        %3492 = vmatpush1.msra.mxu0 %v2638
        %3493 = vmatprep.subr.mxu0 0.0
        %3494 = vmatpush1.msra.mxu0 0.0
        %3495 = vmatprep.subr.mxu0 0.0
        %3496 = vmatpush1.msra.mxu0 0.0
        %3497 = vmatprep.subr.mxu0 0.0
        %3498 = vmatpush1.msra.mxu0 0.0
        %3499 = vmatprep.subr.mxu0 0.0
        %3500 = vmatpush1.msra.mxu0 0.0
        %3501 = vmatprep.subr.mxu0 0.0
        %3502 = vmatpush1.msra.mxu0 0.0
        %3503 = vmatprep.subr.mxu0 0.0
        %3504 = vmatpush1.msra.mxu0 0.0
        %3505 = vmatprep.subr.mxu0 0.0
        %3506 = vmatpush1.msra.mxu0 0.0
        %3507 = vmatprep.subr.mxu0 0.0
        %3508 = vmatpush1.msra.mxu0 0.0
        %3509 = vmatprep.subr.mxu0 0.0
        %3510 = vmatpush1.msra.mxu0 0.0
        %3511 = vmatprep.subr.mxu0 0.0
        %3512 = vmatpush1.msra.mxu0 0.0
        %3513 = vmatprep.subr.mxu0 0.0
        %3514 = vmatpush1.msra.mxu0 0.0
        %3515 = vmatprep.subr.mxu0 0.0
        %3516 = vmatpush1.msra.mxu0 0.0
        %3517 = vmatprep.subr.mxu0 0.0
        %3518 = vmatpush1.msra.mxu0 0.0
        %3519 = vmatprep.subr.mxu0 0.0
        %3520 = vmatpush1.msra.mxu0 0.0
        %3521 = vmatprep.subr.mxu0 0.0
        %3522 = vmatpush1.msra.mxu0 0.0
        %3523 = vmatprep.subr.mxu0 0.0
        %3524 = vmatpush1.msra.mxu0 0.0
        %3525 = vmatprep.subr.mxu0 0.0
        %3526 = vmatpush1.msra.mxu0 0.0
        %3527 = vmatprep.subr.mxu0 0.0
        %3528 = vmatpush1.msra.mxu0 0.0
        %3529 = vmatprep.subr.mxu0 0.0
        %3530 = vmatpush1.msra.mxu0 0.0
        %3531 = vmatprep.subr.mxu0 0.0
        %3532 = vmatpush1.msra.mxu0 0.0
        %3533 = vmatprep.subr.mxu0 0.0
        %3534 = vmatpush1.msra.mxu0 0.0
        %3535 = vmatprep.subr.mxu0 0.0
        %3536 = vmatpush1.msra.mxu0 0.0
        %3537 = vmatprep.subr.mxu0 0.0
        %3538 = vmatpush1.msra.mxu0 0.0
        %3539 = vmatprep.subr.mxu0 0.0
        %3540 = vmatpush1.msra.mxu0 0.0
        %3541 = vmatprep.subr.mxu0 0.0
        %3542 = vmatpush1.msra.mxu0 0.0
        %3543 = vmatprep.subr.mxu0 0.0
        %3544 = vmatpush1.msra.mxu0 0.0
        %3545 = vmatprep.subr.mxu0 0.0
        %3546 = vmatpush1.msra.mxu0 0.0
        %3547 = vmatprep.subr.mxu0 0.0
        %3548 = vmatpush1.msra.mxu0 0.0
        %3549 = vmatprep.subr.mxu0 0.0
        %3550 = vmatpush1.msra.mxu0 0.0
        %3551 = vmatprep.subr.mxu0 0.0
        %3552 = vmatpush1.msra.mxu0 0.0
        %3553 = vmatprep.mubr.f32.mxu0 0.0
        %3554 = vmatmul.mubr.f32.gmra.mrb[0].mxu0 %v3442
        %v3555 = vpop.f32.mrb[0].mxu0
        %v3556 = vadd.f32 0.0, %v3555
        %v3557 = vpop.f32.mrb[0].mxu0
        %3558 = vmatprep.mubr.f32.mxu0 0.0
        %3559 = vmatmul.mubr.f32.gmra.mrb[0].mxu0 %v3445
        %v3560 = vpop.f32.mrb[0].mxu0
        %v3561 = vadd.f32 0.0, %v3560
        %v3562 = vpop.f32.mrb[0].mxu0
        %3563 = vmatprep.mubr.f32.mxu0 0.0
        %3564 = vmatmul.mubr.f32.gmra.mrb[0].mxu0 %v3448
        %v3565 = vpop.f32.mrb[0].mxu0
        %v3566 = vadd.f32 0.0, %v3565
        %v3567 = vpop.f32.mrb[0].mxu0
        %3568 = vmatprep.mubr.f32.mxu0 0.0
        %3569 = vmatmul.mubr.f32.gmra.mrb[0].mxu0 %v3451
        %v3570 = vpop.f32.mrb[0].mxu0
        %v3571 = vadd.f32 0.0, %v3570
        %v3572 = vpop.f32.mrb[0].mxu0
        %3573 = vmatprep.mubr.f32.mxu0 0.0
        %3574 = vmatmul.mubr.f32.gmra.mrb[0].mxu0 %v3454
        %v3575 = vpop.f32.mrb[0].mxu0
        %v3576 = vadd.f32 0.0, %v3575
        %v3577 = vpop.f32.mrb[0].mxu0
        %3578 = vmatprep.mubr.f32.mxu0 0.0
        %3579 = vmatmul.mubr.f32.gmra.mrb[0].mxu0 %v3457
        %v3580 = vpop.f32.mrb[0].mxu0
        %v3581 = vadd.f32 0.0, %v3580
        %v3582 = vpop.f32.mrb[0].mxu0
        %3583 = vmatprep.mubr.f32.mxu0 0.0
        %3584 = vmatmul.mubr.f32.gmra.mrb[0].mxu0 %v3460
        %v3585 = vpop.f32.mrb[0].mxu0
        %v3586 = vadd.f32 0.0, %v3585
        %v3587 = vpop.f32.mrb[0].mxu0
        %3588 = vmatprep.mubr.f32.mxu0 0.0
        %3589 = vmatmul.mubr.f32.gmra.mrb[0].mxu0 %v3463
        %v3590 = vpop.f32.mrb[0].mxu0
        %v3591 = vadd.f32 0.0, %v3590
        %v3592 = vpop.f32.mrb[0].mxu0
        %3593 = vmatprep.mubr.f32.mxu0 0.0
        %3594 = vmatmul.mubr.f32.gmra.mrb[0].mxu0 %v3466
        %v3595 = vpop.f32.mrb[0].mxu0
        %v3596 = vadd.f32 0.0, %v3595
        %v3597 = vpop.f32.mrb[0].mxu0
        %3598 = vmatprep.mubr.f32.mxu0 0.0
        %3599 = vmatmul.mubr.f32.gmra.mrb[0].mxu0 %v3469
        %v3600 = vpop.f32.mrb[0].mxu0
        %v3601 = vadd.f32 0.0, %v3600
        %v3602 = vpop.f32.mrb[0].mxu0
        %3603 = vmatprep.mubr.f32.mxu0 0.0
        %3604 = vmatmul.mubr.f32.gmra.mrb[0].mxu0 %v3472
        %v3605 = vpop.f32.mrb[0].mxu0
        %v3606 = vadd.f32 0.0, %v3605
        %v3607 = vpop.f32.mrb[0].mxu0
        %3608 = vmatprep.mubr.f32.mxu0 0.0
        %3609 = vmatmul.mubr.f32.gmra.mrb[0].mxu0 %v3475
        %v3610 = vpop.f32.mrb[0].mxu0
        %v3611 = vadd.f32 0.0, %v3610
        %v3612 = vpop.f32.mrb[0].mxu0
        %3613 = vmatprep.mubr.f32.mxu0 0.0
        %3614 = vmatmul.mubr.f32.gmra.mrb[0].mxu0 %v3478
        %v3615 = vpop.f32.mrb[0].mxu0
        %v3616 = vadd.f32 0.0, %v3615
        %v3617 = vpop.f32.mrb[0].mxu0
        %3618 = vmatprep.mubr.f32.mxu0 0.0
        %3619 = vmatmul.mubr.f32.gmra.mrb[0].mxu0 %v3481
        %v3620 = vpop.f32.mrb[0].mxu0
        %v3621 = vadd.f32 0.0, %v3620
        %v3622 = vpop.f32.mrb[0].mxu0
        %3623 = vmatprep.mubr.f32.mxu0 0.0
        %3624 = vmatmul.mubr.f32.gmra.mrb[0].mxu0 %v3484
        %v3625 = vpop.f32.mrb[0].mxu0
        %v3626 = vadd.f32 0.0, %v3625
        %v3627 = vpop.f32.mrb[0].mxu0
        %3628 = vmatprep.mubr.f32.mxu0 0.0
        %3629 = vmatmul.mubr.f32.gmra.mrb[0].mxu0 %v3487
        %v3630 = vpop.f32.mrb[0].mxu0
        %v3631 = vadd.f32 0.0, %v3630
        %v3632 = vpop.f32.mrb[0].mxu0
        %3633 = vdwg.mxu0
        %s3634 = scalar_lea.vmem [#allocation8], 64
        %v3635 = vld [vmem:[%s3634] sm:$0xff]
        %v3636 = vld [vmem:[%s3634 + $0x8] sm:$0xff]
        %v3637 = vld [vmem:[#allocation2] sm:$0xff]
        %v3638 = vld [vmem:[#allocation2 + $0x8] sm:$0xff]
        %v3639 = vld [vmem:[#allocation2 + $0x10] sm:$0xff]
        %v3640 = vld [vmem:[#allocation2 + $0x18] sm:$0xff]
        %v3641 = vld [vmem:[#allocation2 + $0x20] sm:$0xff]
        %v3642 = vld [vmem:[#allocation2 + $0x28] sm:$0xff]
        %v3643 = vld [vmem:[#allocation2 + $0x30] sm:$0xff]
        %v3644 = vld [vmem:[#allocation2 + $0x38] sm:$0xff]
        %v3645 = vld [vmem:[#allocation2 + $0x40] sm:$0xff]
        %v3646 = vld [vmem:[#allocation2 + $0x48] sm:$0xff]
        %v3647 = vld [vmem:[#allocation2 + $0x50] sm:$0xff]
        %v3648 = vld [vmem:[#allocation2 + $0x58] sm:$0xff]
        %v3649 = vld [vmem:[#allocation2 + $0x60] sm:$0xff]
        %v3650 = vld [vmem:[#allocation2 + $0x68] sm:$0xff]
        %v3651 = vld [vmem:[#allocation2 + $0x70] sm:$0xff]
        %v3652 = vld [vmem:[#allocation2 + $0x78] sm:$0xff]
        %v3654 = vsel %vm245, %v3635, 0
        %v3657 = vsel %vm245, %v3636, 0
        %3659 = vmatprep.subr.mxu0 0.0
        %3660 = vmatpush1.msra.mxu0 %v3556
        %3661 = vmatprep.subr.mxu0 0.0
        %3662 = vmatpush1.msra.mxu0 %v3561
        %3663 = vmatprep.subr.mxu0 0.0
        %3664 = vmatpush1.msra.mxu0 0.0
        %3665 = vmatprep.subr.mxu0 0.0
        %3666 = vmatpush1.msra.mxu0 0.0
        %3667 = vmatprep.subr.mxu0 0.0
        %3668 = vmatpush1.msra.mxu0 0.0
        %3669 = vmatprep.subr.mxu0 0.0
        %3670 = vmatpush1.msra.mxu0 0.0
        %3671 = vmatprep.subr.mxu0 0.0
        %3672 = vmatpush1.msra.mxu0 0.0
        %3673 = vmatprep.subr.mxu0 0.0
        %3674 = vmatpush1.msra.mxu0 0.0
        %3675 = vmatprep.subr.mxu0 0.0
        %3676 = vmatpush1.msra.mxu0 0.0
        %3677 = vmatprep.subr.mxu0 0.0
        %3678 = vmatpush1.msra.mxu0 0.0
        %3679 = vmatprep.subr.mxu0 0.0
        %3680 = vmatpush1.msra.mxu0 0.0
        %3681 = vmatprep.subr.mxu0 0.0
        %3682 = vmatpush1.msra.mxu0 0.0
        %3683 = vmatprep.subr.mxu0 0.0
        %3684 = vmatpush1.msra.mxu0 0.0
        %3685 = vmatprep.subr.mxu0 0.0
        %3686 = vmatpush1.msra.mxu0 0.0
        %3687 = vmatprep.subr.mxu0 0.0
        %3688 = vmatpush1.msra.mxu0 0.0
        %3689 = vmatprep.subr.mxu0 0.0
        %3690 = vmatpush1.msra.mxu0 0.0
        %3691 = vmatprep.subr.mxu0 0.0
        %3692 = vmatpush1.msra.mxu0 0.0
        %3693 = vmatprep.subr.mxu0 0.0
        %3694 = vmatpush1.msra.mxu0 0.0
        %3695 = vmatprep.subr.mxu0 0.0
        %3696 = vmatpush1.msra.mxu0 0.0
        %3697 = vmatprep.subr.mxu0 0.0
        %3698 = vmatpush1.msra.mxu0 0.0
        %3699 = vmatprep.subr.mxu0 0.0
        %3700 = vmatpush1.msra.mxu0 0.0
        %3701 = vmatprep.subr.mxu0 0.0
        %3702 = vmatpush1.msra.mxu0 0.0
        %3703 = vmatprep.subr.mxu0 0.0
        %3704 = vmatpush1.msra.mxu0 0.0
        %3705 = vmatprep.subr.mxu0 0.0
        %3706 = vmatpush1.msra.mxu0 0.0
        %3707 = vmatprep.subr.mxu0 0.0
        %3708 = vmatpush1.msra.mxu0 0.0
        %3709 = vmatprep.subr.mxu0 0.0
        %3710 = vmatpush1.msra.mxu0 0.0
        %3711 = vmatprep.subr.mxu0 0.0
        %3712 = vmatpush1.msra.mxu0 0.0
        %3713 = vmatprep.subr.mxu0 0.0
        %3714 = vmatpush1.msra.mxu0 0.0
        %3715 = vmatprep.subr.mxu0 0.0
        %3716 = vmatpush1.msra.mxu0 0.0
        %3717 = vmatprep.subr.mxu0 0.0
        %3718 = vmatpush1.msra.mxu0 0.0
        %3719 = vmatprep.subr.mxu0 0.0
        %3720 = vmatpush1.msra.mxu0 0.0
        %3721 = vmatprep.subr.mxu0 0.0
        %3722 = vmatpush1.msra.mxu0 0.0
        %3723 = vmatprep.mubr.f32.mxu0 0.0
        %3724 = vmatmul.mubr.f32.gmra.mrb[0].mxu0 %v3654
        %v3725 = vpop.f32.mrb[0].mxu0
        %v3726 = vadd.f32 0.0, %v3725
        %v3727 = vpop.f32.mrb[0].mxu0
        %3728 = vmatprep.mubr.f32.mxu0 0.0
        %3729 = vmatmul.mubr.f32.gmra.mrb[0].mxu0 %v3657
        %v3730 = vpop.f32.mrb[0].mxu0
        %v3731 = vadd.f32 0.0, %v3730
        %v3732 = vpop.f32.mrb[0].mxu0
        %3733 = vdwg.mxu0
        %3734 = vmatprep.subr.mxu0 0.0
        %3735 = vmatpush1.msra.mxu0 %v3566
        %3736 = vmatprep.subr.mxu0 0.0
        %3737 = vmatpush1.msra.mxu0 %v3571
        %3738 = vmatprep.subr.mxu0 0.0
        %3739 = vmatpush1.msra.mxu0 0.0
        %3740 = vmatprep.subr.mxu0 0.0
        %3741 = vmatpush1.msra.mxu0 0.0
        %3742 = vmatprep.subr.mxu0 0.0
        %3743 = vmatpush1.msra.mxu0 0.0
        %3744 = vmatprep.subr.mxu0 0.0
        %3745 = vmatpush1.msra.mxu0 0.0
        %3746 = vmatprep.subr.mxu0 0.0
        %3747 = vmatpush1.msra.mxu0 0.0
        %3748 = vmatprep.subr.mxu0 0.0
        %3749 = vmatpush1.msra.mxu0 0.0
        %3750 = vmatprep.subr.mxu0 0.0
        %3751 = vmatpush1.msra.mxu0 0.0
        %3752 = vmatprep.subr.mxu0 0.0
        %3753 = vmatpush1.msra.mxu0 0.0
        %3754 = vmatprep.subr.mxu0 0.0
        %3755 = vmatpush1.msra.mxu0 0.0
        %3756 = vmatprep.subr.mxu0 0.0
        %3757 = vmatpush1.msra.mxu0 0.0
        %3758 = vmatprep.subr.mxu0 0.0
        %3759 = vmatpush1.msra.mxu0 0.0
        %3760 = vmatprep.subr.mxu0 0.0
        %3761 = vmatpush1.msra.mxu0 0.0
        %3762 = vmatprep.subr.mxu0 0.0
        %3763 = vmatpush1.msra.mxu0 0.0
        %3764 = vmatprep.subr.mxu0 0.0
        %3765 = vmatpush1.msra.mxu0 0.0
        %3766 = vmatprep.subr.mxu0 0.0
        %3767 = vmatpush1.msra.mxu0 0.0
        %3768 = vmatprep.subr.mxu0 0.0
        %3769 = vmatpush1.msra.mxu0 0.0
        %3770 = vmatprep.subr.mxu0 0.0
        %3771 = vmatpush1.msra.mxu0 0.0
        %3772 = vmatprep.subr.mxu0 0.0
        %3773 = vmatpush1.msra.mxu0 0.0
        %3774 = vmatprep.subr.mxu0 0.0
        %3775 = vmatpush1.msra.mxu0 0.0
        %3776 = vmatprep.subr.mxu0 0.0
        %3777 = vmatpush1.msra.mxu0 0.0
        %3778 = vmatprep.subr.mxu0 0.0
        %3779 = vmatpush1.msra.mxu0 0.0
        %3780 = vmatprep.subr.mxu0 0.0
        %3781 = vmatpush1.msra.mxu0 0.0
        %3782 = vmatprep.subr.mxu0 0.0
        %3783 = vmatpush1.msra.mxu0 0.0
        %3784 = vmatprep.subr.mxu0 0.0
        %3785 = vmatpush1.msra.mxu0 0.0
        %3786 = vmatprep.subr.mxu0 0.0
        %3787 = vmatpush1.msra.mxu0 0.0
        %3788 = vmatprep.subr.mxu0 0.0
        %3789 = vmatpush1.msra.mxu0 0.0
        %3790 = vmatprep.subr.mxu0 0.0
        %3791 = vmatpush1.msra.mxu0 0.0
        %3792 = vmatprep.subr.mxu0 0.0
        %3793 = vmatpush1.msra.mxu0 0.0
        %3794 = vmatprep.subr.mxu0 0.0
        %3795 = vmatpush1.msra.mxu0 0.0
        %3796 = vmatprep.subr.mxu0 0.0
        %3797 = vmatpush1.msra.mxu0 0.0
        %3798 = vmatprep.mubr.f32.mxu0 0.0
        %3799 = vmatmul.mubr.f32.gmra.mrb[0].mxu0 %v3654
        %v3800 = vpop.f32.mrb[0].mxu0
        %v3801 = vadd.f32 0.0, %v3800
        %v3802 = vpop.f32.mrb[0].mxu0
        %3803 = vmatprep.mubr.f32.mxu0 0.0
        %3804 = vmatmul.mubr.f32.gmra.mrb[0].mxu0 %v3657
        %v3805 = vpop.f32.mrb[0].mxu0
        %v3806 = vadd.f32 0.0, %v3805
        %v3807 = vpop.f32.mrb[0].mxu0
        %3808 = vdwg.mxu0
        %3809 = vmatprep.subr.mxu0 0.0
        %3810 = vmatpush1.msra.mxu0 %v3576
        %3811 = vmatprep.subr.mxu0 0.0
        %3812 = vmatpush1.msra.mxu0 %v3581
        %3813 = vmatprep.subr.mxu0 0.0
        %3814 = vmatpush1.msra.mxu0 0.0
        %3815 = vmatprep.subr.mxu0 0.0
        %3816 = vmatpush1.msra.mxu0 0.0
        %3817 = vmatprep.subr.mxu0 0.0
        %3818 = vmatpush1.msra.mxu0 0.0
        %3819 = vmatprep.subr.mxu0 0.0
        %3820 = vmatpush1.msra.mxu0 0.0
        %3821 = vmatprep.subr.mxu0 0.0
        %3822 = vmatpush1.msra.mxu0 0.0
        %3823 = vmatprep.subr.mxu0 0.0
        %3824 = vmatpush1.msra.mxu0 0.0
        %3825 = vmatprep.subr.mxu0 0.0
        %3826 = vmatpush1.msra.mxu0 0.0
        %3827 = vmatprep.subr.mxu0 0.0
        %3828 = vmatpush1.msra.mxu0 0.0
        %3829 = vmatprep.subr.mxu0 0.0
        %3830 = vmatpush1.msra.mxu0 0.0
        %3831 = vmatprep.subr.mxu0 0.0
        %3832 = vmatpush1.msra.mxu0 0.0
        %3833 = vmatprep.subr.mxu0 0.0
        %3834 = vmatpush1.msra.mxu0 0.0
        %3835 = vmatprep.subr.mxu0 0.0
        %3836 = vmatpush1.msra.mxu0 0.0
        %3837 = vmatprep.subr.mxu0 0.0
        %3838 = vmatpush1.msra.mxu0 0.0
        %3839 = vmatprep.subr.mxu0 0.0
        %3840 = vmatpush1.msra.mxu0 0.0
        %3841 = vmatprep.subr.mxu0 0.0
        %3842 = vmatpush1.msra.mxu0 0.0
        %3843 = vmatprep.subr.mxu0 0.0
        %3844 = vmatpush1.msra.mxu0 0.0
        %3845 = vmatprep.subr.mxu0 0.0
        %3846 = vmatpush1.msra.mxu0 0.0
        %3847 = vmatprep.subr.mxu0 0.0
        %3848 = vmatpush1.msra.mxu0 0.0
        %3849 = vmatprep.subr.mxu0 0.0
        %3850 = vmatpush1.msra.mxu0 0.0
        %3851 = vmatprep.subr.mxu0 0.0
        %3852 = vmatpush1.msra.mxu0 0.0
        %3853 = vmatprep.subr.mxu0 0.0
        %3854 = vmatpush1.msra.mxu0 0.0
        %3855 = vmatprep.subr.mxu0 0.0
        %3856 = vmatpush1.msra.mxu0 0.0
        %3857 = vmatprep.subr.mxu0 0.0
        %3858 = vmatpush1.msra.mxu0 0.0
        %3859 = vmatprep.subr.mxu0 0.0
        %3860 = vmatpush1.msra.mxu0 0.0
        %3861 = vmatprep.subr.mxu0 0.0
        %3862 = vmatpush1.msra.mxu0 0.0
        %3863 = vmatprep.subr.mxu0 0.0
        %3864 = vmatpush1.msra.mxu0 0.0
        %3865 = vmatprep.subr.mxu0 0.0
        %3866 = vmatpush1.msra.mxu0 0.0
        %3867 = vmatprep.subr.mxu0 0.0
        %3868 = vmatpush1.msra.mxu0 0.0
        %3869 = vmatprep.subr.mxu0 0.0
        %3870 = vmatpush1.msra.mxu0 0.0
        %3871 = vmatprep.subr.mxu0 0.0
        %3872 = vmatpush1.msra.mxu0 0.0
        %3873 = vmatprep.mubr.f32.mxu0 0.0
        %3874 = vmatmul.mubr.f32.gmra.mrb[0].mxu0 %v3654
        %v3875 = vpop.f32.mrb[0].mxu0
        %v3876 = vadd.f32 0.0, %v3875
        %v3877 = vpop.f32.mrb[0].mxu0
        %3878 = vmatprep.mubr.f32.mxu0 0.0
        %3879 = vmatmul.mubr.f32.gmra.mrb[0].mxu0 %v3657
        %v3880 = vpop.f32.mrb[0].mxu0
        %v3881 = vadd.f32 0.0, %v3880
        %v3882 = vpop.f32.mrb[0].mxu0
        %3883 = vdwg.mxu0
        %3884 = vmatprep.subr.mxu0 0.0
        %3885 = vmatpush1.msra.mxu0 %v3586
        %3886 = vmatprep.subr.mxu0 0.0
        %3887 = vmatpush1.msra.mxu0 %v3591
        %3888 = vmatprep.subr.mxu0 0.0
        %3889 = vmatpush1.msra.mxu0 0.0
        %3890 = vmatprep.subr.mxu0 0.0
        %3891 = vmatpush1.msra.mxu0 0.0
        %3892 = vmatprep.subr.mxu0 0.0
        %3893 = vmatpush1.msra.mxu0 0.0
        %3894 = vmatprep.subr.mxu0 0.0
        %3895 = vmatpush1.msra.mxu0 0.0
        %3896 = vmatprep.subr.mxu0 0.0
        %3897 = vmatpush1.msra.mxu0 0.0
        %3898 = vmatprep.subr.mxu0 0.0
        %3899 = vmatpush1.msra.mxu0 0.0
        %3900 = vmatprep.subr.mxu0 0.0
        %3901 = vmatpush1.msra.mxu0 0.0
        %3902 = vmatprep.subr.mxu0 0.0
        %3903 = vmatpush1.msra.mxu0 0.0
        %3904 = vmatprep.subr.mxu0 0.0
        %3905 = vmatpush1.msra.mxu0 0.0
        %3906 = vmatprep.subr.mxu0 0.0
        %3907 = vmatpush1.msra.mxu0 0.0
        %3908 = vmatprep.subr.mxu0 0.0
        %3909 = vmatpush1.msra.mxu0 0.0
        %3910 = vmatprep.subr.mxu0 0.0
        %3911 = vmatpush1.msra.mxu0 0.0
        %3912 = vmatprep.subr.mxu0 0.0
        %3913 = vmatpush1.msra.mxu0 0.0
        %3914 = vmatprep.subr.mxu0 0.0
        %3915 = vmatpush1.msra.mxu0 0.0
        %3916 = vmatprep.subr.mxu0 0.0
        %3917 = vmatpush1.msra.mxu0 0.0
        %3918 = vmatprep.subr.mxu0 0.0
        %3919 = vmatpush1.msra.mxu0 0.0
        %3920 = vmatprep.subr.mxu0 0.0
        %3921 = vmatpush1.msra.mxu0 0.0
        %3922 = vmatprep.subr.mxu0 0.0
        %3923 = vmatpush1.msra.mxu0 0.0
        %3924 = vmatprep.subr.mxu0 0.0
        %3925 = vmatpush1.msra.mxu0 0.0
        %3926 = vmatprep.subr.mxu0 0.0
        %3927 = vmatpush1.msra.mxu0 0.0
        %3928 = vmatprep.subr.mxu0 0.0
        %3929 = vmatpush1.msra.mxu0 0.0
        %3930 = vmatprep.subr.mxu0 0.0
        %3931 = vmatpush1.msra.mxu0 0.0
        %3932 = vmatprep.subr.mxu0 0.0
        %3933 = vmatpush1.msra.mxu0 0.0
        %3934 = vmatprep.subr.mxu0 0.0
        %3935 = vmatpush1.msra.mxu0 0.0
        %3936 = vmatprep.subr.mxu0 0.0
        %3937 = vmatpush1.msra.mxu0 0.0
        %3938 = vmatprep.subr.mxu0 0.0
        %3939 = vmatpush1.msra.mxu0 0.0
        %3940 = vmatprep.subr.mxu0 0.0
        %3941 = vmatpush1.msra.mxu0 0.0
        %3942 = vmatprep.subr.mxu0 0.0
        %3943 = vmatpush1.msra.mxu0 0.0
        %3944 = vmatprep.subr.mxu0 0.0
        %3945 = vmatpush1.msra.mxu0 0.0
        %3946 = vmatprep.subr.mxu0 0.0
        %3947 = vmatpush1.msra.mxu0 0.0
        %3948 = vmatprep.mubr.f32.mxu0 0.0
        %3949 = vmatmul.mubr.f32.gmra.mrb[0].mxu0 %v3654
        %v3950 = vpop.f32.mrb[0].mxu0
        %v3951 = vadd.f32 0.0, %v3950
        %v3952 = vpop.f32.mrb[0].mxu0
        %3953 = vmatprep.mubr.f32.mxu0 0.0
        %3954 = vmatmul.mubr.f32.gmra.mrb[0].mxu0 %v3657
        %v3955 = vpop.f32.mrb[0].mxu0
        %v3956 = vadd.f32 0.0, %v3955
        %v3957 = vpop.f32.mrb[0].mxu0
        %3958 = vdwg.mxu0
        %3959 = vmatprep.subr.mxu0 0.0
        %3960 = vmatpush1.msra.mxu0 %v3596
        %3961 = vmatprep.subr.mxu0 0.0
        %3962 = vmatpush1.msra.mxu0 %v3601
        %3963 = vmatprep.subr.mxu0 0.0
        %3964 = vmatpush1.msra.mxu0 0.0
        %3965 = vmatprep.subr.mxu0 0.0
        %3966 = vmatpush1.msra.mxu0 0.0
        %3967 = vmatprep.subr.mxu0 0.0
        %3968 = vmatpush1.msra.mxu0 0.0
        %3969 = vmatprep.subr.mxu0 0.0
        %3970 = vmatpush1.msra.mxu0 0.0
        %3971 = vmatprep.subr.mxu0 0.0
        %3972 = vmatpush1.msra.mxu0 0.0
        %3973 = vmatprep.subr.mxu0 0.0
        %3974 = vmatpush1.msra.mxu0 0.0
        %3975 = vmatprep.subr.mxu0 0.0
        %3976 = vmatpush1.msra.mxu0 0.0
        %3977 = vmatprep.subr.mxu0 0.0
        %3978 = vmatpush1.msra.mxu0 0.0
        %3979 = vmatprep.subr.mxu0 0.0
        %3980 = vmatpush1.msra.mxu0 0.0
        %3981 = vmatprep.subr.mxu0 0.0
        %3982 = vmatpush1.msra.mxu0 0.0
        %3983 = vmatprep.subr.mxu0 0.0
        %3984 = vmatpush1.msra.mxu0 0.0
        %3985 = vmatprep.subr.mxu0 0.0
        %3986 = vmatpush1.msra.mxu0 0.0
        %3987 = vmatprep.subr.mxu0 0.0
        %3988 = vmatpush1.msra.mxu0 0.0
        %3989 = vmatprep.subr.mxu0 0.0
        %3990 = vmatpush1.msra.mxu0 0.0
        %3991 = vmatprep.subr.mxu0 0.0
        %3992 = vmatpush1.msra.mxu0 0.0
        %3993 = vmatprep.subr.mxu0 0.0
        %3994 = vmatpush1.msra.mxu0 0.0
        %3995 = vmatprep.subr.mxu0 0.0
        %3996 = vmatpush1.msra.mxu0 0.0
        %3997 = vmatprep.subr.mxu0 0.0
        %3998 = vmatpush1.msra.mxu0 0.0
        %3999 = vmatprep.subr.mxu0 0.0
        %4000 = vmatpush1.msra.mxu0 0.0
        %4001 = vmatprep.subr.mxu0 0.0
        %4002 = vmatpush1.msra.mxu0 0.0
        %4003 = vmatprep.subr.mxu0 0.0
        %4004 = vmatpush1.msra.mxu0 0.0
        %4005 = vmatprep.subr.mxu0 0.0
        %4006 = vmatpush1.msra.mxu0 0.0
        %4007 = vmatprep.subr.mxu0 0.0
        %4008 = vmatpush1.msra.mxu0 0.0
        %4009 = vmatprep.subr.mxu0 0.0
        %4010 = vmatpush1.msra.mxu0 0.0
        %4011 = vmatprep.subr.mxu0 0.0
        %4012 = vmatpush1.msra.mxu0 0.0
        %4013 = vmatprep.subr.mxu0 0.0
        %4014 = vmatpush1.msra.mxu0 0.0
        %4015 = vmatprep.subr.mxu0 0.0
        %4016 = vmatpush1.msra.mxu0 0.0
        %4017 = vmatprep.subr.mxu0 0.0
        %4018 = vmatpush1.msra.mxu0 0.0
        %4019 = vmatprep.subr.mxu0 0.0
        %4020 = vmatpush1.msra.mxu0 0.0
        %4021 = vmatprep.subr.mxu0 0.0
        %4022 = vmatpush1.msra.mxu0 0.0
        %4023 = vmatprep.mubr.f32.mxu0 0.0
        %4024 = vmatmul.mubr.f32.gmra.mrb[0].mxu0 %v3654
        %v4025 = vpop.f32.mrb[0].mxu0
        %v4026 = vadd.f32 0.0, %v4025
        %v4027 = vpop.f32.mrb[0].mxu0
        %4028 = vmatprep.mubr.f32.mxu0 0.0
        %4029 = vmatmul.mubr.f32.gmra.mrb[0].mxu0 %v3657
        %v4030 = vpop.f32.mrb[0].mxu0
        %v4031 = vadd.f32 0.0, %v4030
        %v4032 = vpop.f32.mrb[0].mxu0
        %4033 = vdwg.mxu0
        %4034 = vmatprep.subr.mxu0 0.0
        %4035 = vmatpush1.msra.mxu0 %v3606
        %4036 = vmatprep.subr.mxu0 0.0
        %4037 = vmatpush1.msra.mxu0 %v3611
        %4038 = vmatprep.subr.mxu0 0.0
        %4039 = vmatpush1.msra.mxu0 0.0
        %4040 = vmatprep.subr.mxu0 0.0
        %4041 = vmatpush1.msra.mxu0 0.0
        %4042 = vmatprep.subr.mxu0 0.0
        %4043 = vmatpush1.msra.mxu0 0.0
        %4044 = vmatprep.subr.mxu0 0.0
        %4045 = vmatpush1.msra.mxu0 0.0
        %4046 = vmatprep.subr.mxu0 0.0
        %4047 = vmatpush1.msra.mxu0 0.0
        %4048 = vmatprep.subr.mxu0 0.0
        %4049 = vmatpush1.msra.mxu0 0.0
        %4050 = vmatprep.subr.mxu0 0.0
        %4051 = vmatpush1.msra.mxu0 0.0
        %4052 = vmatprep.subr.mxu0 0.0
        %4053 = vmatpush1.msra.mxu0 0.0
        %4054 = vmatprep.subr.mxu0 0.0
        %4055 = vmatpush1.msra.mxu0 0.0
        %4056 = vmatprep.subr.mxu0 0.0
        %4057 = vmatpush1.msra.mxu0 0.0
        %4058 = vmatprep.subr.mxu0 0.0
        %4059 = vmatpush1.msra.mxu0 0.0
        %4060 = vmatprep.subr.mxu0 0.0
        %4061 = vmatpush1.msra.mxu0 0.0
        %4062 = vmatprep.subr.mxu0 0.0
        %4063 = vmatpush1.msra.mxu0 0.0
        %4064 = vmatprep.subr.mxu0 0.0
        %4065 = vmatpush1.msra.mxu0 0.0
        %4066 = vmatprep.subr.mxu0 0.0
        %4067 = vmatpush1.msra.mxu0 0.0
        %4068 = vmatprep.subr.mxu0 0.0
        %4069 = vmatpush1.msra.mxu0 0.0
        %4070 = vmatprep.subr.mxu0 0.0
        %4071 = vmatpush1.msra.mxu0 0.0
        %4072 = vmatprep.subr.mxu0 0.0
        %4073 = vmatpush1.msra.mxu0 0.0
        %4074 = vmatprep.subr.mxu0 0.0
        %4075 = vmatpush1.msra.mxu0 0.0
        %4076 = vmatprep.subr.mxu0 0.0
        %4077 = vmatpush1.msra.mxu0 0.0
        %4078 = vmatprep.subr.mxu0 0.0
        %4079 = vmatpush1.msra.mxu0 0.0
        %4080 = vmatprep.subr.mxu0 0.0
        %4081 = vmatpush1.msra.mxu0 0.0
        %4082 = vmatprep.subr.mxu0 0.0
        %4083 = vmatpush1.msra.mxu0 0.0
        %4084 = vmatprep.subr.mxu0 0.0
        %4085 = vmatpush1.msra.mxu0 0.0
        %4086 = vmatprep.subr.mxu0 0.0
        %4087 = vmatpush1.msra.mxu0 0.0
        %4088 = vmatprep.subr.mxu0 0.0
        %4089 = vmatpush1.msra.mxu0 0.0
        %4090 = vmatprep.subr.mxu0 0.0
        %4091 = vmatpush1.msra.mxu0 0.0
        %4092 = vmatprep.subr.mxu0 0.0
        %4093 = vmatpush1.msra.mxu0 0.0
        %4094 = vmatprep.subr.mxu0 0.0
        %4095 = vmatpush1.msra.mxu0 0.0
        %4096 = vmatprep.subr.mxu0 0.0
        %4097 = vmatpush1.msra.mxu0 0.0
        %4098 = vmatprep.mubr.f32.mxu0 0.0
        %4099 = vmatmul.mubr.f32.gmra.mrb[0].mxu0 %v3654
        %v4100 = vpop.f32.mrb[0].mxu0
        %v4101 = vadd.f32 0.0, %v4100
        %v4102 = vpop.f32.mrb[0].mxu0
        %4103 = vmatprep.mubr.f32.mxu0 0.0
        %4104 = vmatmul.mubr.f32.gmra.mrb[0].mxu0 %v3657
        %v4105 = vpop.f32.mrb[0].mxu0
        %v4106 = vadd.f32 0.0, %v4105
        %v4107 = vpop.f32.mrb[0].mxu0
        %4108 = vdwg.mxu0
        %4109 = vmatprep.subr.mxu0 0.0
        %4110 = vmatpush1.msra.mxu0 %v3616
        %4111 = vmatprep.subr.mxu0 0.0
        %4112 = vmatpush1.msra.mxu0 %v3621
        %4113 = vmatprep.subr.mxu0 0.0
        %4114 = vmatpush1.msra.mxu0 0.0
        %4115 = vmatprep.subr.mxu0 0.0
        %4116 = vmatpush1.msra.mxu0 0.0
        %4117 = vmatprep.subr.mxu0 0.0
        %4118 = vmatpush1.msra.mxu0 0.0
        %4119 = vmatprep.subr.mxu0 0.0
        %4120 = vmatpush1.msra.mxu0 0.0
        %4121 = vmatprep.subr.mxu0 0.0
        %4122 = vmatpush1.msra.mxu0 0.0
        %4123 = vmatprep.subr.mxu0 0.0
        %4124 = vmatpush1.msra.mxu0 0.0
        %4125 = vmatprep.subr.mxu0 0.0
        %4126 = vmatpush1.msra.mxu0 0.0
        %4127 = vmatprep.subr.mxu0 0.0
        %4128 = vmatpush1.msra.mxu0 0.0
        %4129 = vmatprep.subr.mxu0 0.0
        %4130 = vmatpush1.msra.mxu0 0.0
        %4131 = vmatprep.subr.mxu0 0.0
        %4132 = vmatpush1.msra.mxu0 0.0
        %4133 = vmatprep.subr.mxu0 0.0
        %4134 = vmatpush1.msra.mxu0 0.0
        %4135 = vmatprep.subr.mxu0 0.0
        %4136 = vmatpush1.msra.mxu0 0.0
        %4137 = vmatprep.subr.mxu0 0.0
        %4138 = vmatpush1.msra.mxu0 0.0
        %4139 = vmatprep.subr.mxu0 0.0
        %4140 = vmatpush1.msra.mxu0 0.0
        %4141 = vmatprep.subr.mxu0 0.0
        %4142 = vmatpush1.msra.mxu0 0.0
        %4143 = vmatprep.subr.mxu0 0.0
        %4144 = vmatpush1.msra.mxu0 0.0
        %4145 = vmatprep.subr.mxu0 0.0
        %4146 = vmatpush1.msra.mxu0 0.0
        %4147 = vmatprep.subr.mxu0 0.0
        %4148 = vmatpush1.msra.mxu0 0.0
        %4149 = vmatprep.subr.mxu0 0.0
        %4150 = vmatpush1.msra.mxu0 0.0
        %4151 = vmatprep.subr.mxu0 0.0
        %4152 = vmatpush1.msra.mxu0 0.0
        %4153 = vmatprep.subr.mxu0 0.0
        %4154 = vmatpush1.msra.mxu0 0.0
        %4155 = vmatprep.subr.mxu0 0.0
        %4156 = vmatpush1.msra.mxu0 0.0
        %4157 = vmatprep.subr.mxu0 0.0
        %4158 = vmatpush1.msra.mxu0 0.0
        %4159 = vmatprep.subr.mxu0 0.0
        %4160 = vmatpush1.msra.mxu0 0.0
        %4161 = vmatprep.subr.mxu0 0.0
        %4162 = vmatpush1.msra.mxu0 0.0
        %4163 = vmatprep.subr.mxu0 0.0
        %4164 = vmatpush1.msra.mxu0 0.0
        %4165 = vmatprep.subr.mxu0 0.0
        %4166 = vmatpush1.msra.mxu0 0.0
        %4167 = vmatprep.subr.mxu0 0.0
        %4168 = vmatpush1.msra.mxu0 0.0
        %4169 = vmatprep.subr.mxu0 0.0
        %4170 = vmatpush1.msra.mxu0 0.0
        %4171 = vmatprep.subr.mxu0 0.0
        %4172 = vmatpush1.msra.mxu0 0.0
        %4173 = vmatprep.mubr.f32.mxu0 0.0
        %4174 = vmatmul.mubr.f32.gmra.mrb[0].mxu0 %v3654
        %v4175 = vpop.f32.mrb[0].mxu0
        %v4176 = vadd.f32 0.0, %v4175
        %v4177 = vpop.f32.mrb[0].mxu0
        %4178 = vmatprep.mubr.f32.mxu0 0.0
        %4179 = vmatmul.mubr.f32.gmra.mrb[0].mxu0 %v3657
        %v4180 = vpop.f32.mrb[0].mxu0
        %v4181 = vadd.f32 0.0, %v4180
        %v4182 = vpop.f32.mrb[0].mxu0
        %4183 = vdwg.mxu0
        %4184 = vmatprep.subr.mxu0 0.0
        %4185 = vmatpush1.msra.mxu0 %v3626
        %4186 = vmatprep.subr.mxu0 0.0
        %4187 = vmatpush1.msra.mxu0 %v3631
        %4188 = vmatprep.subr.mxu0 0.0
        %4189 = vmatpush1.msra.mxu0 0.0
        %4190 = vmatprep.subr.mxu0 0.0
        %4191 = vmatpush1.msra.mxu0 0.0
        %4192 = vmatprep.subr.mxu0 0.0
        %4193 = vmatpush1.msra.mxu0 0.0
        %4194 = vmatprep.subr.mxu0 0.0
        %4195 = vmatpush1.msra.mxu0 0.0
        %4196 = vmatprep.subr.mxu0 0.0
        %4197 = vmatpush1.msra.mxu0 0.0
        %4198 = vmatprep.subr.mxu0 0.0
        %4199 = vmatpush1.msra.mxu0 0.0
        %4200 = vmatprep.subr.mxu0 0.0
        %4201 = vmatpush1.msra.mxu0 0.0
        %4202 = vmatprep.subr.mxu0 0.0
        %4203 = vmatpush1.msra.mxu0 0.0
        %4204 = vmatprep.subr.mxu0 0.0
        %4205 = vmatpush1.msra.mxu0 0.0
        %4206 = vmatprep.subr.mxu0 0.0
        %4207 = vmatpush1.msra.mxu0 0.0
        %4208 = vmatprep.subr.mxu0 0.0
        %4209 = vmatpush1.msra.mxu0 0.0
        %4210 = vmatprep.subr.mxu0 0.0
        %4211 = vmatpush1.msra.mxu0 0.0
        %4212 = vmatprep.subr.mxu0 0.0
        %4213 = vmatpush1.msra.mxu0 0.0
        %4214 = vmatprep.subr.mxu0 0.0
        %4215 = vmatpush1.msra.mxu0 0.0
        %4216 = vmatprep.subr.mxu0 0.0
        %4217 = vmatpush1.msra.mxu0 0.0
        %4218 = vmatprep.subr.mxu0 0.0
        %4219 = vmatpush1.msra.mxu0 0.0
        %4220 = vmatprep.subr.mxu0 0.0
        %4221 = vmatpush1.msra.mxu0 0.0
        %4222 = vmatprep.subr.mxu0 0.0
        %4223 = vmatpush1.msra.mxu0 0.0
        %4224 = vmatprep.subr.mxu0 0.0
        %4225 = vmatpush1.msra.mxu0 0.0
        %4226 = vmatprep.subr.mxu0 0.0
        %4227 = vmatpush1.msra.mxu0 0.0
        %4228 = vmatprep.subr.mxu0 0.0
        %4229 = vmatpush1.msra.mxu0 0.0
        %4230 = vmatprep.subr.mxu0 0.0
        %4231 = vmatpush1.msra.mxu0 0.0
        %4232 = vmatprep.subr.mxu0 0.0
        %4233 = vmatpush1.msra.mxu0 0.0
        %4234 = vmatprep.subr.mxu0 0.0
        %4235 = vmatpush1.msra.mxu0 0.0
        %4236 = vmatprep.subr.mxu0 0.0
        %4237 = vmatpush1.msra.mxu0 0.0
        %4238 = vmatprep.subr.mxu0 0.0
        %4239 = vmatpush1.msra.mxu0 0.0
        %4240 = vmatprep.subr.mxu0 0.0
        %4241 = vmatpush1.msra.mxu0 0.0
        %4242 = vmatprep.subr.mxu0 0.0
        %4243 = vmatpush1.msra.mxu0 0.0
        %4244 = vmatprep.subr.mxu0 0.0
        %4245 = vmatpush1.msra.mxu0 0.0
        %4246 = vmatprep.subr.mxu0 0.0
        %4247 = vmatpush1.msra.mxu0 0.0
        %4248 = vmatprep.mubr.f32.mxu0 0.0
        %4249 = vmatmul.mubr.f32.gmra.mrb[0].mxu0 %v3654
        %v4250 = vpop.f32.mrb[0].mxu0
        %v4251 = vadd.f32 0.0, %v4250
        %v4252 = vpop.f32.mrb[0].mxu0
        %4253 = vmatprep.mubr.f32.mxu0 0.0
        %4254 = vmatmul.mubr.f32.gmra.mrb[0].mxu0 %v3657
        %v4255 = vpop.f32.mrb[0].mxu0
        %v4256 = vadd.f32 0.0, %v4255
        %v4257 = vpop.f32.mrb[0].mxu0
        %4258 = vdwg.mxu0
        %v4259 = vadd.f32 %v3637, %v3726
        %v4260 = vadd.f32 %v3638, %v3731
        %v4261 = vadd.f32 %v3639, %v3801
        %v4262 = vadd.f32 %v3640, %v3806
        %v4263 = vadd.f32 %v3641, %v3876
        %v4264 = vadd.f32 %v3642, %v3881
        %v4265 = vadd.f32 %v3643, %v3951
        %v4266 = vadd.f32 %v3644, %v3956
        %v4267 = vadd.f32 %v3645, %v4026
        %v4268 = vadd.f32 %v3646, %v4031
        %v4269 = vadd.f32 %v3647, %v4101
        %v4270 = vadd.f32 %v3648, %v4106
        %v4271 = vadd.f32 %v3649, %v4176
        %v4272 = vadd.f32 %v3650, %v4181
        %v4273 = vadd.f32 %v3651, %v4251
        %v4274 = vadd.f32 %v3652, %v4256
        %4275 = vst.msk [vmem:[#allocation2] sm:$0xff] %vm245, %v4259
        %4276 = vst.msk [vmem:[#allocation2 + $0x8] sm:$0xff] %vm245, %v4260
        %4277 = vst.msk [vmem:[#allocation2 + $0x10] sm:$0xff] %vm245, %v4261
        %4278 = vst.msk [vmem:[#allocation2 + $0x18] sm:$0xff] %vm245, %v4262
        %4279 = vst.msk [vmem:[#allocation2 + $0x20] sm:$0xff] %vm245, %v4263
        %4280 = vst.msk [vmem:[#allocation2 + $0x28] sm:$0xff] %vm245, %v4264
        %4281 = vst.msk [vmem:[#allocation2 + $0x30] sm:$0xff] %vm245, %v4265
        %4282 = vst.msk [vmem:[#allocation2 + $0x38] sm:$0xff] %vm245, %v4266
        %4283 = vst.msk [vmem:[#allocation2 + $0x40] sm:$0xff] %vm245, %v4267
        %4284 = vst.msk [vmem:[#allocation2 + $0x48] sm:$0xff] %vm245, %v4268
        %4285 = vst.msk [vmem:[#allocation2 + $0x50] sm:$0xff] %vm245, %v4269
        %4286 = vst.msk [vmem:[#allocation2 + $0x58] sm:$0xff] %vm245, %v4270
        %4287 = vst.msk [vmem:[#allocation2 + $0x60] sm:$0xff] %vm245, %v4271
        %4288 = vst.msk [vmem:[#allocation2 + $0x68] sm:$0xff] %vm245, %v4272
        %4289 = vst.msk [vmem:[#allocation2 + $0x70] sm:$0xff] %vm245, %v4273
        %4290 = vst.msk [vmem:[#allocation2 + $0x78] sm:$0xff] %vm245, %v4274
        %s4291 = scalar_lea.vmem [#allocation6], 32
        %v4292 = vld [vmem:[%s4291] sm:$0xff]
        %v4293 = vld [vmem:[%s4291 + $0x8] sm:$0xff]
        %4294 = vmatprep.subr.mxu0 0.0
        %4295 = vmatpush1.msra.mxu0 %v4292
        %4296 = vmatprep.subr.mxu0 0.0
        %4297 = vmatpush1.msra.mxu0 %v4293
        %4298 = vmatprep.subr.mxu0 0.0
        %4299 = vmatpush1.msra.mxu0 0.0
        %4300 = vmatprep.subr.mxu0 0.0
        %4301 = vmatpush1.msra.mxu0 0.0
        %4302 = vmatprep.subr.mxu0 0.0
        %4303 = vmatpush1.msra.mxu0 0.0
        %4304 = vmatprep.subr.mxu0 0.0
        %4305 = vmatpush1.msra.mxu0 0.0
        %4306 = vmatprep.subr.mxu0 0.0
        %4307 = vmatpush1.msra.mxu0 0.0
        %4308 = vmatprep.subr.mxu0 0.0
        %4309 = vmatpush1.msra.mxu0 0.0
        %4310 = vmatprep.subr.mxu0 0.0
        %4311 = vmatpush1.msra.mxu0 0.0
        %4312 = vmatprep.subr.mxu0 0.0
        %4313 = vmatpush1.msra.mxu0 0.0
        %4314 = vmatprep.subr.mxu0 0.0
        %4315 = vmatpush1.msra.mxu0 0.0
        %4316 = vmatprep.subr.mxu0 0.0
        %4317 = vmatpush1.msra.mxu0 0.0
        %4318 = vmatprep.subr.mxu0 0.0
        %4319 = vmatpush1.msra.mxu0 0.0
        %4320 = vmatprep.subr.mxu0 0.0
        %4321 = vmatpush1.msra.mxu0 0.0
        %4322 = vmatprep.subr.mxu0 0.0
        %4323 = vmatpush1.msra.mxu0 0.0
        %4324 = vmatprep.subr.mxu0 0.0
        %4325 = vmatpush1.msra.mxu0 0.0
        %4326 = vmatprep.subr.mxu0 0.0
        %4327 = vmatpush1.msra.mxu0 0.0
        %4328 = vmatprep.subr.mxu0 0.0
        %4329 = vmatpush1.msra.mxu0 0.0
        %4330 = vmatprep.subr.mxu0 0.0
        %4331 = vmatpush1.msra.mxu0 0.0
        %4332 = vmatprep.subr.mxu0 0.0
        %4333 = vmatpush1.msra.mxu0 0.0
        %4334 = vmatprep.subr.mxu0 0.0
        %4335 = vmatpush1.msra.mxu0 0.0
        %4336 = vmatprep.subr.mxu0 0.0
        %4337 = vmatpush1.msra.mxu0 0.0
        %4338 = vmatprep.subr.mxu0 0.0
        %4339 = vmatpush1.msra.mxu0 0.0
        %4340 = vmatprep.subr.mxu0 0.0
        %4341 = vmatpush1.msra.mxu0 0.0
        %4342 = vmatprep.subr.mxu0 0.0
        %4343 = vmatpush1.msra.mxu0 0.0
        %4344 = vmatprep.subr.mxu0 0.0
        %4345 = vmatpush1.msra.mxu0 0.0
        %4346 = vmatprep.subr.mxu0 0.0
        %4347 = vmatpush1.msra.mxu0 0.0
        %4348 = vmatprep.subr.mxu0 0.0
        %4349 = vmatpush1.msra.mxu0 0.0
        %4350 = vmatprep.subr.mxu0 0.0
        %4351 = vmatpush1.msra.mxu0 0.0
        %4352 = vmatprep.subr.mxu0 0.0
        %4353 = vmatpush1.msra.mxu0 0.0
        %4354 = vmatprep.subr.mxu0 0.0
        %4355 = vmatpush1.msra.mxu0 0.0
        %4356 = vmatprep.subr.mxu0 0.0
        %4357 = vmatpush1.msra.mxu0 0.0
        %4358 = vmatprep.mubr.f32.mxu0 0.0
        %4359 = vmatmul.mubr.f32.gmra.mrb[0].mxu0 %v937
        %v4360 = vpop.f32.mrb[0].mxu0
        %v4361 = vadd.f32 0.0, %v4360
        %v4362 = vpop.f32.mrb[0].mxu0
        %4363 = vmatprep.mubr.f32.mxu0 0.0
        %4364 = vmatmul.mubr.f32.gmra.mrb[0].mxu0 %v940
        %v4365 = vpop.f32.mrb[0].mxu0
        %v4366 = vadd.f32 0.0, %v4365
        %v4367 = vpop.f32.mrb[0].mxu0
        %4368 = vmatprep.mubr.f32.mxu0 0.0
        %4369 = vmatmul.mubr.f32.gmra.mrb[0].mxu0 %v943
        %v4370 = vpop.f32.mrb[0].mxu0
        %v4371 = vadd.f32 0.0, %v4370
        %v4372 = vpop.f32.mrb[0].mxu0
        %4373 = vmatprep.mubr.f32.mxu0 0.0
        %4374 = vmatmul.mubr.f32.gmra.mrb[0].mxu0 %v946
        %v4375 = vpop.f32.mrb[0].mxu0
        %v4376 = vadd.f32 0.0, %v4375
        %v4377 = vpop.f32.mrb[0].mxu0
        %4378 = vmatprep.mubr.f32.mxu0 0.0
        %4379 = vmatmul.mubr.f32.gmra.mrb[0].mxu0 %v949
        %v4380 = vpop.f32.mrb[0].mxu0
        %v4381 = vadd.f32 0.0, %v4380
        %v4382 = vpop.f32.mrb[0].mxu0
        %4383 = vmatprep.mubr.f32.mxu0 0.0
        %4384 = vmatmul.mubr.f32.gmra.mrb[0].mxu0 %v952
        %v4385 = vpop.f32.mrb[0].mxu0
        %v4386 = vadd.f32 0.0, %v4385
        %v4387 = vpop.f32.mrb[0].mxu0
        %4388 = vmatprep.mubr.f32.mxu0 0.0
        %4389 = vmatmul.mubr.f32.gmra.mrb[0].mxu0 %v955
        %v4390 = vpop.f32.mrb[0].mxu0
        %v4391 = vadd.f32 0.0, %v4390
        %v4392 = vpop.f32.mrb[0].mxu0
        %4393 = vmatprep.mubr.f32.mxu0 0.0
        %4394 = vmatmul.mubr.f32.gmra.mrb[0].mxu0 %v958
        %v4395 = vpop.f32.mrb[0].mxu0
        %v4396 = vadd.f32 0.0, %v4395
        %v4397 = vpop.f32.mrb[0].mxu0
        %4398 = vmatprep.mubr.f32.mxu0 0.0
        %4399 = vmatmul.mubr.f32.gmra.mrb[0].mxu0 %v961
        %v4400 = vpop.f32.mrb[0].mxu0
        %v4401 = vadd.f32 0.0, %v4400
        %v4402 = vpop.f32.mrb[0].mxu0
        %4403 = vmatprep.mubr.f32.mxu0 0.0
        %4404 = vmatmul.mubr.f32.gmra.mrb[0].mxu0 %v964
        %v4405 = vpop.f32.mrb[0].mxu0
        %v4406 = vadd.f32 0.0, %v4405
        %v4407 = vpop.f32.mrb[0].mxu0
        %4408 = vmatprep.mubr.f32.mxu0 0.0
        %4409 = vmatmul.mubr.f32.gmra.mrb[0].mxu0 %v967
        %v4410 = vpop.f32.mrb[0].mxu0
        %v4411 = vadd.f32 0.0, %v4410
        %v4412 = vpop.f32.mrb[0].mxu0
        %4413 = vmatprep.mubr.f32.mxu0 0.0
        %4414 = vmatmul.mubr.f32.gmra.mrb[0].mxu0 %v970
        %v4415 = vpop.f32.mrb[0].mxu0
        %v4416 = vadd.f32 0.0, %v4415
        %v4417 = vpop.f32.mrb[0].mxu0
        %4418 = vmatprep.mubr.f32.mxu0 0.0
        %4419 = vmatmul.mubr.f32.gmra.mrb[0].mxu0 %v973
        %v4420 = vpop.f32.mrb[0].mxu0
        %v4421 = vadd.f32 0.0, %v4420
        %v4422 = vpop.f32.mrb[0].mxu0
        %4423 = vmatprep.mubr.f32.mxu0 0.0
        %4424 = vmatmul.mubr.f32.gmra.mrb[0].mxu0 %v976
        %v4425 = vpop.f32.mrb[0].mxu0
        %v4426 = vadd.f32 0.0, %v4425
        %v4427 = vpop.f32.mrb[0].mxu0
        %4428 = vmatprep.mubr.f32.mxu0 0.0
        %4429 = vmatmul.mubr.f32.gmra.mrb[0].mxu0 %v979
        %v4430 = vpop.f32.mrb[0].mxu0
        %v4431 = vadd.f32 0.0, %v4430
        %v4432 = vpop.f32.mrb[0].mxu0
        %4433 = vmatprep.mubr.f32.mxu0 0.0
        %4434 = vmatmul.mubr.f32.gmra.mrb[0].mxu0 %v982
        %v4435 = vpop.f32.mrb[0].mxu0
        %v4436 = vadd.f32 0.0, %v4435
        %v4437 = vpop.f32.mrb[0].mxu0
        %4438 = vdwg.mxu0
        %s4439 = scalar_lea.vmem [#allocation8], 80
        %v4440 = vld [vmem:[%s4439] sm:$0xff]
        %v4441 = vld [vmem:[%s4439 + $0x8] sm:$0xff]
        %v4442 = vld [vmem:[#allocation2] sm:$0xff]
        %v4443 = vld [vmem:[#allocation2 + $0x8] sm:$0xff]
        %v4444 = vld [vmem:[#allocation2 + $0x10] sm:$0xff]
        %v4445 = vld [vmem:[#allocation2 + $0x18] sm:$0xff]
        %v4446 = vld [vmem:[#allocation2 + $0x20] sm:$0xff]
        %v4447 = vld [vmem:[#allocation2 + $0x28] sm:$0xff]
        %v4448 = vld [vmem:[#allocation2 + $0x30] sm:$0xff]
        %v4449 = vld [vmem:[#allocation2 + $0x38] sm:$0xff]
        %v4450 = vld [vmem:[#allocation2 + $0x40] sm:$0xff]
        %v4451 = vld [vmem:[#allocation2 + $0x48] sm:$0xff]
        %v4452 = vld [vmem:[#allocation2 + $0x50] sm:$0xff]
        %v4453 = vld [vmem:[#allocation2 + $0x58] sm:$0xff]
        %v4454 = vld [vmem:[#allocation2 + $0x60] sm:$0xff]
        %v4455 = vld [vmem:[#allocation2 + $0x68] sm:$0xff]
        %v4456 = vld [vmem:[#allocation2 + $0x70] sm:$0xff]
        %v4457 = vld [vmem:[#allocation2 + $0x78] sm:$0xff]
        %v4459 = vsel %vm245, %v4440, 0
        %v4462 = vsel %vm245, %v4441, 0
        %4464 = vmatprep.subr.mxu0 0.0
        %4465 = vmatpush1.msra.mxu0 %v4361
        %4466 = vmatprep.subr.mxu0 0.0
        %4467 = vmatpush1.msra.mxu0 %v4366
        %4468 = vmatprep.subr.mxu0 0.0
        %4469 = vmatpush1.msra.mxu0 0.0
        %4470 = vmatprep.subr.mxu0 0.0
        %4471 = vmatpush1.msra.mxu0 0.0
        %4472 = vmatprep.subr.mxu0 0.0
        %4473 = vmatpush1.msra.mxu0 0.0
        %4474 = vmatprep.subr.mxu0 0.0
        %4475 = vmatpush1.msra.mxu0 0.0
        %4476 = vmatprep.subr.mxu0 0.0
        %4477 = vmatpush1.msra.mxu0 0.0
        %4478 = vmatprep.subr.mxu0 0.0
        %4479 = vmatpush1.msra.mxu0 0.0
        %4480 = vmatprep.subr.mxu0 0.0
        %4481 = vmatpush1.msra.mxu0 0.0
        %4482 = vmatprep.subr.mxu0 0.0
        %4483 = vmatpush1.msra.mxu0 0.0
        %4484 = vmatprep.subr.mxu0 0.0
        %4485 = vmatpush1.msra.mxu0 0.0
        %4486 = vmatprep.subr.mxu0 0.0
        %4487 = vmatpush1.msra.mxu0 0.0
        %4488 = vmatprep.subr.mxu0 0.0
        %4489 = vmatpush1.msra.mxu0 0.0
        %4490 = vmatprep.subr.mxu0 0.0
        %4491 = vmatpush1.msra.mxu0 0.0
        %4492 = vmatprep.subr.mxu0 0.0
        %4493 = vmatpush1.msra.mxu0 0.0
        %4494 = vmatprep.subr.mxu0 0.0
        %4495 = vmatpush1.msra.mxu0 0.0
        %4496 = vmatprep.subr.mxu0 0.0
        %4497 = vmatpush1.msra.mxu0 0.0
        %4498 = vmatprep.subr.mxu0 0.0
        %4499 = vmatpush1.msra.mxu0 0.0
        %4500 = vmatprep.subr.mxu0 0.0
        %4501 = vmatpush1.msra.mxu0 0.0
        %4502 = vmatprep.subr.mxu0 0.0
        %4503 = vmatpush1.msra.mxu0 0.0
        %4504 = vmatprep.subr.mxu0 0.0
        %4505 = vmatpush1.msra.mxu0 0.0
        %4506 = vmatprep.subr.mxu0 0.0
        %4507 = vmatpush1.msra.mxu0 0.0
        %4508 = vmatprep.subr.mxu0 0.0
        %4509 = vmatpush1.msra.mxu0 0.0
        %4510 = vmatprep.subr.mxu0 0.0
        %4511 = vmatpush1.msra.mxu0 0.0
        %4512 = vmatprep.subr.mxu0 0.0
        %4513 = vmatpush1.msra.mxu0 0.0
        %4514 = vmatprep.subr.mxu0 0.0
        %4515 = vmatpush1.msra.mxu0 0.0
        %4516 = vmatprep.subr.mxu0 0.0
        %4517 = vmatpush1.msra.mxu0 0.0
        %4518 = vmatprep.subr.mxu0 0.0
        %4519 = vmatpush1.msra.mxu0 0.0
        %4520 = vmatprep.subr.mxu0 0.0
        %4521 = vmatpush1.msra.mxu0 0.0
        %4522 = vmatprep.subr.mxu0 0.0
        %4523 = vmatpush1.msra.mxu0 0.0
        %4524 = vmatprep.subr.mxu0 0.0
        %4525 = vmatpush1.msra.mxu0 0.0
        %4526 = vmatprep.subr.mxu0 0.0
        %4527 = vmatpush1.msra.mxu0 0.0
        %4528 = vmatprep.mubr.f32.mxu0 0.0
        %4529 = vmatmul.mubr.f32.gmra.mrb[0].mxu0 %v4459
        %v4530 = vpop.f32.mrb[0].mxu0
        %v4531 = vadd.f32 0.0, %v4530
        %v4532 = vpop.f32.mrb[0].mxu0
        %4533 = vmatprep.mubr.f32.mxu0 0.0
        %4534 = vmatmul.mubr.f32.gmra.mrb[0].mxu0 %v4462
        %v4535 = vpop.f32.mrb[0].mxu0
        %v4536 = vadd.f32 0.0, %v4535
        %v4537 = vpop.f32.mrb[0].mxu0
        %4538 = vdwg.mxu0
        %4539 = vmatprep.subr.mxu0 0.0
        %4540 = vmatpush1.msra.mxu0 %v4371
        %4541 = vmatprep.subr.mxu0 0.0
        %4542 = vmatpush1.msra.mxu0 %v4376
        %4543 = vmatprep.subr.mxu0 0.0
        %4544 = vmatpush1.msra.mxu0 0.0
        %4545 = vmatprep.subr.mxu0 0.0
        %4546 = vmatpush1.msra.mxu0 0.0
        %4547 = vmatprep.subr.mxu0 0.0
        %4548 = vmatpush1.msra.mxu0 0.0
        %4549 = vmatprep.subr.mxu0 0.0
        %4550 = vmatpush1.msra.mxu0 0.0
        %4551 = vmatprep.subr.mxu0 0.0
        %4552 = vmatpush1.msra.mxu0 0.0
        %4553 = vmatprep.subr.mxu0 0.0
        %4554 = vmatpush1.msra.mxu0 0.0
        %4555 = vmatprep.subr.mxu0 0.0
        %4556 = vmatpush1.msra.mxu0 0.0
        %4557 = vmatprep.subr.mxu0 0.0
        %4558 = vmatpush1.msra.mxu0 0.0
        %4559 = vmatprep.subr.mxu0 0.0
        %4560 = vmatpush1.msra.mxu0 0.0
        %4561 = vmatprep.subr.mxu0 0.0
        %4562 = vmatpush1.msra.mxu0 0.0
        %4563 = vmatprep.subr.mxu0 0.0
        %4564 = vmatpush1.msra.mxu0 0.0
        %4565 = vmatprep.subr.mxu0 0.0
        %4566 = vmatpush1.msra.mxu0 0.0
        %4567 = vmatprep.subr.mxu0 0.0
        %4568 = vmatpush1.msra.mxu0 0.0
        %4569 = vmatprep.subr.mxu0 0.0
        %4570 = vmatpush1.msra.mxu0 0.0
        %4571 = vmatprep.subr.mxu0 0.0
        %4572 = vmatpush1.msra.mxu0 0.0
        %4573 = vmatprep.subr.mxu0 0.0
        %4574 = vmatpush1.msra.mxu0 0.0
        %4575 = vmatprep.subr.mxu0 0.0
        %4576 = vmatpush1.msra.mxu0 0.0
        %4577 = vmatprep.subr.mxu0 0.0
        %4578 = vmatpush1.msra.mxu0 0.0
        %4579 = vmatprep.subr.mxu0 0.0
        %4580 = vmatpush1.msra.mxu0 0.0
        %4581 = vmatprep.subr.mxu0 0.0
        %4582 = vmatpush1.msra.mxu0 0.0
        %4583 = vmatprep.subr.mxu0 0.0
        %4584 = vmatpush1.msra.mxu0 0.0
        %4585 = vmatprep.subr.mxu0 0.0
        %4586 = vmatpush1.msra.mxu0 0.0
        %4587 = vmatprep.subr.mxu0 0.0
        %4588 = vmatpush1.msra.mxu0 0.0
        %4589 = vmatprep.subr.mxu0 0.0
        %4590 = vmatpush1.msra.mxu0 0.0
        %4591 = vmatprep.subr.mxu0 0.0
        %4592 = vmatpush1.msra.mxu0 0.0
        %4593 = vmatprep.subr.mxu0 0.0
        %4594 = vmatpush1.msra.mxu0 0.0
        %4595 = vmatprep.subr.mxu0 0.0
        %4596 = vmatpush1.msra.mxu0 0.0
        %4597 = vmatprep.subr.mxu0 0.0
        %4598 = vmatpush1.msra.mxu0 0.0
        %4599 = vmatprep.subr.mxu0 0.0
        %4600 = vmatpush1.msra.mxu0 0.0
        %4601 = vmatprep.subr.mxu0 0.0
        %4602 = vmatpush1.msra.mxu0 0.0
        %4603 = vmatprep.mubr.f32.mxu0 0.0
        %4604 = vmatmul.mubr.f32.gmra.mrb[0].mxu0 %v4459
        %v4605 = vpop.f32.mrb[0].mxu0
        %v4606 = vadd.f32 0.0, %v4605
        %v4607 = vpop.f32.mrb[0].mxu0
        %4608 = vmatprep.mubr.f32.mxu0 0.0
        %4609 = vmatmul.mubr.f32.gmra.mrb[0].mxu0 %v4462
        %v4610 = vpop.f32.mrb[0].mxu0
        %v4611 = vadd.f32 0.0, %v4610
        %v4612 = vpop.f32.mrb[0].mxu0
        %4613 = vdwg.mxu0
        %4614 = vmatprep.subr.mxu0 0.0
        %4615 = vmatpush1.msra.mxu0 %v4381
        %4616 = vmatprep.subr.mxu0 0.0
        %4617 = vmatpush1.msra.mxu0 %v4386
        %4618 = vmatprep.subr.mxu0 0.0
        %4619 = vmatpush1.msra.mxu0 0.0
        %4620 = vmatprep.subr.mxu0 0.0
        %4621 = vmatpush1.msra.mxu0 0.0
        %4622 = vmatprep.subr.mxu0 0.0
        %4623 = vmatpush1.msra.mxu0 0.0
        %4624 = vmatprep.subr.mxu0 0.0
        %4625 = vmatpush1.msra.mxu0 0.0
        %4626 = vmatprep.subr.mxu0 0.0
        %4627 = vmatpush1.msra.mxu0 0.0
        %4628 = vmatprep.subr.mxu0 0.0
        %4629 = vmatpush1.msra.mxu0 0.0
        %4630 = vmatprep.subr.mxu0 0.0
        %4631 = vmatpush1.msra.mxu0 0.0
        %4632 = vmatprep.subr.mxu0 0.0
        %4633 = vmatpush1.msra.mxu0 0.0
        %4634 = vmatprep.subr.mxu0 0.0
        %4635 = vmatpush1.msra.mxu0 0.0
        %4636 = vmatprep.subr.mxu0 0.0
        %4637 = vmatpush1.msra.mxu0 0.0
        %4638 = vmatprep.subr.mxu0 0.0
        %4639 = vmatpush1.msra.mxu0 0.0
        %4640 = vmatprep.subr.mxu0 0.0
        %4641 = vmatpush1.msra.mxu0 0.0
        %4642 = vmatprep.subr.mxu0 0.0
        %4643 = vmatpush1.msra.mxu0 0.0
        %4644 = vmatprep.subr.mxu0 0.0
        %4645 = vmatpush1.msra.mxu0 0.0
        %4646 = vmatprep.subr.mxu0 0.0
        %4647 = vmatpush1.msra.mxu0 0.0
        %4648 = vmatprep.subr.mxu0 0.0
        %4649 = vmatpush1.msra.mxu0 0.0
        %4650 = vmatprep.subr.mxu0 0.0
        %4651 = vmatpush1.msra.mxu0 0.0
        %4652 = vmatprep.subr.mxu0 0.0
        %4653 = vmatpush1.msra.mxu0 0.0
        %4654 = vmatprep.subr.mxu0 0.0
        %4655 = vmatpush1.msra.mxu0 0.0
        %4656 = vmatprep.subr.mxu0 0.0
        %4657 = vmatpush1.msra.mxu0 0.0
        %4658 = vmatprep.subr.mxu0 0.0
        %4659 = vmatpush1.msra.mxu0 0.0
        %4660 = vmatprep.subr.mxu0 0.0
        %4661 = vmatpush1.msra.mxu0 0.0
        %4662 = vmatprep.subr.mxu0 0.0
        %4663 = vmatpush1.msra.mxu0 0.0
        %4664 = vmatprep.subr.mxu0 0.0
        %4665 = vmatpush1.msra.mxu0 0.0
        %4666 = vmatprep.subr.mxu0 0.0
        %4667 = vmatpush1.msra.mxu0 0.0
        %4668 = vmatprep.subr.mxu0 0.0
        %4669 = vmatpush1.msra.mxu0 0.0
        %4670 = vmatprep.subr.mxu0 0.0
        %4671 = vmatpush1.msra.mxu0 0.0
        %4672 = vmatprep.subr.mxu0 0.0
        %4673 = vmatpush1.msra.mxu0 0.0
        %4674 = vmatprep.subr.mxu0 0.0
        %4675 = vmatpush1.msra.mxu0 0.0
        %4676 = vmatprep.subr.mxu0 0.0
        %4677 = vmatpush1.msra.mxu0 0.0
        %4678 = vmatprep.mubr.f32.mxu0 0.0
        %4679 = vmatmul.mubr.f32.gmra.mrb[0].mxu0 %v4459
        %v4680 = vpop.f32.mrb[0].mxu0
        %v4681 = vadd.f32 0.0, %v4680
        %v4682 = vpop.f32.mrb[0].mxu0
        %4683 = vmatprep.mubr.f32.mxu0 0.0
        %4684 = vmatmul.mubr.f32.gmra.mrb[0].mxu0 %v4462
        %v4685 = vpop.f32.mrb[0].mxu0
        %v4686 = vadd.f32 0.0, %v4685
        %v4687 = vpop.f32.mrb[0].mxu0
        %4688 = vdwg.mxu0
        %4689 = vmatprep.subr.mxu0 0.0
        %4690 = vmatpush1.msra.mxu0 %v4391
        %4691 = vmatprep.subr.mxu0 0.0
        %4692 = vmatpush1.msra.mxu0 %v4396
        %4693 = vmatprep.subr.mxu0 0.0
        %4694 = vmatpush1.msra.mxu0 0.0
        %4695 = vmatprep.subr.mxu0 0.0
        %4696 = vmatpush1.msra.mxu0 0.0
        %4697 = vmatprep.subr.mxu0 0.0
        %4698 = vmatpush1.msra.mxu0 0.0
        %4699 = vmatprep.subr.mxu0 0.0
        %4700 = vmatpush1.msra.mxu0 0.0
        %4701 = vmatprep.subr.mxu0 0.0
        %4702 = vmatpush1.msra.mxu0 0.0
        %4703 = vmatprep.subr.mxu0 0.0
        %4704 = vmatpush1.msra.mxu0 0.0
        %4705 = vmatprep.subr.mxu0 0.0
        %4706 = vmatpush1.msra.mxu0 0.0
        %4707 = vmatprep.subr.mxu0 0.0
        %4708 = vmatpush1.msra.mxu0 0.0
        %4709 = vmatprep.subr.mxu0 0.0
        %4710 = vmatpush1.msra.mxu0 0.0
        %4711 = vmatprep.subr.mxu0 0.0
        %4712 = vmatpush1.msra.mxu0 0.0
        %4713 = vmatprep.subr.mxu0 0.0
        %4714 = vmatpush1.msra.mxu0 0.0
        %4715 = vmatprep.subr.mxu0 0.0
        %4716 = vmatpush1.msra.mxu0 0.0
        %4717 = vmatprep.subr.mxu0 0.0
        %4718 = vmatpush1.msra.mxu0 0.0
        %4719 = vmatprep.subr.mxu0 0.0
        %4720 = vmatpush1.msra.mxu0 0.0
        %4721 = vmatprep.subr.mxu0 0.0
        %4722 = vmatpush1.msra.mxu0 0.0
        %4723 = vmatprep.subr.mxu0 0.0
        %4724 = vmatpush1.msra.mxu0 0.0
        %4725 = vmatprep.subr.mxu0 0.0
        %4726 = vmatpush1.msra.mxu0 0.0
        %4727 = vmatprep.subr.mxu0 0.0
        %4728 = vmatpush1.msra.mxu0 0.0
        %4729 = vmatprep.subr.mxu0 0.0
        %4730 = vmatpush1.msra.mxu0 0.0
        %4731 = vmatprep.subr.mxu0 0.0
        %4732 = vmatpush1.msra.mxu0 0.0
        %4733 = vmatprep.subr.mxu0 0.0
        %4734 = vmatpush1.msra.mxu0 0.0
        %4735 = vmatprep.subr.mxu0 0.0
        %4736 = vmatpush1.msra.mxu0 0.0
        %4737 = vmatprep.subr.mxu0 0.0
        %4738 = vmatpush1.msra.mxu0 0.0
        %4739 = vmatprep.subr.mxu0 0.0
        %4740 = vmatpush1.msra.mxu0 0.0
        %4741 = vmatprep.subr.mxu0 0.0
        %4742 = vmatpush1.msra.mxu0 0.0
        %4743 = vmatprep.subr.mxu0 0.0
        %4744 = vmatpush1.msra.mxu0 0.0
        %4745 = vmatprep.subr.mxu0 0.0
        %4746 = vmatpush1.msra.mxu0 0.0
        %4747 = vmatprep.subr.mxu0 0.0
        %4748 = vmatpush1.msra.mxu0 0.0
        %4749 = vmatprep.subr.mxu0 0.0
        %4750 = vmatpush1.msra.mxu0 0.0
        %4751 = vmatprep.subr.mxu0 0.0
        %4752 = vmatpush1.msra.mxu0 0.0
        %4753 = vmatprep.mubr.f32.mxu0 0.0
        %4754 = vmatmul.mubr.f32.gmra.mrb[0].mxu0 %v4459
        %v4755 = vpop.f32.mrb[0].mxu0
        %v4756 = vadd.f32 0.0, %v4755
        %v4757 = vpop.f32.mrb[0].mxu0
        %4758 = vmatprep.mubr.f32.mxu0 0.0
        %4759 = vmatmul.mubr.f32.gmra.mrb[0].mxu0 %v4462
        %v4760 = vpop.f32.mrb[0].mxu0
        %v4761 = vadd.f32 0.0, %v4760
        %v4762 = vpop.f32.mrb[0].mxu0
        %4763 = vdwg.mxu0
        %4764 = vmatprep.subr.mxu0 0.0
        %4765 = vmatpush1.msra.mxu0 %v4401
        %4766 = vmatprep.subr.mxu0 0.0
        %4767 = vmatpush1.msra.mxu0 %v4406
        %4768 = vmatprep.subr.mxu0 0.0
        %4769 = vmatpush1.msra.mxu0 0.0
        %4770 = vmatprep.subr.mxu0 0.0
        %4771 = vmatpush1.msra.mxu0 0.0
        %4772 = vmatprep.subr.mxu0 0.0
        %4773 = vmatpush1.msra.mxu0 0.0
        %4774 = vmatprep.subr.mxu0 0.0
        %4775 = vmatpush1.msra.mxu0 0.0
        %4776 = vmatprep.subr.mxu0 0.0
        %4777 = vmatpush1.msra.mxu0 0.0
        %4778 = vmatprep.subr.mxu0 0.0
        %4779 = vmatpush1.msra.mxu0 0.0
        %4780 = vmatprep.subr.mxu0 0.0
        %4781 = vmatpush1.msra.mxu0 0.0
        %4782 = vmatprep.subr.mxu0 0.0
        %4783 = vmatpush1.msra.mxu0 0.0
        %4784 = vmatprep.subr.mxu0 0.0
        %4785 = vmatpush1.msra.mxu0 0.0
        %4786 = vmatprep.subr.mxu0 0.0
        %4787 = vmatpush1.msra.mxu0 0.0
        %4788 = vmatprep.subr.mxu0 0.0
        %4789 = vmatpush1.msra.mxu0 0.0
        %4790 = vmatprep.subr.mxu0 0.0
        %4791 = vmatpush1.msra.mxu0 0.0
        %4792 = vmatprep.subr.mxu0 0.0
        %4793 = vmatpush1.msra.mxu0 0.0
        %4794 = vmatprep.subr.mxu0 0.0
        %4795 = vmatpush1.msra.mxu0 0.0
        %4796 = vmatprep.subr.mxu0 0.0
        %4797 = vmatpush1.msra.mxu0 0.0
        %4798 = vmatprep.subr.mxu0 0.0
        %4799 = vmatpush1.msra.mxu0 0.0
        %4800 = vmatprep.subr.mxu0 0.0
        %4801 = vmatpush1.msra.mxu0 0.0
        %4802 = vmatprep.subr.mxu0 0.0
        %4803 = vmatpush1.msra.mxu0 0.0
        %4804 = vmatprep.subr.mxu0 0.0
        %4805 = vmatpush1.msra.mxu0 0.0
        %4806 = vmatprep.subr.mxu0 0.0
        %4807 = vmatpush1.msra.mxu0 0.0
        %4808 = vmatprep.subr.mxu0 0.0
        %4809 = vmatpush1.msra.mxu0 0.0
        %4810 = vmatprep.subr.mxu0 0.0
        %4811 = vmatpush1.msra.mxu0 0.0
        %4812 = vmatprep.subr.mxu0 0.0
        %4813 = vmatpush1.msra.mxu0 0.0
        %4814 = vmatprep.subr.mxu0 0.0
        %4815 = vmatpush1.msra.mxu0 0.0
        %4816 = vmatprep.subr.mxu0 0.0
        %4817 = vmatpush1.msra.mxu0 0.0
        %4818 = vmatprep.subr.mxu0 0.0
        %4819 = vmatpush1.msra.mxu0 0.0
        %4820 = vmatprep.subr.mxu0 0.0
        %4821 = vmatpush1.msra.mxu0 0.0
        %4822 = vmatprep.subr.mxu0 0.0
        %4823 = vmatpush1.msra.mxu0 0.0
        %4824 = vmatprep.subr.mxu0 0.0
        %4825 = vmatpush1.msra.mxu0 0.0
        %4826 = vmatprep.subr.mxu0 0.0
        %4827 = vmatpush1.msra.mxu0 0.0
        %4828 = vmatprep.mubr.f32.mxu0 0.0
        %4829 = vmatmul.mubr.f32.gmra.mrb[0].mxu0 %v4459
        %v4830 = vpop.f32.mrb[0].mxu0
        %v4831 = vadd.f32 0.0, %v4830
        %v4832 = vpop.f32.mrb[0].mxu0
        %4833 = vmatprep.mubr.f32.mxu0 0.0
        %4834 = vmatmul.mubr.f32.gmra.mrb[0].mxu0 %v4462
        %v4835 = vpop.f32.mrb[0].mxu0
        %v4836 = vadd.f32 0.0, %v4835
        %v4837 = vpop.f32.mrb[0].mxu0
        %4838 = vdwg.mxu0
        %4839 = vmatprep.subr.mxu0 0.0
        %4840 = vmatpush1.msra.mxu0 %v4411
        %4841 = vmatprep.subr.mxu0 0.0
        %4842 = vmatpush1.msra.mxu0 %v4416
        %4843 = vmatprep.subr.mxu0 0.0
        %4844 = vmatpush1.msra.mxu0 0.0
        %4845 = vmatprep.subr.mxu0 0.0
        %4846 = vmatpush1.msra.mxu0 0.0
        %4847 = vmatprep.subr.mxu0 0.0
        %4848 = vmatpush1.msra.mxu0 0.0
        %4849 = vmatprep.subr.mxu0 0.0
        %4850 = vmatpush1.msra.mxu0 0.0
        %4851 = vmatprep.subr.mxu0 0.0
        %4852 = vmatpush1.msra.mxu0 0.0
        %4853 = vmatprep.subr.mxu0 0.0
        %4854 = vmatpush1.msra.mxu0 0.0
        %4855 = vmatprep.subr.mxu0 0.0
        %4856 = vmatpush1.msra.mxu0 0.0
        %4857 = vmatprep.subr.mxu0 0.0
        %4858 = vmatpush1.msra.mxu0 0.0
        %4859 = vmatprep.subr.mxu0 0.0
        %4860 = vmatpush1.msra.mxu0 0.0
        %4861 = vmatprep.subr.mxu0 0.0
        %4862 = vmatpush1.msra.mxu0 0.0
        %4863 = vmatprep.subr.mxu0 0.0
        %4864 = vmatpush1.msra.mxu0 0.0
        %4865 = vmatprep.subr.mxu0 0.0
        %4866 = vmatpush1.msra.mxu0 0.0
        %4867 = vmatprep.subr.mxu0 0.0
        %4868 = vmatpush1.msra.mxu0 0.0
        %4869 = vmatprep.subr.mxu0 0.0
        %4870 = vmatpush1.msra.mxu0 0.0
        %4871 = vmatprep.subr.mxu0 0.0
        %4872 = vmatpush1.msra.mxu0 0.0
        %4873 = vmatprep.subr.mxu0 0.0
        %4874 = vmatpush1.msra.mxu0 0.0
        %4875 = vmatprep.subr.mxu0 0.0
        %4876 = vmatpush1.msra.mxu0 0.0
        %4877 = vmatprep.subr.mxu0 0.0
        %4878 = vmatpush1.msra.mxu0 0.0
        %4879 = vmatprep.subr.mxu0 0.0
        %4880 = vmatpush1.msra.mxu0 0.0
        %4881 = vmatprep.subr.mxu0 0.0
        %4882 = vmatpush1.msra.mxu0 0.0
        %4883 = vmatprep.subr.mxu0 0.0
        %4884 = vmatpush1.msra.mxu0 0.0
        %4885 = vmatprep.subr.mxu0 0.0
        %4886 = vmatpush1.msra.mxu0 0.0
        %4887 = vmatprep.subr.mxu0 0.0
        %4888 = vmatpush1.msra.mxu0 0.0
        %4889 = vmatprep.subr.mxu0 0.0
        %4890 = vmatpush1.msra.mxu0 0.0
        %4891 = vmatprep.subr.mxu0 0.0
        %4892 = vmatpush1.msra.mxu0 0.0
        %4893 = vmatprep.subr.mxu0 0.0
        %4894 = vmatpush1.msra.mxu0 0.0
        %4895 = vmatprep.subr.mxu0 0.0
        %4896 = vmatpush1.msra.mxu0 0.0
        %4897 = vmatprep.subr.mxu0 0.0
        %4898 = vmatpush1.msra.mxu0 0.0
        %4899 = vmatprep.subr.mxu0 0.0
        %4900 = vmatpush1.msra.mxu0 0.0
        %4901 = vmatprep.subr.mxu0 0.0
        %4902 = vmatpush1.msra.mxu0 0.0
        %4903 = vmatprep.mubr.f32.mxu0 0.0
        %4904 = vmatmul.mubr.f32.gmra.mrb[0].mxu0 %v4459
        %v4905 = vpop.f32.mrb[0].mxu0
        %v4906 = vadd.f32 0.0, %v4905
        %v4907 = vpop.f32.mrb[0].mxu0
        %4908 = vmatprep.mubr.f32.mxu0 0.0
        %4909 = vmatmul.mubr.f32.gmra.mrb[0].mxu0 %v4462
        %v4910 = vpop.f32.mrb[0].mxu0
        %v4911 = vadd.f32 0.0, %v4910
        %v4912 = vpop.f32.mrb[0].mxu0
        %4913 = vdwg.mxu0
        %4914 = vmatprep.subr.mxu0 0.0
        %4915 = vmatpush1.msra.mxu0 %v4421
        %4916 = vmatprep.subr.mxu0 0.0
        %4917 = vmatpush1.msra.mxu0 %v4426
        %4918 = vmatprep.subr.mxu0 0.0
        %4919 = vmatpush1.msra.mxu0 0.0
        %4920 = vmatprep.subr.mxu0 0.0
        %4921 = vmatpush1.msra.mxu0 0.0
        %4922 = vmatprep.subr.mxu0 0.0
        %4923 = vmatpush1.msra.mxu0 0.0
        %4924 = vmatprep.subr.mxu0 0.0
        %4925 = vmatpush1.msra.mxu0 0.0
        %4926 = vmatprep.subr.mxu0 0.0
        %4927 = vmatpush1.msra.mxu0 0.0
        %4928 = vmatprep.subr.mxu0 0.0
        %4929 = vmatpush1.msra.mxu0 0.0
        %4930 = vmatprep.subr.mxu0 0.0
        %4931 = vmatpush1.msra.mxu0 0.0
        %4932 = vmatprep.subr.mxu0 0.0
        %4933 = vmatpush1.msra.mxu0 0.0
        %4934 = vmatprep.subr.mxu0 0.0
        %4935 = vmatpush1.msra.mxu0 0.0
        %4936 = vmatprep.subr.mxu0 0.0
        %4937 = vmatpush1.msra.mxu0 0.0
        %4938 = vmatprep.subr.mxu0 0.0
        %4939 = vmatpush1.msra.mxu0 0.0
        %4940 = vmatprep.subr.mxu0 0.0
        %4941 = vmatpush1.msra.mxu0 0.0
        %4942 = vmatprep.subr.mxu0 0.0
        %4943 = vmatpush1.msra.mxu0 0.0
        %4944 = vmatprep.subr.mxu0 0.0
        %4945 = vmatpush1.msra.mxu0 0.0
        %4946 = vmatprep.subr.mxu0 0.0
        %4947 = vmatpush1.msra.mxu0 0.0
        %4948 = vmatprep.subr.mxu0 0.0
        %4949 = vmatpush1.msra.mxu0 0.0
        %4950 = vmatprep.subr.mxu0 0.0
        %4951 = vmatpush1.msra.mxu0 0.0
        %4952 = vmatprep.subr.mxu0 0.0
        %4953 = vmatpush1.msra.mxu0 0.0
        %4954 = vmatprep.subr.mxu0 0.0
        %4955 = vmatpush1.msra.mxu0 0.0
        %4956 = vmatprep.subr.mxu0 0.0
        %4957 = vmatpush1.msra.mxu0 0.0
        %4958 = vmatprep.subr.mxu0 0.0
        %4959 = vmatpush1.msra.mxu0 0.0
        %4960 = vmatprep.subr.mxu0 0.0
        %4961 = vmatpush1.msra.mxu0 0.0
        %4962 = vmatprep.subr.mxu0 0.0
        %4963 = vmatpush1.msra.mxu0 0.0
        %4964 = vmatprep.subr.mxu0 0.0
        %4965 = vmatpush1.msra.mxu0 0.0
        %4966 = vmatprep.subr.mxu0 0.0
        %4967 = vmatpush1.msra.mxu0 0.0
        %4968 = vmatprep.subr.mxu0 0.0
        %4969 = vmatpush1.msra.mxu0 0.0
        %4970 = vmatprep.subr.mxu0 0.0
        %4971 = vmatpush1.msra.mxu0 0.0
        %4972 = vmatprep.subr.mxu0 0.0
        %4973 = vmatpush1.msra.mxu0 0.0
        %4974 = vmatprep.subr.mxu0 0.0
        %4975 = vmatpush1.msra.mxu0 0.0
        %4976 = vmatprep.subr.mxu0 0.0
        %4977 = vmatpush1.msra.mxu0 0.0
        %4978 = vmatprep.mubr.f32.mxu0 0.0
        %4979 = vmatmul.mubr.f32.gmra.mrb[0].mxu0 %v4459
        %v4980 = vpop.f32.mrb[0].mxu0
        %v4981 = vadd.f32 0.0, %v4980
        %v4982 = vpop.f32.mrb[0].mxu0
        %4983 = vmatprep.mubr.f32.mxu0 0.0
        %4984 = vmatmul.mubr.f32.gmra.mrb[0].mxu0 %v4462
        %v4985 = vpop.f32.mrb[0].mxu0
        %v4986 = vadd.f32 0.0, %v4985
        %v4987 = vpop.f32.mrb[0].mxu0
        %4988 = vdwg.mxu0
        %4989 = vmatprep.subr.mxu0 0.0
        %4990 = vmatpush1.msra.mxu0 %v4431
        %4991 = vmatprep.subr.mxu0 0.0
        %4992 = vmatpush1.msra.mxu0 %v4436
        %4993 = vmatprep.subr.mxu0 0.0
        %4994 = vmatpush1.msra.mxu0 0.0
        %4995 = vmatprep.subr.mxu0 0.0
        %4996 = vmatpush1.msra.mxu0 0.0
        %4997 = vmatprep.subr.mxu0 0.0
        %4998 = vmatpush1.msra.mxu0 0.0
        %4999 = vmatprep.subr.mxu0 0.0
        %5000 = vmatpush1.msra.mxu0 0.0
        %5001 = vmatprep.subr.mxu0 0.0
        %5002 = vmatpush1.msra.mxu0 0.0
        %5003 = vmatprep.subr.mxu0 0.0
        %5004 = vmatpush1.msra.mxu0 0.0
        %5005 = vmatprep.subr.mxu0 0.0
        %5006 = vmatpush1.msra.mxu0 0.0
        %5007 = vmatprep.subr.mxu0 0.0
        %5008 = vmatpush1.msra.mxu0 0.0
        %5009 = vmatprep.subr.mxu0 0.0
        %5010 = vmatpush1.msra.mxu0 0.0
        %5011 = vmatprep.subr.mxu0 0.0
        %5012 = vmatpush1.msra.mxu0 0.0
        %5013 = vmatprep.subr.mxu0 0.0
        %5014 = vmatpush1.msra.mxu0 0.0
        %5015 = vmatprep.subr.mxu0 0.0
        %5016 = vmatpush1.msra.mxu0 0.0
        %5017 = vmatprep.subr.mxu0 0.0
        %5018 = vmatpush1.msra.mxu0 0.0
        %5019 = vmatprep.subr.mxu0 0.0
        %5020 = vmatpush1.msra.mxu0 0.0
        %5021 = vmatprep.subr.mxu0 0.0
        %5022 = vmatpush1.msra.mxu0 0.0
        %5023 = vmatprep.subr.mxu0 0.0
        %5024 = vmatpush1.msra.mxu0 0.0
        %5025 = vmatprep.subr.mxu0 0.0
        %5026 = vmatpush1.msra.mxu0 0.0
        %5027 = vmatprep.subr.mxu0 0.0
        %5028 = vmatpush1.msra.mxu0 0.0
        %5029 = vmatprep.subr.mxu0 0.0
        %5030 = vmatpush1.msra.mxu0 0.0
        %5031 = vmatprep.subr.mxu0 0.0
        %5032 = vmatpush1.msra.mxu0 0.0
        %5033 = vmatprep.subr.mxu0 0.0
        %5034 = vmatpush1.msra.mxu0 0.0
        %5035 = vmatprep.subr.mxu0 0.0
        %5036 = vmatpush1.msra.mxu0 0.0
        %5037 = vmatprep.subr.mxu0 0.0
        %5038 = vmatpush1.msra.mxu0 0.0
        %5039 = vmatprep.subr.mxu0 0.0
        %5040 = vmatpush1.msra.mxu0 0.0
        %5041 = vmatprep.subr.mxu0 0.0
        %5042 = vmatpush1.msra.mxu0 0.0
        %5043 = vmatprep.subr.mxu0 0.0
        %5044 = vmatpush1.msra.mxu0 0.0
        %5045 = vmatprep.subr.mxu0 0.0
        %5046 = vmatpush1.msra.mxu0 0.0
        %5047 = vmatprep.subr.mxu0 0.0
        %5048 = vmatpush1.msra.mxu0 0.0
        %5049 = vmatprep.subr.mxu0 0.0
        %5050 = vmatpush1.msra.mxu0 0.0
        %5051 = vmatprep.subr.mxu0 0.0
        %5052 = vmatpush1.msra.mxu0 0.0
        %5053 = vmatprep.mubr.f32.mxu0 0.0
        %5054 = vmatmul.mubr.f32.gmra.mrb[0].mxu0 %v4459
        %v5055 = vpop.f32.mrb[0].mxu0
        %v5056 = vadd.f32 0.0, %v5055
        %v5057 = vpop.f32.mrb[0].mxu0
        %5058 = vmatprep.mubr.f32.mxu0 0.0
        %5059 = vmatmul.mubr.f32.gmra.mrb[0].mxu0 %v4462
        %v5060 = vpop.f32.mrb[0].mxu0
        %v5061 = vadd.f32 0.0, %v5060
        %v5062 = vpop.f32.mrb[0].mxu0
        %5063 = vdwg.mxu0
        %v5064 = vadd.f32 %v4442, %v4531
        %v5065 = vadd.f32 %v4443, %v4536
        %v5066 = vadd.f32 %v4444, %v4606
        %v5067 = vadd.f32 %v4445, %v4611
        %v5068 = vadd.f32 %v4446, %v4681
        %v5069 = vadd.f32 %v4447, %v4686
        %v5070 = vadd.f32 %v4448, %v4756
        %v5071 = vadd.f32 %v4449, %v4761
        %v5072 = vadd.f32 %v4450, %v4831
        %v5073 = vadd.f32 %v4451, %v4836
        %v5074 = vadd.f32 %v4452, %v4906
        %v5075 = vadd.f32 %v4453, %v4911
        %v5076 = vadd.f32 %v4454, %v4981
        %v5077 = vadd.f32 %v4455, %v4986
        %v5078 = vadd.f32 %v4456, %v5056
        %v5079 = vadd.f32 %v4457, %v5061
        %5080 = vst.msk [vmem:[#allocation2] sm:$0xff] %vm245, %v5064
        %5081 = vst.msk [vmem:[#allocation2 + $0x8] sm:$0xff] %vm245, %v5065
        %5082 = vst.msk [vmem:[#allocation2 + $0x10] sm:$0xff] %vm245, %v5066
        %5083 = vst.msk [vmem:[#allocation2 + $0x18] sm:$0xff] %vm245, %v5067
        %5084 = vst.msk [vmem:[#allocation2 + $0x20] sm:$0xff] %vm245, %v5068
        %5085 = vst.msk [vmem:[#allocation2 + $0x28] sm:$0xff] %vm245, %v5069
        %5086 = vst.msk [vmem:[#allocation2 + $0x30] sm:$0xff] %vm245, %v5070
        %5087 = vst.msk [vmem:[#allocation2 + $0x38] sm:$0xff] %vm245, %v5071
        %5088 = vst.msk [vmem:[#allocation2 + $0x40] sm:$0xff] %vm245, %v5072
        %5089 = vst.msk [vmem:[#allocation2 + $0x48] sm:$0xff] %vm245, %v5073
        %5090 = vst.msk [vmem:[#allocation2 + $0x50] sm:$0xff] %vm245, %v5074
        %5091 = vst.msk [vmem:[#allocation2 + $0x58] sm:$0xff] %vm245, %v5075
        %5092 = vst.msk [vmem:[#allocation2 + $0x60] sm:$0xff] %vm245, %v5076
        %5093 = vst.msk [vmem:[#allocation2 + $0x68] sm:$0xff] %vm245, %v5077
        %5094 = vst.msk [vmem:[#allocation2 + $0x70] sm:$0xff] %vm245, %v5078
        %5095 = vst.msk [vmem:[#allocation2 + $0x78] sm:$0xff] %vm245, %v5079
        %v5097 = vsel %vm245, %v4361, 0
        %v5100 = vsel %vm245, %v4366, 0
        %v5103 = vsel %vm245, %v4371, 0
        %v5106 = vsel %vm245, %v4376, 0
        %v5109 = vsel %vm245, %v4381, 0
        %v5112 = vsel %vm245, %v4386, 0
        %v5115 = vsel %vm245, %v4391, 0
        %v5118 = vsel %vm245, %v4396, 0
        %v5121 = vsel %vm245, %v4401, 0
        %v5124 = vsel %vm245, %v4406, 0
        %v5127 = vsel %vm245, %v4411, 0
        %v5130 = vsel %vm245, %v4416, 0
        %v5133 = vsel %vm245, %v4421, 0
        %v5136 = vsel %vm245, %v4426, 0
        %v5139 = vsel %vm245, %v4431, 0
        %v5142 = vsel %vm245, %v4436, 0
        %5144 = vmatprep.subr.mxu0 0.0
        %5145 = vmatpush1.msra.mxu0 %v4292
        %5146 = vmatprep.subr.mxu0 0.0
        %5147 = vmatpush1.msra.mxu0 %v4293
        %5148 = vmatprep.subr.mxu0 0.0
        %5149 = vmatpush1.msra.mxu0 0.0
        %5150 = vmatprep.subr.mxu0 0.0
        %5151 = vmatpush1.msra.mxu0 0.0
        %5152 = vmatprep.subr.mxu0 0.0
        %5153 = vmatpush1.msra.mxu0 0.0
        %5154 = vmatprep.subr.mxu0 0.0
        %5155 = vmatpush1.msra.mxu0 0.0
        %5156 = vmatprep.subr.mxu0 0.0
        %5157 = vmatpush1.msra.mxu0 0.0
        %5158 = vmatprep.subr.mxu0 0.0
        %5159 = vmatpush1.msra.mxu0 0.0
        %5160 = vmatprep.subr.mxu0 0.0
        %5161 = vmatpush1.msra.mxu0 0.0
        %5162 = vmatprep.subr.mxu0 0.0
        %5163 = vmatpush1.msra.mxu0 0.0
        %5164 = vmatprep.subr.mxu0 0.0
        %5165 = vmatpush1.msra.mxu0 0.0
        %5166 = vmatprep.subr.mxu0 0.0
        %5167 = vmatpush1.msra.mxu0 0.0
        %5168 = vmatprep.subr.mxu0 0.0
        %5169 = vmatpush1.msra.mxu0 0.0
        %5170 = vmatprep.subr.mxu0 0.0
        %5171 = vmatpush1.msra.mxu0 0.0
        %5172 = vmatprep.subr.mxu0 0.0
        %5173 = vmatpush1.msra.mxu0 0.0
        %5174 = vmatprep.subr.mxu0 0.0
        %5175 = vmatpush1.msra.mxu0 0.0
        %5176 = vmatprep.subr.mxu0 0.0
        %5177 = vmatpush1.msra.mxu0 0.0
        %5178 = vmatprep.subr.mxu0 0.0
        %5179 = vmatpush1.msra.mxu0 0.0
        %5180 = vmatprep.subr.mxu0 0.0
        %5181 = vmatpush1.msra.mxu0 0.0
        %5182 = vmatprep.subr.mxu0 0.0
        %5183 = vmatpush1.msra.mxu0 0.0
        %5184 = vmatprep.subr.mxu0 0.0
        %5185 = vmatpush1.msra.mxu0 0.0
        %5186 = vmatprep.subr.mxu0 0.0
        %5187 = vmatpush1.msra.mxu0 0.0
        %5188 = vmatprep.subr.mxu0 0.0
        %5189 = vmatpush1.msra.mxu0 0.0
        %5190 = vmatprep.subr.mxu0 0.0
        %5191 = vmatpush1.msra.mxu0 0.0
        %5192 = vmatprep.subr.mxu0 0.0
        %5193 = vmatpush1.msra.mxu0 0.0
        %5194 = vmatprep.subr.mxu0 0.0
        %5195 = vmatpush1.msra.mxu0 0.0
        %5196 = vmatprep.subr.mxu0 0.0
        %5197 = vmatpush1.msra.mxu0 0.0
        %5198 = vmatprep.subr.mxu0 0.0
        %5199 = vmatpush1.msra.mxu0 0.0
        %5200 = vmatprep.subr.mxu0 0.0
        %5201 = vmatpush1.msra.mxu0 0.0
        %5202 = vmatprep.subr.mxu0 0.0
        %5203 = vmatpush1.msra.mxu0 0.0
        %5204 = vmatprep.subr.mxu0 0.0
        %5205 = vmatpush1.msra.mxu0 0.0
        %5206 = vmatprep.subr.mxu0 0.0
        %5207 = vmatpush1.msra.mxu0 0.0
        %5208 = vmatprep.mubr.f32.mxu0 0.0
        %5209 = vmatmul.mubr.f32.gmra.mrb[0].mxu0 %v5097
        %v5210 = vpop.f32.mrb[0].mxu0
        %v5211 = vadd.f32 0.0, %v5210
        %v5212 = vpop.f32.mrb[0].mxu0
        %5213 = vmatprep.mubr.f32.mxu0 0.0
        %5214 = vmatmul.mubr.f32.gmra.mrb[0].mxu0 %v5100
        %v5215 = vpop.f32.mrb[0].mxu0
        %v5216 = vadd.f32 0.0, %v5215
        %v5217 = vpop.f32.mrb[0].mxu0
        %5218 = vmatprep.mubr.f32.mxu0 0.0
        %5219 = vmatmul.mubr.f32.gmra.mrb[0].mxu0 %v5103
        %v5220 = vpop.f32.mrb[0].mxu0
        %v5221 = vadd.f32 0.0, %v5220
        %v5222 = vpop.f32.mrb[0].mxu0
        %5223 = vmatprep.mubr.f32.mxu0 0.0
        %5224 = vmatmul.mubr.f32.gmra.mrb[0].mxu0 %v5106
        %v5225 = vpop.f32.mrb[0].mxu0
        %v5226 = vadd.f32 0.0, %v5225
        %v5227 = vpop.f32.mrb[0].mxu0
        %5228 = vmatprep.mubr.f32.mxu0 0.0
        %5229 = vmatmul.mubr.f32.gmra.mrb[0].mxu0 %v5109
        %v5230 = vpop.f32.mrb[0].mxu0
        %v5231 = vadd.f32 0.0, %v5230
        %v5232 = vpop.f32.mrb[0].mxu0
        %5233 = vmatprep.mubr.f32.mxu0 0.0
        %5234 = vmatmul.mubr.f32.gmra.mrb[0].mxu0 %v5112
        %v5235 = vpop.f32.mrb[0].mxu0
        %v5236 = vadd.f32 0.0, %v5235
        %v5237 = vpop.f32.mrb[0].mxu0
        %5238 = vmatprep.mubr.f32.mxu0 0.0
        %5239 = vmatmul.mubr.f32.gmra.mrb[0].mxu0 %v5115
        %v5240 = vpop.f32.mrb[0].mxu0
        %v5241 = vadd.f32 0.0, %v5240
        %v5242 = vpop.f32.mrb[0].mxu0
        %5243 = vmatprep.mubr.f32.mxu0 0.0
        %5244 = vmatmul.mubr.f32.gmra.mrb[0].mxu0 %v5118
        %v5245 = vpop.f32.mrb[0].mxu0
        %v5246 = vadd.f32 0.0, %v5245
        %v5247 = vpop.f32.mrb[0].mxu0
        %5248 = vmatprep.mubr.f32.mxu0 0.0
        %5249 = vmatmul.mubr.f32.gmra.mrb[0].mxu0 %v5121
        %v5250 = vpop.f32.mrb[0].mxu0
        %v5251 = vadd.f32 0.0, %v5250
        %v5252 = vpop.f32.mrb[0].mxu0
        %5253 = vmatprep.mubr.f32.mxu0 0.0
        %5254 = vmatmul.mubr.f32.gmra.mrb[0].mxu0 %v5124
        %v5255 = vpop.f32.mrb[0].mxu0
        %v5256 = vadd.f32 0.0, %v5255
        %v5257 = vpop.f32.mrb[0].mxu0
        %5258 = vmatprep.mubr.f32.mxu0 0.0
        %5259 = vmatmul.mubr.f32.gmra.mrb[0].mxu0 %v5127
        %v5260 = vpop.f32.mrb[0].mxu0
        %v5261 = vadd.f32 0.0, %v5260
        %v5262 = vpop.f32.mrb[0].mxu0
        %5263 = vmatprep.mubr.f32.mxu0 0.0
        %5264 = vmatmul.mubr.f32.gmra.mrb[0].mxu0 %v5130
        %v5265 = vpop.f32.mrb[0].mxu0
        %v5266 = vadd.f32 0.0, %v5265
        %v5267 = vpop.f32.mrb[0].mxu0
        %5268 = vmatprep.mubr.f32.mxu0 0.0
        %5269 = vmatmul.mubr.f32.gmra.mrb[0].mxu0 %v5133
        %v5270 = vpop.f32.mrb[0].mxu0
        %v5271 = vadd.f32 0.0, %v5270
        %v5272 = vpop.f32.mrb[0].mxu0
        %5273 = vmatprep.mubr.f32.mxu0 0.0
        %5274 = vmatmul.mubr.f32.gmra.mrb[0].mxu0 %v5136
        %v5275 = vpop.f32.mrb[0].mxu0
        %v5276 = vadd.f32 0.0, %v5275
        %v5277 = vpop.f32.mrb[0].mxu0
        %5278 = vmatprep.mubr.f32.mxu0 0.0
        %5279 = vmatmul.mubr.f32.gmra.mrb[0].mxu0 %v5139
        %v5280 = vpop.f32.mrb[0].mxu0
        %v5281 = vadd.f32 0.0, %v5280
        %v5282 = vpop.f32.mrb[0].mxu0
        %5283 = vmatprep.mubr.f32.mxu0 0.0
        %5284 = vmatmul.mubr.f32.gmra.mrb[0].mxu0 %v5142
        %v5285 = vpop.f32.mrb[0].mxu0
        %v5286 = vadd.f32 0.0, %v5285
        %v5287 = vpop.f32.mrb[0].mxu0
        %5288 = vdwg.mxu0
        %s5289 = scalar_lea.vmem [#allocation8], 96
        %v5290 = vld [vmem:[%s5289] sm:$0xff]
        %v5291 = vld [vmem:[%s5289 + $0x8] sm:$0xff]
        %v5292 = vld [vmem:[#allocation2] sm:$0xff]
        %v5293 = vld [vmem:[#allocation2 + $0x8] sm:$0xff]
        %v5294 = vld [vmem:[#allocation2 + $0x10] sm:$0xff]
        %v5295 = vld [vmem:[#allocation2 + $0x18] sm:$0xff]
        %v5296 = vld [vmem:[#allocation2 + $0x20] sm:$0xff]
        %v5297 = vld [vmem:[#allocation2 + $0x28] sm:$0xff]
        %v5298 = vld [vmem:[#allocation2 + $0x30] sm:$0xff]
        %v5299 = vld [vmem:[#allocation2 + $0x38] sm:$0xff]
        %v5300 = vld [vmem:[#allocation2 + $0x40] sm:$0xff]
        %v5301 = vld [vmem:[#allocation2 + $0x48] sm:$0xff]
        %v5302 = vld [vmem:[#allocation2 + $0x50] sm:$0xff]
        %v5303 = vld [vmem:[#allocation2 + $0x58] sm:$0xff]
        %v5304 = vld [vmem:[#allocation2 + $0x60] sm:$0xff]
        %v5305 = vld [vmem:[#allocation2 + $0x68] sm:$0xff]
        %v5306 = vld [vmem:[#allocation2 + $0x70] sm:$0xff]
        %v5307 = vld [vmem:[#allocation2 + $0x78] sm:$0xff]
        %v5309 = vsel %vm245, %v5290, 0
        %v5312 = vsel %vm245, %v5291, 0
        %5314 = vmatprep.subr.mxu0 0.0
        %5315 = vmatpush1.msra.mxu0 %v5211
        %5316 = vmatprep.subr.mxu0 0.0
        %5317 = vmatpush1.msra.mxu0 %v5216
        %5318 = vmatprep.subr.mxu0 0.0
        %5319 = vmatpush1.msra.mxu0 0.0
        %5320 = vmatprep.subr.mxu0 0.0
        %5321 = vmatpush1.msra.mxu0 0.0
        %5322 = vmatprep.subr.mxu0 0.0
        %5323 = vmatpush1.msra.mxu0 0.0
        %5324 = vmatprep.subr.mxu0 0.0
        %5325 = vmatpush1.msra.mxu0 0.0
        %5326 = vmatprep.subr.mxu0 0.0
        %5327 = vmatpush1.msra.mxu0 0.0
        %5328 = vmatprep.subr.mxu0 0.0
        %5329 = vmatpush1.msra.mxu0 0.0
        %5330 = vmatprep.subr.mxu0 0.0
        %5331 = vmatpush1.msra.mxu0 0.0
        %5332 = vmatprep.subr.mxu0 0.0
        %5333 = vmatpush1.msra.mxu0 0.0
        %5334 = vmatprep.subr.mxu0 0.0
        %5335 = vmatpush1.msra.mxu0 0.0
        %5336 = vmatprep.subr.mxu0 0.0
        %5337 = vmatpush1.msra.mxu0 0.0
        %5338 = vmatprep.subr.mxu0 0.0
        %5339 = vmatpush1.msra.mxu0 0.0
        %5340 = vmatprep.subr.mxu0 0.0
        %5341 = vmatpush1.msra.mxu0 0.0
        %5342 = vmatprep.subr.mxu0 0.0
        %5343 = vmatpush1.msra.mxu0 0.0
        %5344 = vmatprep.subr.mxu0 0.0
        %5345 = vmatpush1.msra.mxu0 0.0
        %5346 = vmatprep.subr.mxu0 0.0
        %5347 = vmatpush1.msra.mxu0 0.0
        %5348 = vmatprep.subr.mxu0 0.0
        %5349 = vmatpush1.msra.mxu0 0.0
        %5350 = vmatprep.subr.mxu0 0.0
        %5351 = vmatpush1.msra.mxu0 0.0
        %5352 = vmatprep.subr.mxu0 0.0
        %5353 = vmatpush1.msra.mxu0 0.0
        %5354 = vmatprep.subr.mxu0 0.0
        %5355 = vmatpush1.msra.mxu0 0.0
        %5356 = vmatprep.subr.mxu0 0.0
        %5357 = vmatpush1.msra.mxu0 0.0
        %5358 = vmatprep.subr.mxu0 0.0
        %5359 = vmatpush1.msra.mxu0 0.0
        %5360 = vmatprep.subr.mxu0 0.0
        %5361 = vmatpush1.msra.mxu0 0.0
        %5362 = vmatprep.subr.mxu0 0.0
        %5363 = vmatpush1.msra.mxu0 0.0
        %5364 = vmatprep.subr.mxu0 0.0
        %5365 = vmatpush1.msra.mxu0 0.0
        %5366 = vmatprep.subr.mxu0 0.0
        %5367 = vmatpush1.msra.mxu0 0.0
        %5368 = vmatprep.subr.mxu0 0.0
        %5369 = vmatpush1.msra.mxu0 0.0
        %5370 = vmatprep.subr.mxu0 0.0
        %5371 = vmatpush1.msra.mxu0 0.0
        %5372 = vmatprep.subr.mxu0 0.0
        %5373 = vmatpush1.msra.mxu0 0.0
        %5374 = vmatprep.subr.mxu0 0.0
        %5375 = vmatpush1.msra.mxu0 0.0
        %5376 = vmatprep.subr.mxu0 0.0
        %5377 = vmatpush1.msra.mxu0 0.0
        %5378 = vmatprep.mubr.f32.mxu0 0.0
        %5379 = vmatmul.mubr.f32.gmra.mrb[0].mxu0 %v5309
        %v5380 = vpop.f32.mrb[0].mxu0
        %v5381 = vadd.f32 0.0, %v5380
        %v5382 = vpop.f32.mrb[0].mxu0
        %5383 = vmatprep.mubr.f32.mxu0 0.0
        %5384 = vmatmul.mubr.f32.gmra.mrb[0].mxu0 %v5312
        %v5385 = vpop.f32.mrb[0].mxu0
        %v5386 = vadd.f32 0.0, %v5385
        %v5387 = vpop.f32.mrb[0].mxu0
        %5388 = vdwg.mxu0
        %5389 = vmatprep.subr.mxu0 0.0
        %5390 = vmatpush1.msra.mxu0 %v5221
        %5391 = vmatprep.subr.mxu0 0.0
        %5392 = vmatpush1.msra.mxu0 %v5226
        %5393 = vmatprep.subr.mxu0 0.0
        %5394 = vmatpush1.msra.mxu0 0.0
        %5395 = vmatprep.subr.mxu0 0.0
        %5396 = vmatpush1.msra.mxu0 0.0
        %5397 = vmatprep.subr.mxu0 0.0
        %5398 = vmatpush1.msra.mxu0 0.0
        %5399 = vmatprep.subr.mxu0 0.0
        %5400 = vmatpush1.msra.mxu0 0.0
        %5401 = vmatprep.subr.mxu0 0.0
        %5402 = vmatpush1.msra.mxu0 0.0
        %5403 = vmatprep.subr.mxu0 0.0
        %5404 = vmatpush1.msra.mxu0 0.0
        %5405 = vmatprep.subr.mxu0 0.0
        %5406 = vmatpush1.msra.mxu0 0.0
        %5407 = vmatprep.subr.mxu0 0.0
        %5408 = vmatpush1.msra.mxu0 0.0
        %5409 = vmatprep.subr.mxu0 0.0
        %5410 = vmatpush1.msra.mxu0 0.0
        %5411 = vmatprep.subr.mxu0 0.0
        %5412 = vmatpush1.msra.mxu0 0.0
        %5413 = vmatprep.subr.mxu0 0.0
        %5414 = vmatpush1.msra.mxu0 0.0
        %5415 = vmatprep.subr.mxu0 0.0
        %5416 = vmatpush1.msra.mxu0 0.0
        %5417 = vmatprep.subr.mxu0 0.0
        %5418 = vmatpush1.msra.mxu0 0.0
        %5419 = vmatprep.subr.mxu0 0.0
        %5420 = vmatpush1.msra.mxu0 0.0
        %5421 = vmatprep.subr.mxu0 0.0
        %5422 = vmatpush1.msra.mxu0 0.0
        %5423 = vmatprep.subr.mxu0 0.0
        %5424 = vmatpush1.msra.mxu0 0.0
        %5425 = vmatprep.subr.mxu0 0.0
        %5426 = vmatpush1.msra.mxu0 0.0
        %5427 = vmatprep.subr.mxu0 0.0
        %5428 = vmatpush1.msra.mxu0 0.0
        %5429 = vmatprep.subr.mxu0 0.0
        %5430 = vmatpush1.msra.mxu0 0.0
        %5431 = vmatprep.subr.mxu0 0.0
        %5432 = vmatpush1.msra.mxu0 0.0
        %5433 = vmatprep.subr.mxu0 0.0
        %5434 = vmatpush1.msra.mxu0 0.0
        %5435 = vmatprep.subr.mxu0 0.0
        %5436 = vmatpush1.msra.mxu0 0.0
        %5437 = vmatprep.subr.mxu0 0.0
        %5438 = vmatpush1.msra.mxu0 0.0
        %5439 = vmatprep.subr.mxu0 0.0
        %5440 = vmatpush1.msra.mxu0 0.0
        %5441 = vmatprep.subr.mxu0 0.0
        %5442 = vmatpush1.msra.mxu0 0.0
        %5443 = vmatprep.subr.mxu0 0.0
        %5444 = vmatpush1.msra.mxu0 0.0
        %5445 = vmatprep.subr.mxu0 0.0
        %5446 = vmatpush1.msra.mxu0 0.0
        %5447 = vmatprep.subr.mxu0 0.0
        %5448 = vmatpush1.msra.mxu0 0.0
        %5449 = vmatprep.subr.mxu0 0.0
        %5450 = vmatpush1.msra.mxu0 0.0
        %5451 = vmatprep.subr.mxu0 0.0
        %5452 = vmatpush1.msra.mxu0 0.0
        %5453 = vmatprep.mubr.f32.mxu0 0.0
        %5454 = vmatmul.mubr.f32.gmra.mrb[0].mxu0 %v5309
        %v5455 = vpop.f32.mrb[0].mxu0
        %v5456 = vadd.f32 0.0, %v5455
        %v5457 = vpop.f32.mrb[0].mxu0
        %5458 = vmatprep.mubr.f32.mxu0 0.0
        %5459 = vmatmul.mubr.f32.gmra.mrb[0].mxu0 %v5312
        %v5460 = vpop.f32.mrb[0].mxu0
        %v5461 = vadd.f32 0.0, %v5460
        %v5462 = vpop.f32.mrb[0].mxu0
        %5463 = vdwg.mxu0
        %5464 = vmatprep.subr.mxu0 0.0
        %5465 = vmatpush1.msra.mxu0 %v5231
        %5466 = vmatprep.subr.mxu0 0.0
        %5467 = vmatpush1.msra.mxu0 %v5236
        %5468 = vmatprep.subr.mxu0 0.0
        %5469 = vmatpush1.msra.mxu0 0.0
        %5470 = vmatprep.subr.mxu0 0.0
        %5471 = vmatpush1.msra.mxu0 0.0
        %5472 = vmatprep.subr.mxu0 0.0
        %5473 = vmatpush1.msra.mxu0 0.0
        %5474 = vmatprep.subr.mxu0 0.0
        %5475 = vmatpush1.msra.mxu0 0.0
        %5476 = vmatprep.subr.mxu0 0.0
        %5477 = vmatpush1.msra.mxu0 0.0
        %5478 = vmatprep.subr.mxu0 0.0
        %5479 = vmatpush1.msra.mxu0 0.0
        %5480 = vmatprep.subr.mxu0 0.0
        %5481 = vmatpush1.msra.mxu0 0.0
        %5482 = vmatprep.subr.mxu0 0.0
        %5483 = vmatpush1.msra.mxu0 0.0
        %5484 = vmatprep.subr.mxu0 0.0
        %5485 = vmatpush1.msra.mxu0 0.0
        %5486 = vmatprep.subr.mxu0 0.0
        %5487 = vmatpush1.msra.mxu0 0.0
        %5488 = vmatprep.subr.mxu0 0.0
        %5489 = vmatpush1.msra.mxu0 0.0
        %5490 = vmatprep.subr.mxu0 0.0
        %5491 = vmatpush1.msra.mxu0 0.0
        %5492 = vmatprep.subr.mxu0 0.0
        %5493 = vmatpush1.msra.mxu0 0.0
        %5494 = vmatprep.subr.mxu0 0.0
        %5495 = vmatpush1.msra.mxu0 0.0
        %5496 = vmatprep.subr.mxu0 0.0
        %5497 = vmatpush1.msra.mxu0 0.0
        %5498 = vmatprep.subr.mxu0 0.0
        %5499 = vmatpush1.msra.mxu0 0.0
        %5500 = vmatprep.subr.mxu0 0.0
        %5501 = vmatpush1.msra.mxu0 0.0
        %5502 = vmatprep.subr.mxu0 0.0
        %5503 = vmatpush1.msra.mxu0 0.0
        %5504 = vmatprep.subr.mxu0 0.0
        %5505 = vmatpush1.msra.mxu0 0.0
        %5506 = vmatprep.subr.mxu0 0.0
        %5507 = vmatpush1.msra.mxu0 0.0
        %5508 = vmatprep.subr.mxu0 0.0
        %5509 = vmatpush1.msra.mxu0 0.0
        %5510 = vmatprep.subr.mxu0 0.0
        %5511 = vmatpush1.msra.mxu0 0.0
        %5512 = vmatprep.subr.mxu0 0.0
        %5513 = vmatpush1.msra.mxu0 0.0
        %5514 = vmatprep.subr.mxu0 0.0
        %5515 = vmatpush1.msra.mxu0 0.0
        %5516 = vmatprep.subr.mxu0 0.0
        %5517 = vmatpush1.msra.mxu0 0.0
        %5518 = vmatprep.subr.mxu0 0.0
        %5519 = vmatpush1.msra.mxu0 0.0
        %5520 = vmatprep.subr.mxu0 0.0
        %5521 = vmatpush1.msra.mxu0 0.0
        %5522 = vmatprep.subr.mxu0 0.0
        %5523 = vmatpush1.msra.mxu0 0.0
        %5524 = vmatprep.subr.mxu0 0.0
        %5525 = vmatpush1.msra.mxu0 0.0
        %5526 = vmatprep.subr.mxu0 0.0
        %5527 = vmatpush1.msra.mxu0 0.0
        %5528 = vmatprep.mubr.f32.mxu0 0.0
        %5529 = vmatmul.mubr.f32.gmra.mrb[0].mxu0 %v5309
        %v5530 = vpop.f32.mrb[0].mxu0
        %v5531 = vadd.f32 0.0, %v5530
        %v5532 = vpop.f32.mrb[0].mxu0
        %5533 = vmatprep.mubr.f32.mxu0 0.0
        %5534 = vmatmul.mubr.f32.gmra.mrb[0].mxu0 %v5312
        %v5535 = vpop.f32.mrb[0].mxu0
        %v5536 = vadd.f32 0.0, %v5535
        %v5537 = vpop.f32.mrb[0].mxu0
        %5538 = vdwg.mxu0
        %5539 = vmatprep.subr.mxu0 0.0
        %5540 = vmatpush1.msra.mxu0 %v5241
        %5541 = vmatprep.subr.mxu0 0.0
        %5542 = vmatpush1.msra.mxu0 %v5246
        %5543 = vmatprep.subr.mxu0 0.0
        %5544 = vmatpush1.msra.mxu0 0.0
        %5545 = vmatprep.subr.mxu0 0.0
        %5546 = vmatpush1.msra.mxu0 0.0
        %5547 = vmatprep.subr.mxu0 0.0
        %5548 = vmatpush1.msra.mxu0 0.0
        %5549 = vmatprep.subr.mxu0 0.0
        %5550 = vmatpush1.msra.mxu0 0.0
        %5551 = vmatprep.subr.mxu0 0.0
        %5552 = vmatpush1.msra.mxu0 0.0
        %5553 = vmatprep.subr.mxu0 0.0
        %5554 = vmatpush1.msra.mxu0 0.0
        %5555 = vmatprep.subr.mxu0 0.0
        %5556 = vmatpush1.msra.mxu0 0.0
        %5557 = vmatprep.subr.mxu0 0.0
        %5558 = vmatpush1.msra.mxu0 0.0
        %5559 = vmatprep.subr.mxu0 0.0
        %5560 = vmatpush1.msra.mxu0 0.0
        %5561 = vmatprep.subr.mxu0 0.0
        %5562 = vmatpush1.msra.mxu0 0.0
        %5563 = vmatprep.subr.mxu0 0.0
        %5564 = vmatpush1.msra.mxu0 0.0
        %5565 = vmatprep.subr.mxu0 0.0
        %5566 = vmatpush1.msra.mxu0 0.0
        %5567 = vmatprep.subr.mxu0 0.0
        %5568 = vmatpush1.msra.mxu0 0.0
        %5569 = vmatprep.subr.mxu0 0.0
        %5570 = vmatpush1.msra.mxu0 0.0
        %5571 = vmatprep.subr.mxu0 0.0
        %5572 = vmatpush1.msra.mxu0 0.0
        %5573 = vmatprep.subr.mxu0 0.0
        %5574 = vmatpush1.msra.mxu0 0.0
        %5575 = vmatprep.subr.mxu0 0.0
        %5576 = vmatpush1.msra.mxu0 0.0
        %5577 = vmatprep.subr.mxu0 0.0
        %5578 = vmatpush1.msra.mxu0 0.0
        %5579 = vmatprep.subr.mxu0 0.0
        %5580 = vmatpush1.msra.mxu0 0.0
        %5581 = vmatprep.subr.mxu0 0.0
        %5582 = vmatpush1.msra.mxu0 0.0
        %5583 = vmatprep.subr.mxu0 0.0
        %5584 = vmatpush1.msra.mxu0 0.0
        %5585 = vmatprep.subr.mxu0 0.0
        %5586 = vmatpush1.msra.mxu0 0.0
        %5587 = vmatprep.subr.mxu0 0.0
        %5588 = vmatpush1.msra.mxu0 0.0
        %5589 = vmatprep.subr.mxu0 0.0
        %5590 = vmatpush1.msra.mxu0 0.0
        %5591 = vmatprep.subr.mxu0 0.0
        %5592 = vmatpush1.msra.mxu0 0.0
        %5593 = vmatprep.subr.mxu0 0.0
        %5594 = vmatpush1.msra.mxu0 0.0
        %5595 = vmatprep.subr.mxu0 0.0
        %5596 = vmatpush1.msra.mxu0 0.0
        %5597 = vmatprep.subr.mxu0 0.0
        %5598 = vmatpush1.msra.mxu0 0.0
        %5599 = vmatprep.subr.mxu0 0.0
        %5600 = vmatpush1.msra.mxu0 0.0
        %5601 = vmatprep.subr.mxu0 0.0
        %5602 = vmatpush1.msra.mxu0 0.0
        %5603 = vmatprep.mubr.f32.mxu0 0.0
        %5604 = vmatmul.mubr.f32.gmra.mrb[0].mxu0 %v5309
        %v5605 = vpop.f32.mrb[0].mxu0
        %v5606 = vadd.f32 0.0, %v5605
        %v5607 = vpop.f32.mrb[0].mxu0
        %5608 = vmatprep.mubr.f32.mxu0 0.0
        %5609 = vmatmul.mubr.f32.gmra.mrb[0].mxu0 %v5312
        %v5610 = vpop.f32.mrb[0].mxu0
        %v5611 = vadd.f32 0.0, %v5610
        %v5612 = vpop.f32.mrb[0].mxu0
        %5613 = vdwg.mxu0
        %5614 = vmatprep.subr.mxu0 0.0
        %5615 = vmatpush1.msra.mxu0 %v5251
        %5616 = vmatprep.subr.mxu0 0.0
        %5617 = vmatpush1.msra.mxu0 %v5256
        %5618 = vmatprep.subr.mxu0 0.0
        %5619 = vmatpush1.msra.mxu0 0.0
        %5620 = vmatprep.subr.mxu0 0.0
        %5621 = vmatpush1.msra.mxu0 0.0
        %5622 = vmatprep.subr.mxu0 0.0
        %5623 = vmatpush1.msra.mxu0 0.0
        %5624 = vmatprep.subr.mxu0 0.0
        %5625 = vmatpush1.msra.mxu0 0.0
        %5626 = vmatprep.subr.mxu0 0.0
        %5627 = vmatpush1.msra.mxu0 0.0
        %5628 = vmatprep.subr.mxu0 0.0
        %5629 = vmatpush1.msra.mxu0 0.0
        %5630 = vmatprep.subr.mxu0 0.0
        %5631 = vmatpush1.msra.mxu0 0.0
        %5632 = vmatprep.subr.mxu0 0.0
        %5633 = vmatpush1.msra.mxu0 0.0
        %5634 = vmatprep.subr.mxu0 0.0
        %5635 = vmatpush1.msra.mxu0 0.0
        %5636 = vmatprep.subr.mxu0 0.0
        %5637 = vmatpush1.msra.mxu0 0.0
        %5638 = vmatprep.subr.mxu0 0.0
        %5639 = vmatpush1.msra.mxu0 0.0
        %5640 = vmatprep.subr.mxu0 0.0
        %5641 = vmatpush1.msra.mxu0 0.0
        %5642 = vmatprep.subr.mxu0 0.0
        %5643 = vmatpush1.msra.mxu0 0.0
        %5644 = vmatprep.subr.mxu0 0.0
        %5645 = vmatpush1.msra.mxu0 0.0
        %5646 = vmatprep.subr.mxu0 0.0
        %5647 = vmatpush1.msra.mxu0 0.0
        %5648 = vmatprep.subr.mxu0 0.0
        %5649 = vmatpush1.msra.mxu0 0.0
        %5650 = vmatprep.subr.mxu0 0.0
        %5651 = vmatpush1.msra.mxu0 0.0
        %5652 = vmatprep.subr.mxu0 0.0
        %5653 = vmatpush1.msra.mxu0 0.0
        %5654 = vmatprep.subr.mxu0 0.0
        %5655 = vmatpush1.msra.mxu0 0.0
        %5656 = vmatprep.subr.mxu0 0.0
        %5657 = vmatpush1.msra.mxu0 0.0
        %5658 = vmatprep.subr.mxu0 0.0
        %5659 = vmatpush1.msra.mxu0 0.0
        %5660 = vmatprep.subr.mxu0 0.0
        %5661 = vmatpush1.msra.mxu0 0.0
        %5662 = vmatprep.subr.mxu0 0.0
        %5663 = vmatpush1.msra.mxu0 0.0
        %5664 = vmatprep.subr.mxu0 0.0
        %5665 = vmatpush1.msra.mxu0 0.0
        %5666 = vmatprep.subr.mxu0 0.0
        %5667 = vmatpush1.msra.mxu0 0.0
        %5668 = vmatprep.subr.mxu0 0.0
        %5669 = vmatpush1.msra.mxu0 0.0
        %5670 = vmatprep.subr.mxu0 0.0
        %5671 = vmatpush1.msra.mxu0 0.0
        %5672 = vmatprep.subr.mxu0 0.0
        %5673 = vmatpush1.msra.mxu0 0.0
        %5674 = vmatprep.subr.mxu0 0.0
        %5675 = vmatpush1.msra.mxu0 0.0
        %5676 = vmatprep.subr.mxu0 0.0
        %5677 = vmatpush1.msra.mxu0 0.0
        %5678 = vmatprep.mubr.f32.mxu0 0.0
        %5679 = vmatmul.mubr.f32.gmra.mrb[0].mxu0 %v5309
        %v5680 = vpop.f32.mrb[0].mxu0
        %v5681 = vadd.f32 0.0, %v5680
        %v5682 = vpop.f32.mrb[0].mxu0
        %5683 = vmatprep.mubr.f32.mxu0 0.0
        %5684 = vmatmul.mubr.f32.gmra.mrb[0].mxu0 %v5312
        %v5685 = vpop.f32.mrb[0].mxu0
        %v5686 = vadd.f32 0.0, %v5685
        %v5687 = vpop.f32.mrb[0].mxu0
        %5688 = vdwg.mxu0
        %5689 = vmatprep.subr.mxu0 0.0
        %5690 = vmatpush1.msra.mxu0 %v5261
        %5691 = vmatprep.subr.mxu0 0.0
        %5692 = vmatpush1.msra.mxu0 %v5266
        %5693 = vmatprep.subr.mxu0 0.0
        %5694 = vmatpush1.msra.mxu0 0.0
        %5695 = vmatprep.subr.mxu0 0.0
        %5696 = vmatpush1.msra.mxu0 0.0
        %5697 = vmatprep.subr.mxu0 0.0
        %5698 = vmatpush1.msra.mxu0 0.0
        %5699 = vmatprep.subr.mxu0 0.0
        %5700 = vmatpush1.msra.mxu0 0.0
        %5701 = vmatprep.subr.mxu0 0.0
        %5702 = vmatpush1.msra.mxu0 0.0
        %5703 = vmatprep.subr.mxu0 0.0
        %5704 = vmatpush1.msra.mxu0 0.0
        %5705 = vmatprep.subr.mxu0 0.0
        %5706 = vmatpush1.msra.mxu0 0.0
        %5707 = vmatprep.subr.mxu0 0.0
        %5708 = vmatpush1.msra.mxu0 0.0
        %5709 = vmatprep.subr.mxu0 0.0
        %5710 = vmatpush1.msra.mxu0 0.0
        %5711 = vmatprep.subr.mxu0 0.0
        %5712 = vmatpush1.msra.mxu0 0.0
        %5713 = vmatprep.subr.mxu0 0.0
        %5714 = vmatpush1.msra.mxu0 0.0
        %5715 = vmatprep.subr.mxu0 0.0
        %5716 = vmatpush1.msra.mxu0 0.0
        %5717 = vmatprep.subr.mxu0 0.0
        %5718 = vmatpush1.msra.mxu0 0.0
        %5719 = vmatprep.subr.mxu0 0.0
        %5720 = vmatpush1.msra.mxu0 0.0
        %5721 = vmatprep.subr.mxu0 0.0
        %5722 = vmatpush1.msra.mxu0 0.0
        %5723 = vmatprep.subr.mxu0 0.0
        %5724 = vmatpush1.msra.mxu0 0.0
        %5725 = vmatprep.subr.mxu0 0.0
        %5726 = vmatpush1.msra.mxu0 0.0
        %5727 = vmatprep.subr.mxu0 0.0
        %5728 = vmatpush1.msra.mxu0 0.0
        %5729 = vmatprep.subr.mxu0 0.0
        %5730 = vmatpush1.msra.mxu0 0.0
        %5731 = vmatprep.subr.mxu0 0.0
        %5732 = vmatpush1.msra.mxu0 0.0
        %5733 = vmatprep.subr.mxu0 0.0
        %5734 = vmatpush1.msra.mxu0 0.0
        %5735 = vmatprep.subr.mxu0 0.0
        %5736 = vmatpush1.msra.mxu0 0.0
        %5737 = vmatprep.subr.mxu0 0.0
        %5738 = vmatpush1.msra.mxu0 0.0
        %5739 = vmatprep.subr.mxu0 0.0
        %5740 = vmatpush1.msra.mxu0 0.0
        %5741 = vmatprep.subr.mxu0 0.0
        %5742 = vmatpush1.msra.mxu0 0.0
        %5743 = vmatprep.subr.mxu0 0.0
        %5744 = vmatpush1.msra.mxu0 0.0
        %5745 = vmatprep.subr.mxu0 0.0
        %5746 = vmatpush1.msra.mxu0 0.0
        %5747 = vmatprep.subr.mxu0 0.0
        %5748 = vmatpush1.msra.mxu0 0.0
        %5749 = vmatprep.subr.mxu0 0.0
        %5750 = vmatpush1.msra.mxu0 0.0
        %5751 = vmatprep.subr.mxu0 0.0
        %5752 = vmatpush1.msra.mxu0 0.0
        %5753 = vmatprep.mubr.f32.mxu0 0.0
        %5754 = vmatmul.mubr.f32.gmra.mrb[0].mxu0 %v5309
        %v5755 = vpop.f32.mrb[0].mxu0
        %v5756 = vadd.f32 0.0, %v5755
        %v5757 = vpop.f32.mrb[0].mxu0
        %5758 = vmatprep.mubr.f32.mxu0 0.0
        %5759 = vmatmul.mubr.f32.gmra.mrb[0].mxu0 %v5312
        %v5760 = vpop.f32.mrb[0].mxu0
        %v5761 = vadd.f32 0.0, %v5760
        %v5762 = vpop.f32.mrb[0].mxu0
        %5763 = vdwg.mxu0
        %5764 = vmatprep.subr.mxu0 0.0
        %5765 = vmatpush1.msra.mxu0 %v5271
        %5766 = vmatprep.subr.mxu0 0.0
        %5767 = vmatpush1.msra.mxu0 %v5276
        %5768 = vmatprep.subr.mxu0 0.0
        %5769 = vmatpush1.msra.mxu0 0.0
        %5770 = vmatprep.subr.mxu0 0.0
        %5771 = vmatpush1.msra.mxu0 0.0
        %5772 = vmatprep.subr.mxu0 0.0
        %5773 = vmatpush1.msra.mxu0 0.0
        %5774 = vmatprep.subr.mxu0 0.0
        %5775 = vmatpush1.msra.mxu0 0.0
        %5776 = vmatprep.subr.mxu0 0.0
        %5777 = vmatpush1.msra.mxu0 0.0
        %5778 = vmatprep.subr.mxu0 0.0
        %5779 = vmatpush1.msra.mxu0 0.0
        %5780 = vmatprep.subr.mxu0 0.0
        %5781 = vmatpush1.msra.mxu0 0.0
        %5782 = vmatprep.subr.mxu0 0.0
        %5783 = vmatpush1.msra.mxu0 0.0
        %5784 = vmatprep.subr.mxu0 0.0
        %5785 = vmatpush1.msra.mxu0 0.0
        %5786 = vmatprep.subr.mxu0 0.0
        %5787 = vmatpush1.msra.mxu0 0.0
        %5788 = vmatprep.subr.mxu0 0.0
        %5789 = vmatpush1.msra.mxu0 0.0
        %5790 = vmatprep.subr.mxu0 0.0
        %5791 = vmatpush1.msra.mxu0 0.0
        %5792 = vmatprep.subr.mxu0 0.0
        %5793 = vmatpush1.msra.mxu0 0.0
        %5794 = vmatprep.subr.mxu0 0.0
        %5795 = vmatpush1.msra.mxu0 0.0
        %5796 = vmatprep.subr.mxu0 0.0
        %5797 = vmatpush1.msra.mxu0 0.0
        %5798 = vmatprep.subr.mxu0 0.0
        %5799 = vmatpush1.msra.mxu0 0.0
        %5800 = vmatprep.subr.mxu0 0.0
        %5801 = vmatpush1.msra.mxu0 0.0
        %5802 = vmatprep.subr.mxu0 0.0
        %5803 = vmatpush1.msra.mxu0 0.0
        %5804 = vmatprep.subr.mxu0 0.0
        %5805 = vmatpush1.msra.mxu0 0.0
        %5806 = vmatprep.subr.mxu0 0.0
        %5807 = vmatpush1.msra.mxu0 0.0
        %5808 = vmatprep.subr.mxu0 0.0
        %5809 = vmatpush1.msra.mxu0 0.0
        %5810 = vmatprep.subr.mxu0 0.0
        %5811 = vmatpush1.msra.mxu0 0.0
        %5812 = vmatprep.subr.mxu0 0.0
        %5813 = vmatpush1.msra.mxu0 0.0
        %5814 = vmatprep.subr.mxu0 0.0
        %5815 = vmatpush1.msra.mxu0 0.0
        %5816 = vmatprep.subr.mxu0 0.0
        %5817 = vmatpush1.msra.mxu0 0.0
        %5818 = vmatprep.subr.mxu0 0.0
        %5819 = vmatpush1.msra.mxu0 0.0
        %5820 = vmatprep.subr.mxu0 0.0
        %5821 = vmatpush1.msra.mxu0 0.0
        %5822 = vmatprep.subr.mxu0 0.0
        %5823 = vmatpush1.msra.mxu0 0.0
        %5824 = vmatprep.subr.mxu0 0.0
        %5825 = vmatpush1.msra.mxu0 0.0
        %5826 = vmatprep.subr.mxu0 0.0
        %5827 = vmatpush1.msra.mxu0 0.0
        %5828 = vmatprep.mubr.f32.mxu0 0.0
        %5829 = vmatmul.mubr.f32.gmra.mrb[0].mxu0 %v5309
        %v5830 = vpop.f32.mrb[0].mxu0
        %v5831 = vadd.f32 0.0, %v5830
        %v5832 = vpop.f32.mrb[0].mxu0
        %5833 = vmatprep.mubr.f32.mxu0 0.0
        %5834 = vmatmul.mubr.f32.gmra.mrb[0].mxu0 %v5312
        %v5835 = vpop.f32.mrb[0].mxu0
        %v5836 = vadd.f32 0.0, %v5835
        %v5837 = vpop.f32.mrb[0].mxu0
        %5838 = vdwg.mxu0
        %5839 = vmatprep.subr.mxu0 0.0
        %5840 = vmatpush1.msra.mxu0 %v5281
        %5841 = vmatprep.subr.mxu0 0.0
        %5842 = vmatpush1.msra.mxu0 %v5286
        %5843 = vmatprep.subr.mxu0 0.0
        %5844 = vmatpush1.msra.mxu0 0.0
        %5845 = vmatprep.subr.mxu0 0.0
        %5846 = vmatpush1.msra.mxu0 0.0
        %5847 = vmatprep.subr.mxu0 0.0
        %5848 = vmatpush1.msra.mxu0 0.0
        %5849 = vmatprep.subr.mxu0 0.0
        %5850 = vmatpush1.msra.mxu0 0.0
        %5851 = vmatprep.subr.mxu0 0.0
        %5852 = vmatpush1.msra.mxu0 0.0
        %5853 = vmatprep.subr.mxu0 0.0
        %5854 = vmatpush1.msra.mxu0 0.0
        %5855 = vmatprep.subr.mxu0 0.0
        %5856 = vmatpush1.msra.mxu0 0.0
        %5857 = vmatprep.subr.mxu0 0.0
        %5858 = vmatpush1.msra.mxu0 0.0
        %5859 = vmatprep.subr.mxu0 0.0
        %5860 = vmatpush1.msra.mxu0 0.0
        %5861 = vmatprep.subr.mxu0 0.0
        %5862 = vmatpush1.msra.mxu0 0.0
        %5863 = vmatprep.subr.mxu0 0.0
        %5864 = vmatpush1.msra.mxu0 0.0
        %5865 = vmatprep.subr.mxu0 0.0
        %5866 = vmatpush1.msra.mxu0 0.0
        %5867 = vmatprep.subr.mxu0 0.0
        %5868 = vmatpush1.msra.mxu0 0.0
        %5869 = vmatprep.subr.mxu0 0.0
        %5870 = vmatpush1.msra.mxu0 0.0
        %5871 = vmatprep.subr.mxu0 0.0
        %5872 = vmatpush1.msra.mxu0 0.0
        %5873 = vmatprep.subr.mxu0 0.0
        %5874 = vmatpush1.msra.mxu0 0.0
        %5875 = vmatprep.subr.mxu0 0.0
        %5876 = vmatpush1.msra.mxu0 0.0
        %5877 = vmatprep.subr.mxu0 0.0
        %5878 = vmatpush1.msra.mxu0 0.0
        %5879 = vmatprep.subr.mxu0 0.0
        %5880 = vmatpush1.msra.mxu0 0.0
        %5881 = vmatprep.subr.mxu0 0.0
        %5882 = vmatpush1.msra.mxu0 0.0
        %5883 = vmatprep.subr.mxu0 0.0
        %5884 = vmatpush1.msra.mxu0 0.0
        %5885 = vmatprep.subr.mxu0 0.0
        %5886 = vmatpush1.msra.mxu0 0.0
        %5887 = vmatprep.subr.mxu0 0.0
        %5888 = vmatpush1.msra.mxu0 0.0
        %5889 = vmatprep.subr.mxu0 0.0
        %5890 = vmatpush1.msra.mxu0 0.0
        %5891 = vmatprep.subr.mxu0 0.0
        %5892 = vmatpush1.msra.mxu0 0.0
        %5893 = vmatprep.subr.mxu0 0.0
        %5894 = vmatpush1.msra.mxu0 0.0
        %5895 = vmatprep.subr.mxu0 0.0
        %5896 = vmatpush1.msra.mxu0 0.0
        %5897 = vmatprep.subr.mxu0 0.0
        %5898 = vmatpush1.msra.mxu0 0.0
        %5899 = vmatprep.subr.mxu0 0.0
        %5900 = vmatpush1.msra.mxu0 0.0
        %5901 = vmatprep.subr.mxu0 0.0
        %5902 = vmatpush1.msra.mxu0 0.0
        %5903 = vmatprep.mubr.f32.mxu0 0.0
        %5904 = vmatmul.mubr.f32.gmra.mrb[0].mxu0 %v5309
        %v5905 = vpop.f32.mrb[0].mxu0
        %v5906 = vadd.f32 0.0, %v5905
        %v5907 = vpop.f32.mrb[0].mxu0
        %5908 = vmatprep.mubr.f32.mxu0 0.0
        %5909 = vmatmul.mubr.f32.gmra.mrb[0].mxu0 %v5312
        %v5910 = vpop.f32.mrb[0].mxu0
        %v5911 = vadd.f32 0.0, %v5910
        %v5912 = vpop.f32.mrb[0].mxu0
        %5913 = vdwg.mxu0
        %v5914 = vadd.f32 %v5292, %v5381
        %v5915 = vadd.f32 %v5293, %v5386
        %v5916 = vadd.f32 %v5294, %v5456
        %v5917 = vadd.f32 %v5295, %v5461
        %v5918 = vadd.f32 %v5296, %v5531
        %v5919 = vadd.f32 %v5297, %v5536
        %v5920 = vadd.f32 %v5298, %v5606
        %v5921 = vadd.f32 %v5299, %v5611
        %v5922 = vadd.f32 %v5300, %v5681
        %v5923 = vadd.f32 %v5301, %v5686
        %v5924 = vadd.f32 %v5302, %v5756
        %v5925 = vadd.f32 %v5303, %v5761
        %v5926 = vadd.f32 %v5304, %v5831
        %v5927 = vadd.f32 %v5305, %v5836
        %v5928 = vadd.f32 %v5306, %v5906
        %v5929 = vadd.f32 %v5307, %v5911
        %5930 = vst.msk [vmem:[#allocation2] sm:$0xff] %vm245, %v5914
        %5931 = vst.msk [vmem:[#allocation2 + $0x8] sm:$0xff] %vm245, %v5915
        %5932 = vst.msk [vmem:[#allocation2 + $0x10] sm:$0xff] %vm245, %v5916
        %5933 = vst.msk [vmem:[#allocation2 + $0x18] sm:$0xff] %vm245, %v5917
        %5934 = vst.msk [vmem:[#allocation2 + $0x20] sm:$0xff] %vm245, %v5918
        %5935 = vst.msk [vmem:[#allocation2 + $0x28] sm:$0xff] %vm245, %v5919
        %5936 = vst.msk [vmem:[#allocation2 + $0x30] sm:$0xff] %vm245, %v5920
        %5937 = vst.msk [vmem:[#allocation2 + $0x38] sm:$0xff] %vm245, %v5921
        %5938 = vst.msk [vmem:[#allocation2 + $0x40] sm:$0xff] %vm245, %v5922
        %5939 = vst.msk [vmem:[#allocation2 + $0x48] sm:$0xff] %vm245, %v5923
        %5940 = vst.msk [vmem:[#allocation2 + $0x50] sm:$0xff] %vm245, %v5924
        %5941 = vst.msk [vmem:[#allocation2 + $0x58] sm:$0xff] %vm245, %v5925
        %5942 = vst.msk [vmem:[#allocation2 + $0x60] sm:$0xff] %vm245, %v5926
        %5943 = vst.msk [vmem:[#allocation2 + $0x68] sm:$0xff] %vm245, %v5927
        %5944 = vst.msk [vmem:[#allocation2 + $0x70] sm:$0xff] %vm245, %v5928
        %5945 = vst.msk [vmem:[#allocation2 + $0x78] sm:$0xff] %vm245, %v5929
        %v5946 = vld [vmem:[#allocation2] sm:$0xff]
        %v5947 = vld [vmem:[#allocation2 + $0x10] sm:$0xff]
        %v5948 = vld [vmem:[#allocation2 + $0x18] sm:$0xff]
        %v5949 = vld [vmem:[#allocation2 + $0x20] sm:$0xff]
        %v5950 = vld [vmem:[#allocation2 + $0x28] sm:$0xff]
        %v5951 = vld [vmem:[#allocation2 + $0x30] sm:$0xff]
        %v5952 = vld [vmem:[#allocation2 + $0x38] sm:$0xff]
        %v5953 = vld [vmem:[#allocation2 + $0x40] sm:$0xff]
        %v5954 = vld [vmem:[#allocation2 + $0x48] sm:$0xff]
        %v5955 = vld [vmem:[#allocation2 + $0x50] sm:$0xff]
        %v5956 = vld [vmem:[#allocation2 + $0x58] sm:$0xff]
        %v5957 = vld [vmem:[#allocation2 + $0x60] sm:$0xff]
        %v5958 = vld [vmem:[#allocation2 + $0x68] sm:$0xff]
        %v5959 = vld [vmem:[#allocation2 + $0x78] sm:$0xff]
        %v5960 = vadd.f32 %v5946, %v5948
        %v5961 = vadd.f32 %v5947, %v5950
        %v5962 = vadd.f32 %v5949, %v5952
        %v5963 = vadd.f32 %v5951, %v5954
        %v5964 = vadd.f32 %v5953, %v5956
        %v5965 = vadd.f32 %v5955, %v5958
        %v5966 = vadd.f32 %v5957, %v5959
        %v5967 = vld [vmem:[%s3] sm:$0xff]
        %5969 = vset.pattern.permute.xlu0 0
        %5970 = vperm.xlu0 %5969, %v5967
        %v5971 = vpop.permute.xlu0 %5970
        %v5973 = vadd.f32 %v5960, %v5971
        %v5974 = vadd.f32 %v5961, %v5971
        %v5975 = vadd.f32 %v5962, %v5971
        %v5976 = vadd.f32 %v5963, %v5971
        %v5977 = vadd.f32 %v5964, %v5971
        %v5978 = vadd.f32 %v5965, %v5971
        %v5979 = vadd.f32 %v5966, %v5971
        %5980 = vst.msk [vmem:[%s244] sm:$0xff] %vm245, %v5973
        %5981 = vst.msk [vmem:[%s244 + $0x8] sm:$0xff] %vm245, %v5974
        %5982 = vst.msk [vmem:[%s244 + $0x10] sm:$0xff] %vm245, %v5975
        %5983 = vst.msk [vmem:[%s244 + $0x18] sm:$0xff] %vm245, %v5976
        %5984 = vst.msk [vmem:[%s244 + $0x20] sm:$0xff] %vm245, %v5977
        %5985 = vst.msk [vmem:[%s244 + $0x28] sm:$0xff] %vm245, %v5978
        %5986 = vst.msk [vmem:[%s244 + $0x30] sm:$0xff] %vm245, %v5979
        %s5987 = sand.u32 %s119, 1
        %s5988 = scalar_lea.sflag [#allocation5], %s5987
        %s5989 = sand.u32 %s119, 1
        %s5990 = smul.addr %s5989, 56
        %s5991 = scalar_lea.vmem [#allocation9], %s5990
        // Predicated region
        $region49: #{tpu_custom_call.1} parent=35 // pred_check
          %p5992 = pneg %p129
        $region50: #{tpu_custom_call.1} parent=35 // pred_check_branch
          %5994 = sbr.rel (%p5992) target = $region52
        $region51: #{tpu_custom_call.1} parent=35 // pred_region
          %s5996 = ssub.s32 896, 896
          %5997 = vsyncadd %s5988, %s5996
          %s5998 = smul.addr %s22, 7
          %s5999 = smul.addr %s5998, 128
          %s6000 = scalar_lea.hbm %s4, %s5999
          %s6001 = sshll.u32 %s5991, 4
          %s6002 = int_to_ptr.vmem [resolvable:$true] %s6001
          %6007 = dma.vmem_to_hbm [thread:$0]  %s6002, 896, %s6000, %s5988, 128, 128, 8
        $region52: #{tpu_custom_call.1} parent=35 // pred_fallthru
          _
      $region36: #{tpu_custom_call.1} parent=5 // pred_fallthru
        _
      %p6008 = scmp.le.s32.totalorder 2, %s17
      // Predicated region
      $region53: #{tpu_custom_call.1} parent=5 // pred_check
        %p6009 = pneg %p6008
      $region54: #{tpu_custom_call.1} parent=5 // pred_check_branch
        %6011 = sbr.rel (%p6009) target = $region56
      $region55: #{tpu_custom_call.1} parent=5 // pred_region
        %s6012 = ssub.s32 %s17, 2
        // Predicated region
        $region57: #{tpu_custom_call.1} parent=55 // pred_check
          %p6013 = pneg %p135
        $region58: #{tpu_custom_call.1} parent=55 // pred_check_branch
          %6015 = sbr.rel (%p6013) target = $region60
        $region59: #{tpu_custom_call.1} parent=55 // pred_region
          %s6016 = sand.u32 %s120, 1
          %s6017 = scalar_lea.sflag [#allocation5], %s6016
          %s6018 = sand.u32 %s120, 1
          %s6019 = smul.addr %s6018, 56
          %s6020 = scalar_lea.vmem [#allocation9], %s6019
          %6021 = dma.done %s6017, 896
        $region60: #{tpu_custom_call.1} parent=55 // pred_fallthru
          _
      $region56: #{tpu_custom_call.1} parent=5 // pred_fallthru
        _
    $region6: #{tpu_custom_call.1} parent=1 // loop_footer
      %s21 = sadd.s32 1, %s17
    $region7: #{tpu_custom_call.1} parent=1 // loop_footer_branch
      %16 = sbr.rel target = $region3
    $region8: #{tpu_custom_call.1} parent=1 // loop_exit
      _
    %6022 = vsyncpa [#allocation4], 1
    %s6023 = scalar_lea.sflag [#allocation4], 1
    %6024 = vsyncpa %s6023, 1
    %6025 = vsyncpa [#allocation7], 1
    %6026 = vsyncpa [#allocation5], 1
    %s6027 = scalar_lea.sflag [#allocation5], 1
    %6028 = vsyncpa %s6027, 1

</llo_original>
